<compile_context>
chip_gen: v7x
topology: tpu7x:2x2x1
jax: 0.10.0
libtpu: 0.0.40
codegen_flags: <defaults>
</compile_context>

<pallas_src>
import functools

import numpy as np
import jax
import jax.numpy as jnp
from jax import lax
from jax.experimental import pallas as pl
from jax.experimental.pallas import tpu as pltpu


def _round_up(a, b):
    return (a + b - 1) // b * b


# ----------------------- pltpu.roll direction probe --------------------------
# conv2 combines its three kw taps with sublane rolls of f32 accumulators.
# Probe the roll convention once (and whether the op lowers at all) with a
# tiny kernel; fall back to jnp.roll (concat of slices) if unavailable.


def _roll_probe_kernel(x_ref, o_ref):
    o_ref[...] = pltpu.roll(x_ref[...], 1, 1)


@functools.lru_cache(maxsize=None)
def _probe_roll_style():
    try:
        x = jnp.broadcast_to(
            jnp.arange(8, dtype=jnp.float32)[None, :, None], (8, 8, 128))
        out = pl.pallas_call(
            _roll_probe_kernel,
            out_shape=jax.ShapeDtypeStruct((8, 8, 128), jnp.float32),
        )(x)
        v = float(out[0, 0, 0])
        if v == 7.0:          # numpy convention: result[j] = x[(j - shift) % n]
            return "numpy"
        if v == 1.0:          # reversed convention: result[j] = x[(j + shift) % n]
            return "reverse"
    except Exception:
        pass
    return "fallback"          # use jnp.roll inside the kernel


# ------------------------------ fused kernel ---------------------------------


def _bottleneck_kernel(x_ref, w1_ref, w2_ref, w3_ref, b1_ref, b2_ref, b3_ref,
                       o_ref, c1_buf, *, th, dilation, w_img, wc, roll_style):
    """One (batch, row-tile) grid step of the fused Bottleneck forward.

    x_ref : (1, H, W, Cin)  input image, resident across row tiles (no pre-pad)
    w1_ref: (Cin, P)        bf16 (BN1 scale folded in)
    w2_ref: (3, 3, P, P)    bf16 (BN2 scale folded in)
    w3_ref: (P, C3)         bf16 (BN3 scale folded in)
    b*_ref: (1, P)/(1, C3)  f32 folded BN biases
    o_ref : (1, th, W, C3)  lane-dense output row tile (C3 = 4*planes)
    c1_buf: (th+2d, wc, P)  bf16 conv1 output + 3x3 halo rows; columns
                            [W, wc) are kept zero (conv2 padding + alignment),
                            wc = round_up(W + d, 16).
    """
    d = dilation
    r = pl.program_id(1)
    num_r = pl.num_programs(1)
    cin = x_ref.shape[3]
    p = w1_ref.shape[1]
    c3 = w3_ref.shape[1]
    th_in = th + 2 * d
    row0 = r * th

    w1 = w1_ref[...]
    b1 = b1_ref[...]

    def conv1(rows, nrows):                       # 1x1 conv + bn1 + relu
        a = jnp.dot(rows.astype(jnp.bfloat16).reshape(nrows * w_img, cin), w1,
                    preferred_element_type=jnp.float32)
        a = jnp.maximum(a + b1, 0.0)
        return a.reshape(nrows, w_img, p).astype(c1_buf.dtype)

    # ---- conv1 over this tile's rows; halo handled in-kernel (no HBM pad) ---
    c1_buf[d:d + th, 0:w_img, :] = conv1(x_ref[0, pl.ds(row0, th), :, :], th)
    # conv2 zero-padding / alignment columns on the right.
    c1_buf[:, w_img:wc, :] = jnp.zeros((th_in, wc - w_img, p), c1_buf.dtype)

    @pl.when(r > 0)                               # top halo rows from the image
    def _():
        c1_buf[0:d, 0:w_img, :] = conv1(x_ref[0, pl.ds(row0 - d, d), :, :], d)

    @pl.when(r == 0)                              # top halo = conv2 zero padding
    def _():
        c1_buf[0:d, 0:w_img, :] = jnp.zeros((d, w_img, p), c1_buf.dtype)

    @pl.when(r < num_r - 1)                       # bottom halo rows
    def _():
        c1_buf[d + th:th_in, 0:w_img, :] = conv1(
            x_ref[0, pl.ds(row0 + th, d), :, :], d)

    @pl.when(r == num_r - 1)                      # bottom halo = zero padding
    def _():
        c1_buf[d + th:th_in, 0:w_img, :] = jnp.zeros((d, w_img, p),
                                                     c1_buf.dtype)

    # ---- conv2 (3x3, stride 1, dilation d, padding d) + bn2 + relu ----------
    # All 9 matmuls use the full aligned width (M = th*wc); the kw shifts are
    # applied afterwards to three f32 accumulators with two sublane rolls.
    acc = [None, None, None]
    for kh in range(3):                           # static, unrolled
        slab = c1_buf[kh * d:kh * d + th, :, :].reshape(th * wc, p)
        for kw in range(3):
            t = jnp.dot(slab, w2_ref[kh, kw],
                        preferred_element_type=jnp.float32)
            acc[kw] = t if acc[kw] is None else acc[kw] + t
    a0 = acc[0].reshape(th, wc, p)
    a1 = acc[1].reshape(th, wc, p)
    a2 = acc[2].reshape(th, wc, p)

    def shift_w(arr, delta):
        # result[:, j, :] = arr[:, j - delta, :]  (wrapped columns land in the
        # zero pad region or in discarded columns, so wrap-around is harmless).
        if roll_style == "numpy":
            return pltpu.roll(arr, delta % wc, 1)
        if roll_style == "reverse":
            return pltpu.roll(arr, (-delta) % wc, 1)
        return jnp.roll(arr, delta, axis=1)

    conv2 = shift_w(a0, d) + a1 + shift_w(a2, -d)
    h2 = jnp.maximum(conv2 + b2_ref[...], 0.0)

    # ---- conv3 (1x1) + bn3 + identity residual (f32) + relu -----------------
    if w_img % 8 == 0:                            # drop pad columns before conv3
        h2m = h2[:, 0:w_img, :].astype(jnp.bfloat16).reshape(th * w_img, p)
        a3 = jnp.dot(h2m, w3_ref[...], preferred_element_type=jnp.float32)
        a3 = (a3 + b3_ref[...]).reshape(th, w_img, c3)
    else:
        h2m = h2.astype(jnp.bfloat16).reshape(th * wc, p)
        a3 = jnp.dot(h2m, w3_ref[...], preferred_element_type=jnp.float32)
        a3 = (a3 + b3_ref[...]).reshape(th, wc, c3)[:, 0:w_img, :]

    res = x_ref[0, pl.ds(row0, th), :, :].astype(jnp.float32)
    o_ref[0] = jnp.maximum(a3 + res, 0.0).astype(o_ref.dtype)


# --------------------------------- wrapper ------------------------------------


def _bn_fold(gamma, beta, mean, var, eps=1e-5):
    scale = gamma / jnp.sqrt(var + eps)
    return scale, beta - mean * scale


def _vmem_bytes(th, h, w, wc, cin, p, c3, d, x_item, out_item):
    th_in = th + 2 * d
    xblk = 2 * h * w * cin * x_item                       # resident image (2 bufs)
    wts = 2 * 2 * (cin * p + 9 * p * p + p * c3) + 2 * 4 * (2 * p + c3)
    outblk = 2 * th * w * c3 * out_item                   # output tile (2 bufs)
    c1 = th_in * wc * p * 2                               # scratch
    live = th * wc * (12 * p + 6 * c3) + 8 * th * w * cin  # in-flight values
    return xblk + wts + outblk + c1 + live


def _pick_row_tile(h, w, wc, cin, p, c3, d, x_item, out_item, budget):
    cands = [t for t in range(1, h + 1)
             if h % t == 0 and (t >= d or t == h)]
    fitting = [t for t in cands
               if _vmem_bytes(t, h, w, wc, cin, p, c3, d,
                              x_item, out_item) <= budget]
    return max(fitting) if fitting else min(cands)


def bottleneck_forward(x_nhwc, params, *, dilation=1, row_tile=None,
                       out_dtype=jnp.bfloat16,
                       vmem_budget_bytes=24 * 1024 * 1024):
    """Fused Bottleneck forward (eval-mode BN).  Input and output are NHWC."""
    n, h, w, cin = x_nhwc.shape
    p = params["w1"].shape[1]            # planes
    c3 = params["w3"].shape[1]           # planes * 4
    d = int(dilation)
    assert d >= 1
    assert cin == c3, "identity residual needs inplanes == 4*planes (downsample=None)"

    wc = _round_up(w + d, 16)            # aligned conv1-output buffer width

    # Fold BN scale into the conv weights; epilogues keep only bias + relu.
    s1, b1 = _bn_fold(*params["bn1"])
    s2, b2 = _bn_fold(*params["bn2"])
    s3, b3 = _bn_fold(*params["bn3"])
    w1 = (params["w1"] * s1[None, :]).astype(jnp.bfloat16)
    w2 = (params["w2"] * s2[None, None, None, :]).astype(jnp.bfloat16)
    w3 = (params["w3"] * s3[None, :]).astype(jnp.bfloat16)
    b1 = b1.reshape(1, p).astype(jnp.float32)
    b2 = b2.reshape(1, p).astype(jnp.float32)
    b3 = b3.reshape(1, c3).astype(jnp.float32)

    x_item = jnp.dtype(x_nhwc.dtype).itemsize
    out_item = jnp.dtype(out_dtype).itemsize
    if row_tile is None:
        th = _pick_row_tile(h, w, wc, cin, p, c3, d, x_item, out_item,
                            vmem_budget_bytes)
    else:
        th = int(row_tile)
        assert h % th == 0 and (th >= d or th == h)
    num_r = h // th

    est = _vmem_bytes(th, h, w, wc, cin, p, c3, d, x_item, out_item)
    vmem_limit = int(min(max(2 * est, 32 << 20), 96 << 20))

    kernel = functools.partial(_bottleneck_kernel, th=th, dilation=d,
                               w_img=w, wc=wc, roll_style=_probe_roll_style())

    out = pl.pallas_call(
        kernel,
        out_shape=jax.ShapeDtypeStruct((n, h, w, c3), out_dtype),
        grid=(n, num_r),
        in_specs=[
            # input image: index_map ignores the row-tile axis -> DMA'd once
            # per batch element and kept resident in VMEM across row tiles.
            pl.BlockSpec((1, h, w, cin), lambda b, r: (b, 0, 0, 0)),
            pl.BlockSpec((cin, p), lambda b, r: (0, 0)),
            pl.BlockSpec((3, 3, p, p), lambda b, r: (0, 0, 0, 0)),
            pl.BlockSpec((p, c3), lambda b, r: (0, 0)),
            pl.BlockSpec((1, p), lambda b, r: (0, 0)),
            pl.BlockSpec((1, p), lambda b, r: (0, 0)),
            pl.BlockSpec((1, c3), lambda b, r: (0, 0)),
        ],
        out_specs=pl.BlockSpec((1, th, w, c3), lambda b, r: (b, r, 0, 0)),
        scratch_shapes=[pltpu.VMEM((th + 2 * d, wc, p), jnp.bfloat16)],
        compiler_params=pltpu.CompilerParams(
            dimension_semantics=("parallel", "arbitrary"),
            vmem_limit_bytes=vmem_limit),
    )(x_nhwc, w1, w2, w3, b1, b2, b3)
    return out


# ----------------------- pure-JAX (XLA conv) reference ------------------------


def reference_bottleneck(x_nhwc, params, *, dilation=1, out_dtype=jnp.bfloat16):
    d = int(dilation)
    s1, b1 = _bn_fold(*params["bn1"])
    s2, b2 = _bn_fold(*params["bn2"])
    s3, b3 = _bn_fold(*params["bn3"])
    w1 = (params["w1"] * s1[None, :]).astype(jnp.bfloat16)
    w2 = (params["w2"] * s2[None, None, None, :]).astype(jnp.bfloat16)
    w3 = (params["w3"] * s3[None, :]).astype(jnp.bfloat16)

    def conv(a, w_hwio, padding, rhs_dilation=(1, 1)):
        return lax.conv_general_dilated(
            a, w_hwio, (1, 1), padding, rhs_dilation=rhs_dilation,
            dimension_numbers=("NHWC", "HWIO", "NHWC"),
            preferred_element_type=jnp.float32)

    xb = x_nhwc.astype(jnp.bfloat16)
    o1 = jnp.maximum(conv(xb, w1[None, None], "VALID") + b1,
                     0.0).astype(jnp.bfloat16)
    o2 = jnp.maximum(conv(o1, w2, [(d, d), (d, d)], (d, d)) + b2,
                     0.0).astype(jnp.bfloat16)
    o3 = conv(o2, w3[None, None], "VALID") + b3 + x_nhwc.astype(jnp.float32)
    return jnp.maximum(o3, 0.0).astype(out_dtype)


# ----------------------------------- init -------------------------------------


def _init_params(key, inplanes, planes):
    expansion = 4
    ks = jax.random.split(key, 6)

    def bn(k, c):
        k0, k1, k2, k3 = jax.random.split(k, 4)
        gamma = 1.0 + 0.1 * jax.random.normal(k0, (c,), jnp.float32)
        beta = 0.1 * jax.random.normal(k1, (c,), jnp.float32)
        mean = 0.1 * jax.random.normal(k2, (c,), jnp.float32)
        var = jax.random.uniform(k3, (c,), jnp.float32, 0.5, 1.5)
        return (gamma, beta, mean, var)

    return {
        # conv1: PyTorch OIHW (planes, inplanes, 1, 1) -> (inplanes, planes)
        "w1": 0.1 * jax.random.normal(ks[0], (inplanes, planes), jnp.float32),
        "bn1": bn(ks[1], planes),
        # conv2: PyTorch OIHW (planes, planes, 3, 3) -> HWIO (3, 3, planes, planes)
        "w2": 0.1 * jax.random.normal(ks[2], (3, 3, planes, planes), jnp.float32),
        "bn2": bn(ks[3], planes),
        # conv3: PyTorch OIHW (4*planes, planes, 1, 1) -> (planes, 4*planes)
        "w3": 0.1 * jax.random.normal(ks[4], (planes, planes * expansion),
                                      jnp.float32),
        "bn3": bn(ks[5], planes * expansion),
    }


# ----------------------------------- main --------------------------------------


if __name__ == "__main__":
    planes = 32
    inplanes = planes * 4          # inplanes == planes*4 -> downsample is None
    N, H, W = 2, 16, 16

    key = jax.random.PRNGKey(0)
    kx, kp = jax.random.split(key)
    x = jax.random.normal(kx, (N, H, W, inplanes), jnp.float32)   # NHWC
    params = _init_params(kp, inplanes, planes)

    # 1) default config: auto row tile (whole image per grid step), dilation=1
    out = jax.block_until_ready(bottleneck_forward(x, params, dilation=1))
    ref = reference_bottleneck(x, params, dilation=1)
    np.testing.assert_allclose(np.asarray(out.astype(jnp.float32)),
                               np.asarray(ref.astype(jnp.float32)),
                               rtol=2e-2, atol=2e-2)

    # 2) multi row-tile + dilation=2: exercises the in-kernel halo paths
    out2 = jax.block_until_ready(
        bottleneck_forward(x, params, dilation=2, row_tile=8))
    ref2 = reference_bottleneck(x, params, dilation=2)
    np.testing.assert_allclose(np.asarray(out2.astype(jnp.float32)),
                               np.asarray(ref2.astype(jnp.float32)),
                               rtol=2e-2, atol=2e-2)

    print("KERNEL_OK")
</pallas_src>

<mosaic_0001>
module attributes {stable_mosaic.version = 11 : i64} {
  func.func @_roll_probe_kernel(%arg0: memref<8x8x128xf32, #tpu.memory_space<vmem>>, %arg1: memref<8x8x128xf32, #tpu.memory_space<vmem>>) attributes {dimension_semantics = [], scalar_prefetch = 0 : i64, scratch_operands = 0 : i64, tpu.core_type = #tpu.core_type<tc>} {
    %c0 = arith.constant 0 : index
    %c0_0 = arith.constant 0 : index
    %c0_1 = arith.constant 0 : index
    %0 = vector.load %arg0[%c0, %c0_0, %c0_1] : memref<8x8x128xf32, #tpu.memory_space<vmem>>, vector<8x8x128xf32>
    %c1_i32 = arith.constant 1 : i32
    %1 = tpu.dynamic_rotate %0 by %c1_i32 dim 1 : vector<8x8x128xf32>, i32 -> vector<8x8x128xf32>
    %c0_2 = arith.constant 0 : index
    %c0_3 = arith.constant 0 : index
    %c0_4 = arith.constant 0 : index
    %2 = vector.load %arg1[%c0_2, %c0_3, %c0_4] : memref<8x8x128xf32, #tpu.memory_space<vmem>>, vector<8x8x128xf32>
    tpu.vector_store %arg1[%c0_2, %c0_3, %c0_4], %1 {strides = array<i32>} : memref<8x8x128xf32, #tpu.memory_space<vmem>>, vector<8x8x128xf32>,
    return
  }
}

module attributes {stable_mosaic.version = 11 : i64} {
  func.func @_bottleneck_kernel(%arg0: i32, %arg1: i32, %arg2: memref<1x16x16x128xf32, #tpu.memory_space<vmem>>, %arg3: memref<128x32xbf16, #tpu.memory_space<vmem>>, %arg4: memref<3x3x32x32xbf16, #tpu.memory_space<vmem>>, %arg5: memref<32x128xbf16, #tpu.memory_space<vmem>>, %arg6: memref<1x32xf32, #tpu.memory_space<vmem>>, %arg7: memref<1x32xf32, #tpu.memory_space<vmem>>, %arg8: memref<1x128xf32, #tpu.memory_space<vmem>>, %arg9: memref<1x16x16x128xbf16, #tpu.memory_space<vmem>>, %arg10: memref<18x32x32xbf16, #tpu.memory_space<vmem>>) attributes {dimension_semantics = [#tpu.dimension_semantics<parallel>, #tpu.dimension_semantics<arbitrary>], iteration_bounds = array<i64: 2, 1>, scalar_prefetch = 0 : i64, scratch_operands = 1 : i64, tpu.core_type = #tpu.core_type<tc>, window_params = [{transform_indices = @transform_0, window_bounds = array<i64: 1, 16, 16, 128>}, {pipeline_mode = #tpu.pipeline_mode<synchronous>, transform_indices = @transform_1, window_bounds = array<i64: 128, 32>}, {pipeline_mode = #tpu.pipeline_mode<synchronous>, transform_indices = @transform_2, window_bounds = array<i64: 3, 3, 32, 32>}, {pipeline_mode = #tpu.pipeline_mode<synchronous>, transform_indices = @transform_3, window_bounds = array<i64: 32, 128>}, {pipeline_mode = #tpu.pipeline_mode<synchronous>, transform_indices = @transform_4, window_bounds = array<i64: 1, 32>}, {pipeline_mode = #tpu.pipeline_mode<synchronous>, transform_indices = @transform_5, window_bounds = array<i64: 1, 32>}, {pipeline_mode = #tpu.pipeline_mode<synchronous>, transform_indices = @transform_6, window_bounds = array<i64: 1, 128>}, {transform_indices = @transform_7, window_bounds = array<i64: 1, 16, 16, 128>}]} {
    %c16_i32 = arith.constant 16 : i32
    %0 = arith.muli %arg1, %c16_i32 : i32
    %c0 = arith.constant 0 : index
    %c0_0 = arith.constant 0 : index
    %1 = vector.load %arg3[%c0, %c0_0] : memref<128x32xbf16, #tpu.memory_space<vmem>>, vector<128x32xbf16>
    %c0_1 = arith.constant 0 : index
    %c0_2 = arith.constant 0 : index
    %2 = vector.load %arg6[%c0_1, %c0_2] : memref<1x32xf32, #tpu.memory_space<vmem>>, vector<1x32xf32>
    %c0_3 = arith.constant 0 : index
    %3 = arith.index_cast %0 : i32 to index
    %c0_4 = arith.constant 0 : index
    %c0_5 = arith.constant 0 : index
    %4 = vector.load %arg2[%c0_3, %3, %c0_4, %c0_5] : memref<1x16x16x128xf32, #tpu.memory_space<vmem>>, vector<1x16x16x128xf32>
    %5 = vector.shape_cast %4 : vector<1x16x16x128xf32> to vector<16x16x128xf32>
    %6 = arith.truncf %5 : vector<16x16x128xf32> to vector<16x16x128xbf16>
    %7 = vector.shape_cast %6 : vector<16x16x128xbf16> to vector<256x128xbf16>
    %cst = arith.constant dense<0.000000e+00> : vector<256x32xf32>
    %8 = tpu.matmul %7, %1, %cst {dimension_numbers = #tpu.dot_dimension_numbers<[1], [0], [0], [1], [0, 0, 1, 1], [], []>} : vector<256x128xbf16>, vector<128x32xbf16>, vector<256x32xf32> -> vector<256x32xf32>
    %9 = vector.broadcast %2 : vector<1x32xf32> to vector<256x32xf32>
    %10 = arith.addf %8, %9 : vector<256x32xf32>
    %cst_6 = arith.constant 0.000000e+00 : f32
    %11 = vector.broadcast %cst_6 : f32 to vector<256x32xf32>
    %12 = arith.maximumf %10, %11 : vector<256x32xf32>
    %13 = vector.shape_cast %12 : vector<256x32xf32> to vector<16x16x32xf32>
    %14 = arith.truncf %13 : vector<16x16x32xf32> to vector<16x16x32xbf16>
    %c1 = arith.constant 1 : index
    %c0_7 = arith.constant 0 : index
    %c0_8 = arith.constant 0 : index
    %15 = vector.load %arg10[%c1, %c0_7, %c0_8] : memref<18x32x32xbf16, #tpu.memory_space<vmem>>, vector<16x16x32xbf16>
    tpu.vector_store %arg10[%c1, %c0_7, %c0_8], %14 {strides = array<i32>} : memref<18x32x32xbf16, #tpu.memory_space<vmem>>, vector<16x16x32xbf16>,
    %cst_9 = arith.constant 0.000000e+00 : bf16
    %16 = vector.broadcast %cst_9 : bf16 to vector<18x16x32xbf16>
    %c0_10 = arith.constant 0 : index
    %c16 = arith.constant 16 : index
    %c0_11 = arith.constant 0 : index
    %17 = vector.load %arg10[%c0_10, %c16, %c0_11] : memref<18x32x32xbf16, #tpu.memory_space<vmem>>, vector<18x16x32xbf16>
    tpu.vector_store %arg10[%c0_10, %c16, %c0_11], %16 {strides = array<i32>} : memref<18x32x32xbf16, #tpu.memory_space<vmem>>, vector<18x16x32xbf16>,
    %c0_i32 = arith.constant 0 : i32
    %18 = arith.cmpi sgt, %arg1, %c0_i32 : i32
    %19 = arith.extui %18 : i1 to i32
    %c0_i32_12 = arith.constant 0 : i32
    %20 = arith.cmpi ne, %19, %c0_i32_12 : i32
    scf.if %20 {
      %c1_i32 = arith.constant 1 : i32
      %105 = arith.subi %0, %c1_i32 : i32
      %c0_88 = arith.constant 0 : index
      %106 = arith.index_cast %105 : i32 to index
      %c0_89 = arith.constant 0 : index
      %c0_90 = arith.constant 0 : index
      %107 = vector.load %arg2[%c0_88, %106, %c0_89, %c0_90] : memref<1x16x16x128xf32, #tpu.memory_space<vmem>>, vector<1x1x16x128xf32>
      %108 = vector.shape_cast %107 : vector<1x1x16x128xf32> to vector<1x16x128xf32>
      %109 = arith.truncf %108 : vector<1x16x128xf32> to vector<1x16x128xbf16>
      %110 = vector.shape_cast %109 : vector<1x16x128xbf16> to vector<16x128xbf16>
      %cst_91 = arith.constant dense<0.000000e+00> : vector<16x32xf32>
      %111 = tpu.matmul %110, %1, %cst_91 {dimension_numbers = #tpu.dot_dimension_numbers<[1], [0], [0], [1], [0, 0, 1, 1], [], []>} : vector<16x128xbf16>, vector<128x32xbf16>, vector<16x32xf32> -> vector<16x32xf32>
      %112 = vector.broadcast %2 : vector<1x32xf32> to vector<16x32xf32>
      %113 = arith.addf %111, %112 : vector<16x32xf32>
      %cst_92 = arith.constant 0.000000e+00 : f32
      %114 = vector.broadcast %cst_92 : f32 to vector<16x32xf32>
      %115 = arith.maximumf %113, %114 : vector<16x32xf32>
      %116 = vector.shape_cast %115 : vector<16x32xf32> to vector<1x16x32xf32>
      %117 = arith.truncf %116 : vector<1x16x32xf32> to vector<1x16x32xbf16>
      %c0_93 = arith.constant 0 : index
      %c0_94 = arith.constant 0 : index
      %c0_95 = arith.constant 0 : index
      %118 = vector.load %arg10[%c0_93, %c0_94, %c0_95] : memref<18x32x32xbf16, #tpu.memory_space<vmem>>, vector<1x16x32xbf16>
      tpu.vector_store %arg10[%c0_93, %c0_94, %c0_95], %117 {strides = array<i32>} : memref<18x32x32xbf16, #tpu.memory_space<vmem>>, vector<1x16x32xbf16>,
    } else {
    }
    %c0_i32_13 = arith.constant 0 : i32
    %21 = arith.cmpi eq, %arg1, %c0_i32_13 : i32
    %22 = arith.extui %21 : i1 to i32
    %c0_i32_14 = arith.constant 0 : i32
    %23 = arith.cmpi ne, %22, %c0_i32_14 : i32
    scf.if %23 {
      %cst_88 = arith.constant 0.000000e+00 : bf16
      %105 = vector.broadcast %cst_88 : bf16 to vector<1x16x32xbf16>
      %c0_89 = arith.constant 0 : index
      %c0_90 = arith.constant 0 : index
      %c0_91 = arith.constant 0 : index
      %106 = vector.load %arg10[%c0_89, %c0_90, %c0_91] : memref<18x32x32xbf16, #tpu.memory_space<vmem>>, vector<1x16x32xbf16>
      tpu.vector_store %arg10[%c0_89, %c0_90, %c0_91], %105 {strides = array<i32>} : memref<18x32x32xbf16, #tpu.memory_space<vmem>>, vector<1x16x32xbf16>,
    } else {
    }
    %c0_i32_15 = arith.constant 0 : i32
    %24 = arith.cmpi slt, %arg1, %c0_i32_15 : i32
    %25 = arith.extui %24 : i1 to i32
    %c0_i32_16 = arith.constant 0 : i32
    %26 = arith.cmpi ne, %25, %c0_i32_16 : i32
    scf.if %26 {
      %c16_i32_88 = arith.constant 16 : i32
      %105 = arith.addi %0, %c16_i32_88 : i32
      %c0_89 = arith.constant 0 : index
      %106 = arith.index_cast %105 : i32 to index
      %c0_90 = arith.constant 0 : index
      %c0_91 = arith.constant 0 : index
      %107 = vector.load %arg2[%c0_89, %106, %c0_90, %c0_91] : memref<1x16x16x128xf32, #tpu.memory_space<vmem>>, vector<1x1x16x128xf32>
      %108 = vector.shape_cast %107 : vector<1x1x16x128xf32> to vector<1x16x128xf32>
      %109 = arith.truncf %108 : vector<1x16x128xf32> to vector<1x16x128xbf16>
      %110 = vector.shape_cast %109 : vector<1x16x128xbf16> to vector<16x128xbf16>
      %cst_92 = arith.constant dense<0.000000e+00> : vector<16x32xf32>
      %111 = tpu.matmul %110, %1, %cst_92 {dimension_numbers = #tpu.dot_dimension_numbers<[1], [0], [0], [1], [0, 0, 1, 1], [], []>} : vector<16x128xbf16>, vector<128x32xbf16>, vector<16x32xf32> -> vector<16x32xf32>
      %112 = vector.broadcast %2 : vector<1x32xf32> to vector<16x32xf32>
      %113 = arith.addf %111, %112 : vector<16x32xf32>
      %cst_93 = arith.constant 0.000000e+00 : f32
      %114 = vector.broadcast %cst_93 : f32 to vector<16x32xf32>
      %115 = arith.maximumf %113, %114 : vector<16x32xf32>
      %116 = vector.shape_cast %115 : vector<16x32xf32> to vector<1x16x32xf32>
      %117 = arith.truncf %116 : vector<1x16x32xf32> to vector<1x16x32xbf16>
      %c17 = arith.constant 17 : index
      %c0_94 = arith.constant 0 : index
      %c0_95 = arith.constant 0 : index
      %118 = vector.load %arg10[%c17, %c0_94, %c0_95] : memref<18x32x32xbf16, #tpu.memory_space<vmem>>, vector<1x16x32xbf16>
      tpu.vector_store %arg10[%c17, %c0_94, %c0_95], %117 {strides = array<i32>} : memref<18x32x32xbf16, #tpu.memory_space<vmem>>, vector<1x16x32xbf16>,
    } else {
    }
    %c0_i32_17 = arith.constant 0 : i32
    %27 = arith.cmpi eq, %arg1, %c0_i32_17 : i32
    %28 = arith.extui %27 : i1 to i32
    %c0_i32_18 = arith.constant 0 : i32
    %29 = arith.cmpi ne, %28, %c0_i32_18 : i32
    scf.if %29 {
      %cst_88 = arith.constant 0.000000e+00 : bf16
      %105 = vector.broadcast %cst_88 : bf16 to vector<1x16x32xbf16>
      %c17 = arith.constant 17 : index
      %c0_89 = arith.constant 0 : index
      %c0_90 = arith.constant 0 : index
      %106 = vector.load %arg10[%c17, %c0_89, %c0_90] : memref<18x32x32xbf16, #tpu.memory_space<vmem>>, vector<1x16x32xbf16>
      tpu.vector_store %arg10[%c17, %c0_89, %c0_90], %105 {strides = array<i32>} : memref<18x32x32xbf16, #tpu.memory_space<vmem>>, vector<1x16x32xbf16>,
    } else {
    }
    %c0_19 = arith.constant 0 : index
    %c0_20 = arith.constant 0 : index
    %c0_21 = arith.constant 0 : index
    %30 = vector.load %arg10[%c0_19, %c0_20, %c0_21] : memref<18x32x32xbf16, #tpu.memory_space<vmem>>, vector<16x32x32xbf16>
    %31 = vector.shape_cast %30 : vector<16x32x32xbf16> to vector<512x32xbf16>
    %c0_22 = arith.constant 0 : index
    %c0_23 = arith.constant 0 : index
    %c0_24 = arith.constant 0 : index
    %c0_25 = arith.constant 0 : index
    %32 = vector.load %arg4[%c0_22, %c0_23, %c0_24, %c0_25] : memref<3x3x32x32xbf16, #tpu.memory_space<vmem>>, vector<1x1x32x32xbf16>
    %33 = vector.shape_cast %32 : vector<1x1x32x32xbf16> to vector<32x32xbf16>
    %cst_26 = arith.constant dense<0.000000e+00> : vector<512x32xf32>
    %34 = tpu.matmul %31, %33, %cst_26 {dimension_numbers = #tpu.dot_dimension_numbers<[1], [0], [0], [1], [0, 0, 1, 1], [], []>} : vector<512x32xbf16>, vector<32x32xbf16>, vector<512x32xf32> -> vector<512x32xf32>
    %c0_27 = arith.constant 0 : index
    %c1_28 = arith.constant 1 : index
    %c0_29 = arith.constant 0 : index
    %c0_30 = arith.constant 0 : index
    %35 = vector.load %arg4[%c0_27, %c1_28, %c0_29, %c0_30] : memref<3x3x32x32xbf16, #tpu.memory_space<vmem>>, vector<1x1x32x32xbf16>
    %36 = vector.shape_cast %35 : vector<1x1x32x32xbf16> to vector<32x32xbf16>
    %cst_31 = arith.constant dense<0.000000e+00> : vector<512x32xf32>
    %37 = tpu.matmul %31, %36, %cst_31 {dimension_numbers = #tpu.dot_dimension_numbers<[1], [0], [0], [1], [0, 0, 1, 1], [], []>} : vector<512x32xbf16>, vector<32x32xbf16>, vector<512x32xf32> -> vector<512x32xf32>
    %c0_32 = arith.constant 0 : index
    %c2 = arith.constant 2 : index
    %c0_33 = arith.constant 0 : index
    %c0_34 = arith.constant 0 : index
    %38 = vector.load %arg4[%c0_32, %c2, %c0_33, %c0_34] : memref<3x3x32x32xbf16, #tpu.memory_space<vmem>>, vector<1x1x32x32xbf16>
    %39 = vector.shape_cast %38 : vector<1x1x32x32xbf16> to vector<32x32xbf16>
    %cst_35 = arith.constant dense<0.000000e+00> : vector<512x32xf32>
    %40 = tpu.matmul %31, %39, %cst_35 {dimension_numbers = #tpu.dot_dimension_numbers<[1], [0], [0], [1], [0, 0, 1, 1], [], []>} : vector<512x32xbf16>, vector<32x32xbf16>, vector<512x32xf32> -> vector<512x32xf32>
    %c1_36 = arith.constant 1 : index
    %c0_37 = arith.constant 0 : index
    %c0_38 = arith.constant 0 : index
    %41 = vector.load %arg10[%c1_36, %c0_37, %c0_38] : memref<18x32x32xbf16, #tpu.memory_space<vmem>>, vector<16x32x32xbf16>
    %42 = vector.shape_cast %41 : vector<16x32x32xbf16> to vector<512x32xbf16>
    %c1_39 = arith.constant 1 : index
    %c0_40 = arith.constant 0 : index
    %c0_41 = arith.constant 0 : index
    %c0_42 = arith.constant 0 : index
    %43 = vector.load %arg4[%c1_39, %c0_40, %c0_41, %c0_42] : memref<3x3x32x32xbf16, #tpu.memory_space<vmem>>, vector<1x1x32x32xbf16>
    %44 = vector.shape_cast %43 : vector<1x1x32x32xbf16> to vector<32x32xbf16>
    %cst_43 = arith.constant dense<0.000000e+00> : vector<512x32xf32>
    %45 = tpu.matmul %42, %44, %cst_43 {dimension_numbers = #tpu.dot_dimension_numbers<[1], [0], [0], [1], [0, 0, 1, 1], [], []>} : vector<512x32xbf16>, vector<32x32xbf16>, vector<512x32xf32> -> vector<512x32xf32>
    %46 = arith.addf %34, %45 : vector<512x32xf32>
    %c1_44 = arith.constant 1 : index
    %c1_45 = arith.constant 1 : index
    %c0_46 = arith.constant 0 : index
    %c0_47 = arith.constant 0 : index
    %47 = vector.load %arg4[%c1_44, %c1_45, %c0_46, %c0_47] : memref<3x3x32x32xbf16, #tpu.memory_space<vmem>>, vector<1x1x32x32xbf16>
    %48 = vector.shape_cast %47 : vector<1x1x32x32xbf16> to vector<32x32xbf16>
    %cst_48 = arith.constant dense<0.000000e+00> : vector<512x32xf32>
    %49 = tpu.matmul %42, %48, %cst_48 {dimension_numbers = #tpu.dot_dimension_numbers<[1], [0], [0], [1], [0, 0, 1, 1], [], []>} : vector<512x32xbf16>, vector<32x32xbf16>, vector<512x32xf32> -> vector<512x32xf32>
    %50 = arith.addf %37, %49 : vector<512x32xf32>
    %c1_49 = arith.constant 1 : index
    %c2_50 = arith.constant 2 : index
    %c0_51 = arith.constant 0 : index
    %c0_52 = arith.constant 0 : index
    %51 = vector.load %arg4[%c1_49, %c2_50, %c0_51, %c0_52] : memref<3x3x32x32xbf16, #tpu.memory_space<vmem>>, vector<1x1x32x32xbf16>
    %52 = vector.shape_cast %51 : vector<1x1x32x32xbf16> to vector<32x32xbf16>
    %cst_53 = arith.constant dense<0.000000e+00> : vector<512x32xf32>
    %53 = tpu.matmul %42, %52, %cst_53 {dimension_numbers = #tpu.dot_dimension_numbers<[1], [0], [0], [1], [0, 0, 1, 1], [], []>} : vector<512x32xbf16>, vector<32x32xbf16>, vector<512x32xf32> -> vector<512x32xf32>
    %54 = arith.addf %40, %53 : vector<512x32xf32>
    %c2_54 = arith.constant 2 : index
    %c0_55 = arith.constant 0 : index
    %c0_56 = arith.constant 0 : index
    %55 = vector.load %arg10[%c2_54, %c0_55, %c0_56] : memref<18x32x32xbf16, #tpu.memory_space<vmem>>, vector<16x32x32xbf16>
    %56 = vector.shape_cast %55 : vector<16x32x32xbf16> to vector<512x32xbf16>
    %c2_57 = arith.constant 2 : index
    %c0_58 = arith.constant 0 : index
    %c0_59 = arith.constant 0 : index
    %c0_60 = arith.constant 0 : index
    %57 = vector.load %arg4[%c2_57, %c0_58, %c0_59, %c0_60] : memref<3x3x32x32xbf16, #tpu.memory_space<vmem>>, vector<1x1x32x32xbf16>
    %58 = vector.shape_cast %57 : vector<1x1x32x32xbf16> to vector<32x32xbf16>
    %cst_61 = arith.constant dense<0.000000e+00> : vector<512x32xf32>
    %59 = tpu.matmul %56, %58, %cst_61 {dimension_numbers = #tpu.dot_dimension_numbers<[1], [0], [0], [1], [0, 0, 1, 1], [], []>} : vector<512x32xbf16>, vector<32x32xbf16>, vector<512x32xf32> -> vector<512x32xf32>
    %60 = arith.addf %46, %59 : vector<512x32xf32>
    %c2_62 = arith.constant 2 : index
    %c1_63 = arith.constant 1 : index
    %c0_64 = arith.constant 0 : index
    %c0_65 = arith.constant 0 : index
    %61 = vector.load %arg4[%c2_62, %c1_63, %c0_64, %c0_65] : memref<3x3x32x32xbf16, #tpu.memory_space<vmem>>, vector<1x1x32x32xbf16>
    %62 = vector.shape_cast %61 : vector<1x1x32x32xbf16> to vector<32x32xbf16>
    %cst_66 = arith.constant dense<0.000000e+00> : vector<512x32xf32>
    %63 = tpu.matmul %56, %62, %cst_66 {dimension_numbers = #tpu.dot_dimension_numbers<[1], [0], [0], [1], [0, 0, 1, 1], [], []>} : vector<512x32xbf16>, vector<32x32xbf16>, vector<512x32xf32> -> vector<512x32xf32>
    %64 = arith.addf %50, %63 : vector<512x32xf32>
    %c2_67 = arith.constant 2 : index
    %c2_68 = arith.constant 2 : index
    %c0_69 = arith.constant 0 : index
    %c0_70 = arith.constant 0 : index
    %65 = vector.load %arg4[%c2_67, %c2_68, %c0_69, %c0_70] : memref<3x3x32x32xbf16, #tpu.memory_space<vmem>>, vector<1x1x32x32xbf16>
    %66 = vector.shape_cast %65 : vector<1x1x32x32xbf16> to vector<32x32xbf16>
    %cst_71 = arith.constant dense<0.000000e+00> : vector<512x32xf32>
    %67 = tpu.matmul %56, %66, %cst_71 {dimension_numbers = #tpu.dot_dimension_numbers<[1], [0], [0], [1], [0, 0, 1, 1], [], []>} : vector<512x32xbf16>, vector<32x32xbf16>, vector<512x32xf32> -> vector<512x32xf32>
    %68 = arith.addf %54, %67 : vector<512x32xf32>
    %69 = vector.shape_cast %60 : vector<512x32xf32> to vector<16x32x32xf32>
    %70 = vector.shape_cast %64 : vector<512x32xf32> to vector<16x32x32xf32>
    %71 = vector.shape_cast %68 : vector<512x32xf32> to vector<16x32x32xf32>
    %72 = vector.extract_strided_slice %69 {offsets = [0, 31, 0], sizes = [16, 1, 32], strides = [1, 1, 1]} : vector<16x32x32xf32> to vector<16x1x32xf32>
    %73 = vector.extract_strided_slice %69 {offsets = [0, 0, 0], sizes = [16, 31, 32], strides = [1, 1, 1]} : vector<16x32x32xf32> to vector<16x31x32xf32>
    %74 = tpu.concatenate %72, %73 in 1 : vector<16x1x32xf32>, vector<16x31x32xf32> -> vector<16x32x32xf32>
    %75 = arith.addf %74, %70 : vector<16x32x32xf32>
    %76 = vector.extract_strided_slice %71 {offsets = [0, 1, 0], sizes = [16, 31, 32], strides = [1, 1, 1]} : vector<16x32x32xf32> to vector<16x31x32xf32>
    %77 = vector.extract_strided_slice %71 {offsets = [0, 0, 0], sizes = [16, 1, 32], strides = [1, 1, 1]} : vector<16x32x32xf32> to vector<16x1x32xf32>
    %78 = tpu.concatenate %76, %77 in 1 : vector<16x31x32xf32>, vector<16x1x32xf32> -> vector<16x32x32xf32>
    %79 = arith.addf %75, %78 : vector<16x32x32xf32>
    %c0_72 = arith.constant 0 : index
    %c0_73 = arith.constant 0 : index
    %80 = vector.load %arg7[%c0_72, %c0_73] : memref<1x32xf32, #tpu.memory_space<vmem>>, vector<1x32xf32>
    %81 = vector.shape_cast %80 : vector<1x32xf32> to vector<1x1x32xf32>
    %82 = vector.broadcast %81 : vector<1x1x32xf32> to vector<16x32x32xf32>
    %83 = arith.addf %79, %82 : vector<16x32x32xf32>
    %cst_74 = arith.constant 0.000000e+00 : f32
    %84 = vector.broadcast %cst_74 : f32 to vector<16x32x32xf32>
    %85 = arith.maximumf %83, %84 : vector<16x32x32xf32>
    %86 = vector.extract_strided_slice %85 {offsets = [0, 0, 0], sizes = [16, 16, 32], strides = [1, 1, 1]} : vector<16x32x32xf32> to vector<16x16x32xf32>
    %87 = arith.truncf %86 : vector<16x16x32xf32> to vector<16x16x32xbf16>
    %88 = vector.shape_cast %87 : vector<16x16x32xbf16> to vector<256x32xbf16>
    %c0_75 = arith.constant 0 : index
    %c0_76 = arith.constant 0 : index
    %89 = vector.load %arg5[%c0_75, %c0_76] : memref<32x128xbf16, #tpu.memory_space<vmem>>, vector<32x128xbf16>
    %cst_77 = arith.constant dense<0.000000e+00> : vector<256x128xf32>
    %90 = tpu.matmul %88, %89, %cst_77 {dimension_numbers = #tpu.dot_dimension_numbers<[1], [0], [0], [1], [0, 0, 1, 1], [], []>} : vector<256x32xbf16>, vector<32x128xbf16>, vector<256x128xf32> -> vector<256x128xf32>
    %c0_78 = arith.constant 0 : index
    %c0_79 = arith.constant 0 : index
    %91 = vector.load %arg8[%c0_78, %c0_79] : memref<1x128xf32, #tpu.memory_space<vmem>>, vector<1x128xf32>
    %92 = vector.broadcast %91 : vector<1x128xf32> to vector<256x128xf32>
    %93 = arith.addf %90, %92 : vector<256x128xf32>
    %94 = vector.shape_cast %93 : vector<256x128xf32> to vector<16x16x128xf32>
    %c0_80 = arith.constant 0 : index
    %95 = arith.index_cast %0 : i32 to index
    %c0_81 = arith.constant 0 : index
    %c0_82 = arith.constant 0 : index
    %96 = vector.load %arg2[%c0_80, %95, %c0_81, %c0_82] : memref<1x16x16x128xf32, #tpu.memory_space<vmem>>, vector<1x16x16x128xf32>
    %97 = vector.shape_cast %96 : vector<1x16x16x128xf32> to vector<16x16x128xf32>
    %98 = arith.addf %94, %97 : vector<16x16x128xf32>
    %cst_83 = arith.constant 0.000000e+00 : f32
    %99 = vector.broadcast %cst_83 : f32 to vector<16x16x128xf32>
    %100 = arith.maximumf %98, %99 : vector<16x16x128xf32>
    %101 = arith.truncf %100 : vector<16x16x128xf32> to vector<16x16x128xbf16>
    %c0_84 = arith.constant 0 : index
    %c0_85 = arith.constant 0 : index
    %c0_86 = arith.constant 0 : index
    %c0_87 = arith.constant 0 : index
    %102 = vector.load %arg9[%c0_84, %c0_85, %c0_86, %c0_87] : memref<1x16x16x128xbf16, #tpu.memory_space<vmem>>, vector<1x16x16x128xbf16>
    %103 = vector.shape_cast %102 : vector<1x16x16x128xbf16> to vector<16x16x128xbf16>
    %104 = vector.shape_cast %101 : vector<16x16x128xbf16> to vector<1x16x16x128xbf16>
    tpu.vector_store %arg9[%c0_84, %c0_85, %c0_86, %c0_87], %104 {strides = array<i32>} : memref<1x16x16x128xbf16, #tpu.memory_space<vmem>>, vector<1x16x16x128xbf16>,
    return
  }
  func.func @transform_0(%arg0: i32, %arg1: i32) -> (i32, i32, i32, i32) {
    %c0_i32 = arith.constant 0 : i32
    %c0_i32_0 = arith.constant 0 : i32
    %c0_i32_1 = arith.constant 0 : i32
    %c0_i32_2 = arith.constant 0 : i32
    return %arg0, %c0_i32, %c0_i32_0, %c0_i32_1 : i32, i32, i32, i32
  }
  func.func @transform_1(%arg0: i32, %arg1: i32) -> (i32, i32) {
    %c0_i32 = arith.constant 0 : i32
    %c0_i32_0 = arith.constant 0 : i32
    %c0_i32_1 = arith.constant 0 : i32
    return %c0_i32, %c0_i32_0 : i32, i32
  }
  func.func @transform_2(%arg0: i32, %arg1: i32) -> (i32, i32, i32, i32) {
    %c0_i32 = arith.constant 0 : i32
    %c0_i32_0 = arith.constant 0 : i32
    %c0_i32_1 = arith.constant 0 : i32
    %c0_i32_2 = arith.constant 0 : i32
    %c0_i32_3 = arith.constant 0 : i32
    return %c0_i32, %c0_i32_0, %c0_i32_1, %c0_i32_2 : i32, i32, i32, i32
  }
  func.func @transform_3(%arg0: i32, %arg1: i32) -> (i32, i32) {
    %c0_i32 = arith.constant 0 : i32
    %c0_i32_0 = arith.constant 0 : i32
    %c0_i32_1 = arith.constant 0 : i32
    return %c0_i32, %c0_i32_0 : i32, i32
  }
  func.func @transform_4(%arg0: i32, %arg1: i32) -> (i32, i32) {
    %c0_i32 = arith.constant 0 : i32
    %c0_i32_0 = arith.constant 0 : i32
    %c0_i32_1 = arith.constant 0 : i32
    return %c0_i32, %c0_i32_0 : i32, i32
  }
  func.func @transform_5(%arg0: i32, %arg1: i32) -> (i32, i32) {
    %c0_i32 = arith.constant 0 : i32
    %c0_i32_0 = arith.constant 0 : i32
    %c0_i32_1 = arith.constant 0 : i32
    return %c0_i32, %c0_i32_0 : i32, i32
  }
  func.func @transform_6(%arg0: i32, %arg1: i32) -> (i32, i32) {
    %c0_i32 = arith.constant 0 : i32
    %c0_i32_0 = arith.constant 0 : i32
    %c0_i32_1 = arith.constant 0 : i32
    return %c0_i32, %c0_i32_0 : i32, i32
  }
  func.func @transform_7(%arg0: i32, %arg1: i32) -> (i32, i32, i32, i32) {
    %c0_i32 = arith.constant 0 : i32
    %c0_i32_0 = arith.constant 0 : i32
    %c0_i32_1 = arith.constant 0 : i32
    return %arg0, %arg1, %c0_i32, %c0_i32_0 : i32, i32, i32, i32
  }
}

</mosaic_0001>

<llo_original>
// kernel: tpu_custom_call.1
$region0: #{tpu_custom_call.1}
  #allocation0 [shape = 'u32[]', space=smem, size = 0x4, offset = 0x4, fixed_abs, tag = 'smem constant byte address 0x4 - core index']
  #allocation1 [shape = 'u32[144,128]{1,0:T(1,128)}', space=vmem, size = 0x12000, scoped, tag = 'internal scratch']
  %s0 = inlined_call_operand.hbm [shape: f32[8,8,128], index: 0, kind: input, shape index: {}]
  %s1 = inlined_call_operand.hbm [shape: f32[8,8,128], index: 1, kind: output, shape index: {}]
  %s2 = sld [smem:[#allocation0]]
  $region18: #{tpu_custom_call.1} parent=0
    _
  %s4 = ssub.s32 1, %s2
  %s5 = scalar_select 0, %s4, %s2
  $region1: #{tpu_custom_call.1} parent=0
    #allocation2 [shape = 'u8[32768]{0}', space=vmem, size = 0x8000, scoped, tag = 'input window, operand 0, single buffered']
    #allocation3 [shape = 's32[1]{0}', space=sflag, size = 0x4, scoped, tag = 'scoped memory for tpu_custom_call.1']
    #allocation4 [shape = 's32[1]{0}', space=sflag, size = 0x4, scoped, tag = 'scoped memory for tpu_custom_call.1']
    #allocation5 [shape = 'u8[32768]{0}', space=vmem, size = 0x8000, scoped, tag = 'output window, operand 0, single buffered']
    %6 = vsyncpa [#allocation3], 0
    %7 = vsyncpa [#allocation4], 0
    // Predicated region
    $region2: #{tpu_custom_call.1} parent=1 // pred_check
      _
    $region3: #{tpu_custom_call.1} parent=1 // pred_check_branch
      %9 = sbr.rel (0) target = $region5
    $region4: #{tpu_custom_call.1} parent=1 // pred_region
      %s11 = ssub.s32 1024, 1024
      %12 = vsyncadd [#allocation3], %s11
      %s13 = sshll.u32 [#allocation2], 4
      %s14 = int_to_ptr.vmem [resolvable:$true] %s13
      %19 = dma.hbm_to_vmem [thread:$0]  %s0, 1024, %s14, [#allocation3], 128, 128, 8
    $region5: #{tpu_custom_call.1} parent=1 // pred_fallthru
      _
    // Predicated region
    $region6: #{tpu_custom_call.1} parent=1 // pred_check
      _
    $region7: #{tpu_custom_call.1} parent=1 // pred_check_branch
      %21 = sbr.rel (0) target = $region9
    $region8: #{tpu_custom_call.1} parent=1 // pred_region
      %22 = dma.done [#allocation3], 1024
    $region9: #{tpu_custom_call.1} parent=1 // pred_fallthru
      _
    %v23 = vld [vmem:[#allocation2] sm:$0xff]
    %v24 = vld [vmem:[#allocation2 + $0x8] sm:$0xff]
    %v25 = vld [vmem:[#allocation2 + $0x10] sm:$0xff]
    %v26 = vld [vmem:[#allocation2 + $0x18] sm:$0xff]
    %v27 = vld [vmem:[#allocation2 + $0x20] sm:$0xff]
    %v28 = vld [vmem:[#allocation2 + $0x28] sm:$0xff]
    %v29 = vld [vmem:[#allocation2 + $0x30] sm:$0xff]
    %v30 = vld [vmem:[#allocation2 + $0x38] sm:$0xff]
    %v31 = vrot.slane %v23, 7
    %v32 = vrot.slane %v24, 7
    %v33 = vrot.slane %v25, 7
    %v34 = vrot.slane %v26, 7
    %v35 = vrot.slane %v27, 7
    %v36 = vrot.slane %v28, 7
    %v37 = vrot.slane %v29, 7
    %v38 = vrot.slane %v30, 7
    %39 = vst [vmem:[#allocation5] sm:$0xff] %v31
    %40 = vst [vmem:[#allocation5 + $0x8] sm:$0xff] %v32
    %41 = vst [vmem:[#allocation5 + $0x10] sm:$0xff] %v33
    %42 = vst [vmem:[#allocation5 + $0x18] sm:$0xff] %v34
    %43 = vst [vmem:[#allocation5 + $0x20] sm:$0xff] %v35
    %44 = vst [vmem:[#allocation5 + $0x28] sm:$0xff] %v36
    %45 = vst [vmem:[#allocation5 + $0x30] sm:$0xff] %v37
    %46 = vst [vmem:[#allocation5 + $0x38] sm:$0xff] %v38
    // Predicated region
    $region10: #{tpu_custom_call.1} parent=1 // pred_check
      _
    $region11: #{tpu_custom_call.1} parent=1 // pred_check_branch
      %48 = sbr.rel (0) target = $region13
    $region12: #{tpu_custom_call.1} parent=1 // pred_region
      %s50 = ssub.s32 1024, 1024
      %51 = vsyncadd [#allocation4], %s50
      %s52 = sshll.u32 [#allocation5], 4
      %s53 = int_to_ptr.vmem [resolvable:$true] %s52
      %58 = dma.vmem_to_hbm [thread:$0]  %s53, 1024, %s1, [#allocation4], 128, 128, 8
    $region13: #{tpu_custom_call.1} parent=1 // pred_fallthru
      _
    // Predicated region
    $region14: #{tpu_custom_call.1} parent=1 // pred_check
      _
    $region15: #{tpu_custom_call.1} parent=1 // pred_check_branch
      %60 = sbr.rel (0) target = $region17
    $region16: #{tpu_custom_call.1} parent=1 // pred_region
      %61 = dma.done [#allocation4], 1024
    $region17: #{tpu_custom_call.1} parent=1 // pred_fallthru
      _
    %62 = vsyncpa [#allocation3], 1
    %63 = vsyncpa [#allocation4], 1

// kernel: tpu_custom_call.1
$region0: #{tpu_custom_call.1}
  #allocation0 [shape = 'u32[]', space=smem, size = 0x4, offset = 0x4, fixed_abs, tag = 'smem constant byte address 0x4 - core index']
  #allocation1 [shape = 'u32[144,128]{1,0:T(1,128)}', space=vmem, size = 0x12000, scoped, tag = 'internal scratch']
  #allocation2 [shape = 'bf16[18,32,32]{2,1,0:T(16,128)(2,1)}', space=vmem, size = 0x24000, scoped, tag = 'scratch operand']
  %s0 = inlined_call_operand.hbm [shape: f32[2,16,16,128], index: 0, kind: input, shape index: {}]
  %s1 = inlined_call_operand.vmem [shape: bf16[128,32], index: 1, kind: input, shape index: {}]
  %s2 = inlined_call_operand.hbm [shape: bf16[3,3,32,32], index: 2, kind: input, shape index: {}]
  %s3 = inlined_call_operand.vmem [shape: bf16[32,128], index: 3, kind: input, shape index: {}]
  %s4 = inlined_call_operand.vmem [shape: f32[1,32], index: 4, kind: input, shape index: {}]
  %s5 = inlined_call_operand.vmem [shape: f32[1,32], index: 5, kind: input, shape index: {}]
  %s6 = inlined_call_operand.vmem [shape: f32[1,128], index: 6, kind: input, shape index: {}]
  %s7 = inlined_call_operand.hbm [shape: bf16[2,16,16,128], index: 7, kind: output, shape index: {}]
  %s8 = sld [smem:[#allocation0]]
  $region85: #{tpu_custom_call.1} parent=0
    _
  %s10 = ssub.s32 1, %s8
  %s11 = scalar_select 0, %s10, %s8
  $region1: #{tpu_custom_call.1} parent=0
    #allocation3 [shape = 'u8[262144]{0}', space=vmem, size = 0x40000, scoped, tag = 'input window, operand 0']
    #allocation4 [shape = 's32[2]{0}', space=sflag, size = 0x8, scoped, tag = 'scoped memory for tpu_custom_call.1']
    #allocation5 [shape = 's32[2]{0}', space=sflag, size = 0x8, scoped, tag = 'scoped memory for tpu_custom_call.1']
    #allocation6 [shape = 'u8[73728]{0}', space=vmem, size = 0x12000, scoped, tag = 'input window, operand 2, single buffered']
    #allocation7 [shape = 's32[1]{0}', space=sflag, size = 0x4, scoped, tag = 'scoped memory for tpu_custom_call.1']
    #allocation8 [shape = 'u8[131072]{0}', space=vmem, size = 0x20000, scoped, tag = 'output window, operand 0']
    %12 = vsyncpa [#allocation4], 0
    %s13 = scalar_lea.sflag [#allocation4], 1
    %14 = vsyncpa %s13, 0
    %15 = vsyncpa [#allocation7], 0
    %16 = vsyncpa [#allocation5], 0
    %s17 = scalar_lea.sflag [#allocation5], 1
    %18 = vsyncpa %s17, 0
    loop: start=0, step=1, limit=4
    $region2: #{tpu_custom_call.1} parent=1 // loop_pre_header
      _
    $region3: #{tpu_custom_call.1} parent=1 // loop_header
      %s20 = sphi 0, %s24
      %p21 = scmp.ge.s32.totalorder %s20, 4
      %s27 = sphi 0, %s39
      %s28 = sphi 0, %s35
      %s29 = sphi 0, %s27
      %s30 = sphi 0, %s28
      %s31 = sphi 0, %s29
      %s32 = sphi 0, %s30
      %s42 = sphi 0, %s44
      %s45 = sphi 0, %s42
      %s46 = sphi 0, %s45
      %s62 = sphi 0, %s46
      %s66 = sphi 0, %s66
      %s68 = sphi 0, %s66
      %s69 = sphi 0, %s68
      %s83 = sphi 0, %s69
      %s87 = sphi 0, %s87
      %s89 = sphi 0, %s87
      %s90 = sphi 0, %s89
      %s104 = sphi 0, %s90
      %s108 = sphi 0, %s108
      %s110 = sphi 0, %s108
      %s111 = sphi 0, %s110
      %s125 = sphi 0, %s111
      %s129 = sphi 0, %s129
      %s131 = sphi 0, %s129
      %s132 = sphi 0, %s131
      %s146 = sphi 0, %s132
      %s150 = sphi 0, %s150
      %s152 = sphi 0, %s150
      %s153 = sphi 0, %s152
      %s167 = sphi 0, %s153
      %s171 = sphi 0, %s171
      %s173 = sphi 0, %s171
      %s174 = sphi 0, %s173
      %s188 = sphi 0, %s174
      %s196 = sphi 0, %s198
      %s199 = sphi 0, %s196
      %s200 = sphi 0, %s199
      %s216 = sphi 0, %s200
    $region4: #{tpu_custom_call.1} parent=1 // loop_header_branch
      %23 = sbr.rel (%p21) target = $region8
    $region5: #{tpu_custom_call.1} parent=1 // loop_body
      %s25 = ssub.s32 %s20, 1
      %s26 = ssub.s32 %s20, 2
      %s33 = sadd.s32 1, %s28
      %p34 = scmp.ge.s32.totalorder %s33, 1
      %s35 = scalar_select %p34, 0, %s33
      %s36 = sadd.s32 1, %s27
      %s37 = scalar_select %p34, %s36, %s27
      %p38 = scmp.ge.s32.totalorder %s37, 2
      %s39 = scalar_select %p38, 0, %s37
      %s40 = ssub.s32 %s27, %s39
      %p41 = scmp.eq.s32.totalorder %s40, 0
      %s43 = sadd.s32 %s42, 1
      %s44 = scalar_select %p41, %s42, %s43
      %p47 = pneg %p41
      %p48 = scmp.eq.s32.totalorder %s20, 1
      %p49 = por %p47, %p48
      %p50 = scmp.ne.s32.totalorder %s42, %s45
      %p51 = scmp.eq.s32.totalorder %s20, 0
      %p52 = por %p50, %p51
      %p53 = scmp.ne.s32.totalorder %s42, %s45
      %p54 = scmp.eq.s32.totalorder %s25, 1
      %p55 = por %p53, %p54
      %p56 = scmp.ne.s32.totalorder %s45, %s46
      %p57 = scmp.eq.s32.totalorder %s25, 0
      %p58 = por %p56, %p57
      %p59 = scmp.ne.s32.totalorder %s45, %s46
      %p60 = scmp.eq.s32.totalorder %s26, 1
      %p61 = por %p59, %p60
      %p63 = scmp.ne.s32.totalorder %s46, %s62
      %p64 = scmp.eq.s32.totalorder %s26, 0
      %p65 = por %p63, %p64
      %s67 = sadd.s32 %s66, 1
      %p70 = scmp.eq.s32.totalorder %s20, 1
      %p71 = scmp.ne.s32.totalorder %s66, %s68
      %p72 = scmp.eq.s32.totalorder %s20, 0
      %p73 = por %p71, %p72
      %p74 = scmp.ne.s32.totalorder %s66, %s68
      %p75 = scmp.eq.s32.totalorder %s25, 1
      %p76 = por %p74, %p75
      %p77 = scmp.ne.s32.totalorder %s68, %s69
      %p78 = scmp.eq.s32.totalorder %s25, 0
      %p79 = por %p77, %p78
      %p80 = scmp.ne.s32.totalorder %s68, %s69
      %p81 = scmp.eq.s32.totalorder %s26, 1
      %p82 = por %p80, %p81
      %p84 = scmp.ne.s32.totalorder %s69, %s83
      %p85 = scmp.eq.s32.totalorder %s26, 0
      %p86 = por %p84, %p85
      %s88 = sadd.s32 %s87, 1
      %p91 = scmp.eq.s32.totalorder %s20, 1
      %p92 = scmp.ne.s32.totalorder %s87, %s89
      %p93 = scmp.eq.s32.totalorder %s20, 0
      %p94 = por %p92, %p93
      %p95 = scmp.ne.s32.totalorder %s87, %s89
      %p96 = scmp.eq.s32.totalorder %s25, 1
      %p97 = por %p95, %p96
      %p98 = scmp.ne.s32.totalorder %s89, %s90
      %p99 = scmp.eq.s32.totalorder %s25, 0
      %p100 = por %p98, %p99
      %p101 = scmp.ne.s32.totalorder %s89, %s90
      %p102 = scmp.eq.s32.totalorder %s26, 1
      %p103 = por %p101, %p102
      %p105 = scmp.ne.s32.totalorder %s90, %s104
      %p106 = scmp.eq.s32.totalorder %s26, 0
      %p107 = por %p105, %p106
      %s109 = sadd.s32 %s108, 1
      %p112 = scmp.eq.s32.totalorder %s20, 1
      %p113 = scmp.ne.s32.totalorder %s108, %s110
      %p114 = scmp.eq.s32.totalorder %s20, 0
      %p115 = por %p113, %p114
      %p116 = scmp.ne.s32.totalorder %s108, %s110
      %p117 = scmp.eq.s32.totalorder %s25, 1
      %p118 = por %p116, %p117
      %p119 = scmp.ne.s32.totalorder %s110, %s111
      %p120 = scmp.eq.s32.totalorder %s25, 0
      %p121 = por %p119, %p120
      %p122 = scmp.ne.s32.totalorder %s110, %s111
      %p123 = scmp.eq.s32.totalorder %s26, 1
      %p124 = por %p122, %p123
      %p126 = scmp.ne.s32.totalorder %s111, %s125
      %p127 = scmp.eq.s32.totalorder %s26, 0
      %p128 = por %p126, %p127
      %s130 = sadd.s32 %s129, 1
      %p133 = scmp.eq.s32.totalorder %s20, 1
      %p134 = scmp.ne.s32.totalorder %s129, %s131
      %p135 = scmp.eq.s32.totalorder %s20, 0
      %p136 = por %p134, %p135
      %p137 = scmp.ne.s32.totalorder %s129, %s131
      %p138 = scmp.eq.s32.totalorder %s25, 1
      %p139 = por %p137, %p138
      %p140 = scmp.ne.s32.totalorder %s131, %s132
      %p141 = scmp.eq.s32.totalorder %s25, 0
      %p142 = por %p140, %p141
      %p143 = scmp.ne.s32.totalorder %s131, %s132
      %p144 = scmp.eq.s32.totalorder %s26, 1
      %p145 = por %p143, %p144
      %p147 = scmp.ne.s32.totalorder %s132, %s146
      %p148 = scmp.eq.s32.totalorder %s26, 0
      %p149 = por %p147, %p148
      %s151 = sadd.s32 %s150, 1
      %p154 = scmp.eq.s32.totalorder %s20, 1
      %p155 = scmp.ne.s32.totalorder %s150, %s152
      %p156 = scmp.eq.s32.totalorder %s20, 0
      %p157 = por %p155, %p156
      %p158 = scmp.ne.s32.totalorder %s150, %s152
      %p159 = scmp.eq.s32.totalorder %s25, 1
      %p160 = por %p158, %p159
      %p161 = scmp.ne.s32.totalorder %s152, %s153
      %p162 = scmp.eq.s32.totalorder %s25, 0
      %p163 = por %p161, %p162
      %p164 = scmp.ne.s32.totalorder %s152, %s153
      %p165 = scmp.eq.s32.totalorder %s26, 1
      %p166 = por %p164, %p165
      %p168 = scmp.ne.s32.totalorder %s153, %s167
      %p169 = scmp.eq.s32.totalorder %s26, 0
      %p170 = por %p168, %p169
      %s172 = sadd.s32 %s171, 1
      %p175 = scmp.eq.s32.totalorder %s20, 1
      %p176 = scmp.ne.s32.totalorder %s171, %s173
      %p177 = scmp.eq.s32.totalorder %s20, 0
      %p178 = por %p176, %p177
      %p179 = scmp.ne.s32.totalorder %s171, %s173
      %p180 = scmp.eq.s32.totalorder %s25, 1
      %p181 = por %p179, %p180
      %p182 = scmp.ne.s32.totalorder %s173, %s174
      %p183 = scmp.eq.s32.totalorder %s25, 0
      %p184 = por %p182, %p183
      %p185 = scmp.ne.s32.totalorder %s173, %s174
      %p186 = scmp.eq.s32.totalorder %s26, 1
      %p187 = por %p185, %p186
      %p189 = scmp.ne.s32.totalorder %s174, %s188
      %p190 = scmp.eq.s32.totalorder %s26, 0
      %p191 = por %p189, %p190
      %s192 = ssub.s32 %s27, %s39
      %s193 = ssub.s32 %s28, %s35
      %s194 = sor.u32 %s192, %s193
      %p195 = scmp.eq.s32.totalorder %s194, 0
      %s197 = sadd.s32 %s196, 1
      %s198 = scalar_select %p195, %s196, %s197
      %p201 = pneg %p195
      %p202 = scmp.eq.s32.totalorder %s20, 1
      %p203 = por %p201, %p202
      %p204 = scmp.ne.s32.totalorder %s196, %s199
      %p205 = scmp.eq.s32.totalorder %s20, 0
      %p206 = por %p204, %p205
      %p207 = scmp.ne.s32.totalorder %s196, %s199
      %p208 = scmp.eq.s32.totalorder %s25, 1
      %p209 = por %p207, %p208
      %p210 = scmp.ne.s32.totalorder %s199, %s200
      %p211 = scmp.eq.s32.totalorder %s25, 0
      %p212 = por %p210, %p211
      %p213 = scmp.ne.s32.totalorder %s199, %s200
      %p214 = scmp.eq.s32.totalorder %s26, 1
      %p215 = por %p213, %p214
      %p217 = scmp.ne.s32.totalorder %s200, %s216
      %p218 = scmp.eq.s32.totalorder %s26, 0
      %p219 = por %p217, %p218
      %p220 = scmp.le.s32.totalorder 1, %s20
      %p221 = scmp.lt.s32.totalorder %s20, 3
      %p222 = pnand %p220, %p221
      %p223 = pneg %p222
      // Predicated region
      $region9: #{tpu_custom_call.1} parent=5 // pred_check
        _
      $region10: #{tpu_custom_call.1} parent=5 // pred_check_branch
        %225 = sbr.rel (%p222) target = $region12
      $region11: #{tpu_custom_call.1} parent=5 // pred_region
        %s226 = ssub.s32 %s20, 1
        // Predicated region
        $region13: #{tpu_custom_call.1} parent=11 // pred_check
          %p227 = pneg %p79
        $region14: #{tpu_custom_call.1} parent=11 // pred_check_branch
          %229 = sbr.rel (%p227) target = $region16
        $region15: #{tpu_custom_call.1} parent=11 // pred_region
          _
        $region16: #{tpu_custom_call.1} parent=11 // pred_fallthru
          _
        // Predicated region
        $region17: #{tpu_custom_call.1} parent=11 // pred_check
          %p230 = pneg %p100
        $region18: #{tpu_custom_call.1} parent=11 // pred_check_branch
          %232 = sbr.rel (%p230) target = $region20
        $region19: #{tpu_custom_call.1} parent=11 // pred_region
          %s234 = ssub.s32 2304, 2304
          %235 = vsyncadd [#allocation7], %s234
          %s236 = sshll.u32 [#allocation6], 4
          %s237 = int_to_ptr.vmem [resolvable:$true] %s236
          %242 = dma.hbm_to_vmem [thread:$0]  %s2, 2304, %s237, [#allocation7], 64, 64, 4
        $region20: #{tpu_custom_call.1} parent=11 // pred_fallthru
          _
        // Predicated region
        $region21: #{tpu_custom_call.1} parent=11 // pred_check
          %p243 = pneg %p121
        $region22: #{tpu_custom_call.1} parent=11 // pred_check_branch
          %245 = sbr.rel (%p243) target = $region24
        $region23: #{tpu_custom_call.1} parent=11 // pred_region
          _
        $region24: #{tpu_custom_call.1} parent=11 // pred_fallthru
          _
        // Predicated region
        $region25: #{tpu_custom_call.1} parent=11 // pred_check
          %p246 = pneg %p142
        $region26: #{tpu_custom_call.1} parent=11 // pred_check_branch
          %248 = sbr.rel (%p246) target = $region28
        $region27: #{tpu_custom_call.1} parent=11 // pred_region
          _
        $region28: #{tpu_custom_call.1} parent=11 // pred_fallthru
          _
        // Predicated region
        $region29: #{tpu_custom_call.1} parent=11 // pred_check
          %p249 = pneg %p163
        $region30: #{tpu_custom_call.1} parent=11 // pred_check_branch
          %251 = sbr.rel (%p249) target = $region32
        $region31: #{tpu_custom_call.1} parent=11 // pred_region
          _
        $region32: #{tpu_custom_call.1} parent=11 // pred_fallthru
          _
        // Predicated region
        $region33: #{tpu_custom_call.1} parent=11 // pred_check
          %p252 = pneg %p184
        $region34: #{tpu_custom_call.1} parent=11 // pred_check_branch
          %254 = sbr.rel (%p252) target = $region36
        $region35: #{tpu_custom_call.1} parent=11 // pred_region
          _
        $region36: #{tpu_custom_call.1} parent=11 // pred_fallthru
          _
      $region12: #{tpu_custom_call.1} parent=5 // pred_fallthru
        _
      %p255 = scmp.lt.s32.totalorder %s20, 2
      // Predicated region
      $region37: #{tpu_custom_call.1} parent=5 // pred_check
        %p256 = pneg %p255
      $region38: #{tpu_custom_call.1} parent=5 // pred_check_branch
        %258 = sbr.rel (%p256) target = $region40
      $region39: #{tpu_custom_call.1} parent=5 // pred_region
        // Predicated region
        $region41: #{tpu_custom_call.1} parent=39 // pred_check
          %p259 = pneg %p52
        $region42: #{tpu_custom_call.1} parent=39 // pred_check_branch
          %261 = sbr.rel (%p259) target = $region44
        $region43: #{tpu_custom_call.1} parent=39 // pred_region
          %s262 = sand.u32 %s42, 1
          %s263 = scalar_lea.sflag [#allocation4], %s262
          %s264 = sand.u32 %s42, 1
          %s265 = smul.addr %s264, 256
          %s266 = scalar_lea.vmem [#allocation3], %s265
          %s268 = ssub.s32 4096, 4096
          %269 = vsyncadd %s263, %s268
          %s270 = smul.addr %s27, 32
          %s271 = smul.addr %s270, 128
          %s272 = scalar_lea.hbm %s0, %s271
          %s273 = sshll.u32 %s266, 4
          %s274 = int_to_ptr.vmem [resolvable:$true] %s273
          %279 = dma.hbm_to_vmem [thread:$0]  %s272, 4096, %s274, %s263, 128, 128, 8
        $region44: #{tpu_custom_call.1} parent=39 // pred_fallthru
          _
      $region40: #{tpu_custom_call.1} parent=5 // pred_fallthru
        _
      %p280 = scmp.le.s32.totalorder 1, %s20
      %p281 = scmp.lt.s32.totalorder %s20, 3
      %p282 = pnand %p280, %p281
      %p283 = pneg %p282
      // Predicated region
      $region45: #{tpu_custom_call.1} parent=5 // pred_check
        _
      $region46: #{tpu_custom_call.1} parent=5 // pred_check_branch
        %285 = sbr.rel (%p282) target = $region48
      $region47: #{tpu_custom_call.1} parent=5 // pred_region
        %s286 = ssub.s32 %s20, 1
        %s287 = sand.u32 %s45, 1
        %s288 = scalar_lea.sflag [#allocation4], %s287
        %s289 = sand.u32 %s45, 1
        %s290 = smul.addr %s289, 256
        %s291 = scalar_lea.vmem [#allocation3], %s290
        // Predicated region
        $region49: #{tpu_custom_call.1} parent=47 // pred_check
          %p292 = pneg %p58
        $region50: #{tpu_custom_call.1} parent=47 // pred_check_branch
          %294 = sbr.rel (%p292) target = $region52
        $region51: #{tpu_custom_call.1} parent=47 // pred_region
          %295 = dma.done %s288, 4096
        $region52: #{tpu_custom_call.1} parent=47 // pred_fallthru
          _
        // Predicated region
        $region53: #{tpu_custom_call.1} parent=47 // pred_check
          %p296 = pneg %p100
        $region54: #{tpu_custom_call.1} parent=47 // pred_check_branch
          %298 = sbr.rel (%p296) target = $region56
        $region55: #{tpu_custom_call.1} parent=47 // pred_region
          %299 = dma.done [#allocation7], 2304
        $region56: #{tpu_custom_call.1} parent=47 // pred_fallthru
          _
        %s300 = sand.u32 %s45, 1
        %s301 = scalar_lea.sflag [#allocation4], %s300
        %s302 = sand.u32 %s45, 1
        %s303 = smul.addr %s302, 256
        %s304 = scalar_lea.vmem [#allocation3], %s303
        %p305 = pneg %p58
        %p306 = pneg %p55
        %p307 = pneg %p79
        %p308 = pneg %p76
        %p309 = pneg %p100
        %p310 = pneg %p97
        %p311 = pneg %p121
        %p312 = pneg %p118
        %p313 = pneg %p142
        %p314 = pneg %p139
        %p315 = pneg %p163
        %p316 = pneg %p160
        %p317 = pneg %p184
        %p318 = pneg %p181
        %p319 = pneg %p212
        %p320 = pneg %p209
        %s321 = sand.u32 %s199, 1
        %s322 = scalar_lea.sflag [#allocation5], %s321
        %s323 = sand.u32 %s199, 1
        %s324 = smul.addr %s323, 128
        %s325 = scalar_lea.vmem [#allocation8], %s324
        %s326 = smul.u32 16, %s30
        %s328 = smul.u32 %s30, 16
        %v329 = vld [vmem:[%s1] sm:$0xf]
        %v330 = vld [vmem:[%s1 + $0x4] sm:$0xf]
        %v331 = vld [vmem:[%s1 + $0x8] sm:$0xf]
        %v332 = vld [vmem:[%s1 + $0xc] sm:$0xf]
        %v333 = vld [vmem:[%s1 + $0x10] sm:$0xf]
        %v334 = vld [vmem:[%s1 + $0x14] sm:$0xf]
        %v335 = vld [vmem:[%s1 + $0x18] sm:$0xf]
        %v336 = vld [vmem:[%s1 + $0x1c] sm:$0xf]
        %v337 = vld [vmem:[%s1 + $0x20] sm:$0xf]
        %v338 = vld [vmem:[%s1 + $0x24] sm:$0xf]
        %v339 = vld [vmem:[%s1 + $0x28] sm:$0xf]
        %v340 = vld [vmem:[%s1 + $0x2c] sm:$0xf]
        %v341 = vld [vmem:[%s1 + $0x30] sm:$0xf]
        %v342 = vld [vmem:[%s1 + $0x34] sm:$0xf]
        %v343 = vld [vmem:[%s1 + $0x38] sm:$0xf]
        %v344 = vld [vmem:[%s1 + $0x3c] sm:$0xf]
        %v345 = vld [vmem:[%s4] sm:$0x1]
        %s346 = smul.u32 %s328, 16
        %s347 = scalar_lea.vmem %s291, %s346 [#allocation3]
        %v348 = vld [vmem:[%s347] sm:$0xff]
        %v349 = vld [vmem:[%s347 + $0x8] sm:$0xff]
        %v350 = vld [vmem:[%s347 + $0x10] sm:$0xff]
        %v351 = vld [vmem:[%s347 + $0x18] sm:$0xff]
        %v352 = vld [vmem:[%s347 + $0x20] sm:$0xff]
        %v353 = vld [vmem:[%s347 + $0x28] sm:$0xff]
        %v354 = vld [vmem:[%s347 + $0x30] sm:$0xff]
        %v355 = vld [vmem:[%s347 + $0x38] sm:$0xff]
        %v356 = vld [vmem:[%s347 + $0x40] sm:$0xff]
        %v357 = vld [vmem:[%s347 + $0x48] sm:$0xff]
        %v358 = vld [vmem:[%s347 + $0x50] sm:$0xff]
        %v359 = vld [vmem:[%s347 + $0x58] sm:$0xff]
        %v360 = vld [vmem:[%s347 + $0x60] sm:$0xff]
        %v361 = vld [vmem:[%s347 + $0x68] sm:$0xff]
        %v362 = vld [vmem:[%s347 + $0x70] sm:$0xff]
        %v363 = vld [vmem:[%s347 + $0x78] sm:$0xff]
        %v364 = vld [vmem:[%s347 + $0x80] sm:$0xff]
        %v365 = vld [vmem:[%s347 + $0x88] sm:$0xff]
        %v366 = vld [vmem:[%s347 + $0x90] sm:$0xff]
        %v367 = vld [vmem:[%s347 + $0x98] sm:$0xff]
        %v368 = vld [vmem:[%s347 + $0xa0] sm:$0xff]
        %v369 = vld [vmem:[%s347 + $0xa8] sm:$0xff]
        %v370 = vld [vmem:[%s347 + $0xb0] sm:$0xff]
        %v371 = vld [vmem:[%s347 + $0xb8] sm:$0xff]
        %v372 = vld [vmem:[%s347 + $0xc0] sm:$0xff]
        %v373 = vld [vmem:[%s347 + $0xc8] sm:$0xff]
        %v374 = vld [vmem:[%s347 + $0xd0] sm:$0xff]
        %v375 = vld [vmem:[%s347 + $0xd8] sm:$0xff]
        %v376 = vld [vmem:[%s347 + $0xe0] sm:$0xff]
        %v377 = vld [vmem:[%s347 + $0xe8] sm:$0xff]
        %v378 = vld [vmem:[%s347 + $0xf0] sm:$0xff]
        %v379 = vld [vmem:[%s347 + $0xf8] sm:$0xff]
        %v380 = vpack.c.bf16 %v349, %v348
        %v381 = vpack.c.bf16 %v351, %v350
        %v382 = vpack.c.bf16 %v353, %v352
        %v383 = vpack.c.bf16 %v355, %v354
        %v384 = vpack.c.bf16 %v357, %v356
        %v385 = vpack.c.bf16 %v359, %v358
        %v386 = vpack.c.bf16 %v361, %v360
        %v387 = vpack.c.bf16 %v363, %v362
        %v388 = vpack.c.bf16 %v365, %v364
        %v389 = vpack.c.bf16 %v367, %v366
        %v390 = vpack.c.bf16 %v369, %v368
        %v391 = vpack.c.bf16 %v371, %v370
        %v392 = vpack.c.bf16 %v373, %v372
        %v393 = vpack.c.bf16 %v375, %v374
        %v394 = vpack.c.bf16 %v377, %v376
        %v395 = vpack.c.bf16 %v379, %v378
        %v397 = vlaneseq
        %v398 = vshrl.u32 %v397, 7
        %v399 = vsub.s32 0, %v398
        %v400 = vrot.slane %v345, %v399
        %v418 = vunpack.c.l.b16 %v329
        %v419 = vunpack.c.l.b16 %v330
        %v420 = vunpack.c.l.b16 %v331
        %v421 = vunpack.c.l.b16 %v332
        %v422 = vunpack.c.l.b16 %v333
        %v423 = vunpack.c.l.b16 %v334
        %v424 = vunpack.c.l.b16 %v335
        %v425 = vunpack.c.l.b16 %v336
        %v426 = vunpack.c.l.b16 %v337
        %v427 = vunpack.c.l.b16 %v338
        %v428 = vunpack.c.l.b16 %v339
        %v429 = vunpack.c.l.b16 %v340
        %v430 = vunpack.c.l.b16 %v341
        %v431 = vunpack.c.l.b16 %v342
        %v432 = vunpack.c.l.b16 %v343
        %v433 = vunpack.c.l.b16 %v344
        %v434 = vpack.c.b16 %v419, %v418
        %v435 = vpack.c.b16 %v421, %v420
        %v436 = vpack.c.b16 %v423, %v422
        %v437 = vpack.c.b16 %v425, %v424
        %v438 = vpack.c.b16 %v427, %v426
        %v439 = vpack.c.b16 %v429, %v428
        %v440 = vpack.c.b16 %v431, %v430
        %v441 = vpack.c.b16 %v433, %v432
        %450 = vmatprep.subr.bf16.mxu0 0
        %451 = vmatpush1.bf16.msra.mxu0 %v434
        %452 = vmatprep.subr.bf16.mxu0 0
        %453 = vmatpush1.bf16.msra.mxu0 %v435
        %454 = vmatprep.subr.bf16.mxu0 0
        %455 = vmatpush1.bf16.msra.mxu0 %v436
        %456 = vmatprep.subr.bf16.mxu0 0
        %457 = vmatpush1.bf16.msra.mxu0 %v437
        %458 = vmatprep.subr.bf16.mxu0 0
        %459 = vmatpush1.bf16.msra.mxu0 %v438
        %460 = vmatprep.subr.bf16.mxu0 0
        %461 = vmatpush1.bf16.msra.mxu0 %v439
        %462 = vmatprep.subr.bf16.mxu0 0
        %463 = vmatpush1.bf16.msra.mxu0 %v440
        %464 = vmatprep.subr.bf16.mxu0 0
        %465 = vmatpush1.bf16.msra.mxu0 %v441
        %466 = vmatprep.subr.bf16.mxu0 0
        %467 = vmatpush1.bf16.msra.mxu0 0
        %468 = vmatprep.subr.bf16.mxu0 0
        %469 = vmatpush1.bf16.msra.mxu0 0
        %470 = vmatprep.subr.bf16.mxu0 0
        %471 = vmatpush1.bf16.msra.mxu0 0
        %472 = vmatprep.subr.bf16.mxu0 0
        %473 = vmatpush1.bf16.msra.mxu0 0
        %474 = vmatprep.subr.bf16.mxu0 0
        %475 = vmatpush1.bf16.msra.mxu0 0
        %476 = vmatprep.subr.bf16.mxu0 0
        %477 = vmatpush1.bf16.msra.mxu0 0
        %478 = vmatprep.subr.bf16.mxu0 0
        %479 = vmatpush1.bf16.msra.mxu0 0
        %480 = vmatprep.subr.bf16.mxu0 0
        %481 = vmatpush1.bf16.msra.mxu0 0
        %482 = vmatprep.mubr.bf16.mxu0 0
        %483 = vmatmul.mubr.bf16.gmra.mrb[0].mxu0 %v380
        %v484 = vpop.f32.mrb[0].mxu0
        %v485 = vadd.f32 %v400, %v484
        %v486 = vpop.f32.mrb[0].mxu0
        %v487 = vpop.f32.mrb[0].mxu0
        %v488 = vadd.f32 %v400, %v487
        %v489 = vpop.f32.mrb[0].mxu0
        %490 = vmatprep.mubr.bf16.mxu0 0
        %491 = vmatmul.mubr.bf16.gmra.mrb[0].mxu0 %v381
        %v492 = vpop.f32.mrb[0].mxu0
        %v493 = vadd.f32 %v400, %v492
        %v494 = vpop.f32.mrb[0].mxu0
        %v495 = vpop.f32.mrb[0].mxu0
        %v496 = vadd.f32 %v400, %v495
        %v497 = vpop.f32.mrb[0].mxu0
        %498 = vmatprep.mubr.bf16.mxu0 0
        %499 = vmatmul.mubr.bf16.gmra.mrb[0].mxu0 %v382
        %v500 = vpop.f32.mrb[0].mxu0
        %v501 = vadd.f32 %v400, %v500
        %v502 = vpop.f32.mrb[0].mxu0
        %v503 = vpop.f32.mrb[0].mxu0
        %v504 = vadd.f32 %v400, %v503
        %v505 = vpop.f32.mrb[0].mxu0
        %506 = vmatprep.mubr.bf16.mxu0 0
        %507 = vmatmul.mubr.bf16.gmra.mrb[0].mxu0 %v383
        %v508 = vpop.f32.mrb[0].mxu0
        %v509 = vadd.f32 %v400, %v508
        %v510 = vpop.f32.mrb[0].mxu0
        %v511 = vpop.f32.mrb[0].mxu0
        %v512 = vadd.f32 %v400, %v511
        %v513 = vpop.f32.mrb[0].mxu0
        %514 = vmatprep.mubr.bf16.mxu0 0
        %515 = vmatmul.mubr.bf16.gmra.mrb[0].mxu0 %v384
        %v516 = vpop.f32.mrb[0].mxu0
        %v517 = vadd.f32 %v400, %v516
        %v518 = vpop.f32.mrb[0].mxu0
        %v519 = vpop.f32.mrb[0].mxu0
        %v520 = vadd.f32 %v400, %v519
        %v521 = vpop.f32.mrb[0].mxu0
        %522 = vmatprep.mubr.bf16.mxu0 0
        %523 = vmatmul.mubr.bf16.gmra.mrb[0].mxu0 %v385
        %v524 = vpop.f32.mrb[0].mxu0
        %v525 = vadd.f32 %v400, %v524
        %v526 = vpop.f32.mrb[0].mxu0
        %v527 = vpop.f32.mrb[0].mxu0
        %v528 = vadd.f32 %v400, %v527
        %v529 = vpop.f32.mrb[0].mxu0
        %530 = vmatprep.mubr.bf16.mxu0 0
        %531 = vmatmul.mubr.bf16.gmra.mrb[0].mxu0 %v386
        %v532 = vpop.f32.mrb[0].mxu0
        %v533 = vadd.f32 %v400, %v532
        %v534 = vpop.f32.mrb[0].mxu0
        %v535 = vpop.f32.mrb[0].mxu0
        %v536 = vadd.f32 %v400, %v535
        %v537 = vpop.f32.mrb[0].mxu0
        %538 = vmatprep.mubr.bf16.mxu0 0
        %539 = vmatmul.mubr.bf16.gmra.mrb[0].mxu0 %v387
        %v540 = vpop.f32.mrb[0].mxu0
        %v541 = vadd.f32 %v400, %v540
        %v542 = vpop.f32.mrb[0].mxu0
        %v543 = vpop.f32.mrb[0].mxu0
        %v544 = vadd.f32 %v400, %v543
        %v545 = vpop.f32.mrb[0].mxu0
        %546 = vmatprep.mubr.bf16.mxu0 0
        %547 = vmatmul.mubr.bf16.gmra.mrb[0].mxu0 %v388
        %v548 = vpop.f32.mrb[0].mxu0
        %v549 = vadd.f32 %v400, %v548
        %v550 = vpop.f32.mrb[0].mxu0
        %v551 = vpop.f32.mrb[0].mxu0
        %v552 = vadd.f32 %v400, %v551
        %v553 = vpop.f32.mrb[0].mxu0
        %554 = vmatprep.mubr.bf16.mxu0 0
        %555 = vmatmul.mubr.bf16.gmra.mrb[0].mxu0 %v389
        %v556 = vpop.f32.mrb[0].mxu0
        %v557 = vadd.f32 %v400, %v556
        %v558 = vpop.f32.mrb[0].mxu0
        %v559 = vpop.f32.mrb[0].mxu0
        %v560 = vadd.f32 %v400, %v559
        %v561 = vpop.f32.mrb[0].mxu0
        %562 = vmatprep.mubr.bf16.mxu0 0
        %563 = vmatmul.mubr.bf16.gmra.mrb[0].mxu0 %v390
        %v564 = vpop.f32.mrb[0].mxu0
        %v565 = vadd.f32 %v400, %v564
        %v566 = vpop.f32.mrb[0].mxu0
        %v567 = vpop.f32.mrb[0].mxu0
        %v568 = vadd.f32 %v400, %v567
        %v569 = vpop.f32.mrb[0].mxu0
        %570 = vmatprep.mubr.bf16.mxu0 0
        %571 = vmatmul.mubr.bf16.gmra.mrb[0].mxu0 %v391
        %v572 = vpop.f32.mrb[0].mxu0
        %v573 = vadd.f32 %v400, %v572
        %v574 = vpop.f32.mrb[0].mxu0
        %v575 = vpop.f32.mrb[0].mxu0
        %v576 = vadd.f32 %v400, %v575
        %v577 = vpop.f32.mrb[0].mxu0
        %578 = vmatprep.mubr.bf16.mxu0 0
        %579 = vmatmul.mubr.bf16.gmra.mrb[0].mxu0 %v392
        %v580 = vpop.f32.mrb[0].mxu0
        %v581 = vadd.f32 %v400, %v580
        %v582 = vpop.f32.mrb[0].mxu0
        %v583 = vpop.f32.mrb[0].mxu0
        %v584 = vadd.f32 %v400, %v583
        %v585 = vpop.f32.mrb[0].mxu0
        %586 = vmatprep.mubr.bf16.mxu0 0
        %587 = vmatmul.mubr.bf16.gmra.mrb[0].mxu0 %v393
        %v588 = vpop.f32.mrb[0].mxu0
        %v589 = vadd.f32 %v400, %v588
        %v590 = vpop.f32.mrb[0].mxu0
        %v591 = vpop.f32.mrb[0].mxu0
        %v592 = vadd.f32 %v400, %v591
        %v593 = vpop.f32.mrb[0].mxu0
        %594 = vmatprep.mubr.bf16.mxu0 0
        %595 = vmatmul.mubr.bf16.gmra.mrb[0].mxu0 %v394
        %v596 = vpop.f32.mrb[0].mxu0
        %v597 = vadd.f32 %v400, %v596
        %v598 = vpop.f32.mrb[0].mxu0
        %v599 = vpop.f32.mrb[0].mxu0
        %v600 = vadd.f32 %v400, %v599
        %v601 = vpop.f32.mrb[0].mxu0
        %602 = vmatprep.mubr.bf16.mxu0 0
        %603 = vmatmul.mubr.bf16.gmra.mrb[0].mxu0 %v395
        %v604 = vpop.f32.mrb[0].mxu0
        %v605 = vadd.f32 %v400, %v604
        %v606 = vpop.f32.mrb[0].mxu0
        %v607 = vpop.f32.mrb[0].mxu0
        %v608 = vadd.f32 %v400, %v607
        %v609 = vpop.f32.mrb[0].mxu0
        %610 = vdwg.mxu0
        %v611 = vmax.f32 %v485, 0.0
        %v612 = vmax.f32 %v488, 0.0
        %v613 = vmax.f32 %v493, 0.0
        %v614 = vmax.f32 %v496, 0.0
        %v615 = vmax.f32 %v501, 0.0
        %v616 = vmax.f32 %v504, 0.0
        %v617 = vmax.f32 %v509, 0.0
        %v618 = vmax.f32 %v512, 0.0
        %v619 = vmax.f32 %v517, 0.0
        %v620 = vmax.f32 %v520, 0.0
        %v621 = vmax.f32 %v525, 0.0
        %v622 = vmax.f32 %v528, 0.0
        %v623 = vmax.f32 %v533, 0.0
        %v624 = vmax.f32 %v536, 0.0
        %v625 = vmax.f32 %v541, 0.0
        %v626 = vmax.f32 %v544, 0.0
        %v627 = vmax.f32 %v549, 0.0
        %v628 = vmax.f32 %v552, 0.0
        %v629 = vmax.f32 %v557, 0.0
        %v630 = vmax.f32 %v560, 0.0
        %v631 = vmax.f32 %v565, 0.0
        %v632 = vmax.f32 %v568, 0.0
        %v633 = vmax.f32 %v573, 0.0
        %v634 = vmax.f32 %v576, 0.0
        %v635 = vmax.f32 %v581, 0.0
        %v636 = vmax.f32 %v584, 0.0
        %v637 = vmax.f32 %v589, 0.0
        %v638 = vmax.f32 %v592, 0.0
        %v639 = vmax.f32 %v597, 0.0
        %v640 = vmax.f32 %v600, 0.0
        %v641 = vmax.f32 %v605, 0.0
        %v642 = vmax.f32 %v608, 0.0
        %v643 = vpack.c.bf16 %v612, %v611
        %v644 = vpack.c.bf16 %v614, %v613
        %v645 = vpack.c.bf16 %v616, %v615
        %v646 = vpack.c.bf16 %v618, %v617
        %v647 = vpack.c.bf16 %v620, %v619
        %v648 = vpack.c.bf16 %v622, %v621
        %v649 = vpack.c.bf16 %v624, %v623
        %v650 = vpack.c.bf16 %v626, %v625
        %v651 = vpack.c.bf16 %v628, %v627
        %v652 = vpack.c.bf16 %v630, %v629
        %v653 = vpack.c.bf16 %v632, %v631
        %v654 = vpack.c.bf16 %v634, %v633
        %v655 = vpack.c.bf16 %v636, %v635
        %v656 = vpack.c.bf16 %v638, %v637
        %v657 = vpack.c.bf16 %v640, %v639
        %v658 = vpack.c.bf16 %v642, %v641
        %s659 = scalar_lea.vmem [#allocation2], 16
        %vm660 = vcmask 261120
        %661 = vst.msk [vmem:[%s659] sm:$0xff] %vm660, %v643
        %662 = vst.msk [vmem:[%s659 + $0x10] sm:$0xff] %vm660, %v644
        %663 = vst.msk [vmem:[%s659 + $0x20] sm:$0xff] %vm660, %v645
        %664 = vst.msk [vmem:[%s659 + $0x30] sm:$0xff] %vm660, %v646
        %665 = vst.msk [vmem:[%s659 + $0x40] sm:$0xff] %vm660, %v647
        %666 = vst.msk [vmem:[%s659 + $0x50] sm:$0xff] %vm660, %v648
        %667 = vst.msk [vmem:[%s659 + $0x60] sm:$0xff] %vm660, %v649
        %668 = vst.msk [vmem:[%s659 + $0x70] sm:$0xff] %vm660, %v650
        %669 = vst.msk [vmem:[%s659 + $0x80] sm:$0xff] %vm660, %v651
        %670 = vst.msk [vmem:[%s659 + $0x90] sm:$0xff] %vm660, %v652
        %671 = vst.msk [vmem:[%s659 + $0xa0] sm:$0xff] %vm660, %v653
        %672 = vst.msk [vmem:[%s659 + $0xb0] sm:$0xff] %vm660, %v654
        %673 = vst.msk [vmem:[%s659 + $0xc0] sm:$0xff] %vm660, %v655
        %674 = vst.msk [vmem:[%s659 + $0xd0] sm:$0xff] %vm660, %v656
        %675 = vst.msk [vmem:[%s659 + $0xe0] sm:$0xff] %vm660, %v657
        %676 = vst.msk [vmem:[%s659 + $0xf0] sm:$0xff] %vm660, %v658
        %677 = vst.msk [vmem:[#allocation2 + $0x8] sm:$0xff] %vm660, 0
        %678 = vst.msk [vmem:[#allocation2 + $0x18] sm:$0xff] %vm660, 0
        %679 = vst.msk [vmem:[#allocation2 + $0x28] sm:$0xff] %vm660, 0
        %680 = vst.msk [vmem:[#allocation2 + $0x38] sm:$0xff] %vm660, 0
        %681 = vst.msk [vmem:[#allocation2 + $0x48] sm:$0xff] %vm660, 0
        %682 = vst.msk [vmem:[#allocation2 + $0x58] sm:$0xff] %vm660, 0
        %683 = vst.msk [vmem:[#allocation2 + $0x68] sm:$0xff] %vm660, 0
        %684 = vst.msk [vmem:[#allocation2 + $0x78] sm:$0xff] %vm660, 0
        %685 = vst.msk [vmem:[#allocation2 + $0x88] sm:$0xff] %vm660, 0
        %686 = vst.msk [vmem:[#allocation2 + $0x98] sm:$0xff] %vm660, 0
        %687 = vst.msk [vmem:[#allocation2 + $0xa8] sm:$0xff] %vm660, 0
        %688 = vst.msk [vmem:[#allocation2 + $0xb8] sm:$0xff] %vm660, 0
        %689 = vst.msk [vmem:[#allocation2 + $0xc8] sm:$0xff] %vm660, 0
        %690 = vst.msk [vmem:[#allocation2 + $0xd8] sm:$0xff] %vm660, 0
        %691 = vst.msk [vmem:[#allocation2 + $0xe8] sm:$0xff] %vm660, 0
        %692 = vst.msk [vmem:[#allocation2 + $0xf8] sm:$0xff] %vm660, 0
        %693 = vst.msk [vmem:[#allocation2 + $0x108] sm:$0xff] %vm660, 0
        %694 = vst.msk [vmem:[#allocation2 + $0x118] sm:$0xff] %vm660, 0
        %p695 = scmp.gt.s32.totalorder %s30, 0
        // Predicated region
        $region57: #{tpu_custom_call.1} parent=47 // pred_check
          %p696 = pneg %p695
        $region58: #{tpu_custom_call.1} parent=47 // pred_check_branch
          %698 = sbr.rel (%p696) target = $region60
        $region59: #{tpu_custom_call.1} parent=47 // pred_region
          %s699 = ssub.s32 %s328, 1
          %s700 = smul.u32 %s699, 16
          %s701 = scalar_lea.vmem %s291, %s700 [#allocation3]
          %v702 = vld [vmem:[%s701] sm:$0xff]
          %v703 = vld [vmem:[%s701 + $0x8] sm:$0xff]
          %v704 = vpack.c.bf16 %v703, %v702
          %705 = vmatprep.subr.bf16.mxu0 0
          %706 = vmatpush1.bf16.msra.mxu0 %v434
          %707 = vmatprep.subr.bf16.mxu0 0
          %708 = vmatpush1.bf16.msra.mxu0 %v435
          %709 = vmatprep.subr.bf16.mxu0 0
          %710 = vmatpush1.bf16.msra.mxu0 %v436
          %711 = vmatprep.subr.bf16.mxu0 0
          %712 = vmatpush1.bf16.msra.mxu0 %v437
          %713 = vmatprep.subr.bf16.mxu0 0
          %714 = vmatpush1.bf16.msra.mxu0 %v438
          %715 = vmatprep.subr.bf16.mxu0 0
          %716 = vmatpush1.bf16.msra.mxu0 %v439
          %717 = vmatprep.subr.bf16.mxu0 0
          %718 = vmatpush1.bf16.msra.mxu0 %v440
          %719 = vmatprep.subr.bf16.mxu0 0
          %720 = vmatpush1.bf16.msra.mxu0 %v441
          %721 = vmatprep.subr.bf16.mxu0 0
          %722 = vmatpush1.bf16.msra.mxu0 0
          %723 = vmatprep.subr.bf16.mxu0 0
          %724 = vmatpush1.bf16.msra.mxu0 0
          %725 = vmatprep.subr.bf16.mxu0 0
          %726 = vmatpush1.bf16.msra.mxu0 0
          %727 = vmatprep.subr.bf16.mxu0 0
          %728 = vmatpush1.bf16.msra.mxu0 0
          %729 = vmatprep.subr.bf16.mxu0 0
          %730 = vmatpush1.bf16.msra.mxu0 0
          %731 = vmatprep.subr.bf16.mxu0 0
          %732 = vmatpush1.bf16.msra.mxu0 0
          %733 = vmatprep.subr.bf16.mxu0 0
          %734 = vmatpush1.bf16.msra.mxu0 0
          %735 = vmatprep.subr.bf16.mxu0 0
          %736 = vmatpush1.bf16.msra.mxu0 0
          %737 = vmatprep.mubr.bf16.mxu0 0
          %738 = vmatmul.mubr.bf16.gmra.mrb[0].mxu0 %v704
          %v739 = vpop.f32.mrb[0].mxu0
          %v740 = vadd.f32 %v400, %v739
          %v741 = vpop.f32.mrb[0].mxu0
          %v742 = vpop.f32.mrb[0].mxu0
          %v743 = vadd.f32 %v400, %v742
          %v744 = vpop.f32.mrb[0].mxu0
          %745 = vdwg.mxu0
          %v746 = vmax.f32 %v740, 0.0
          %v747 = vmax.f32 %v743, 0.0
          %v748 = vpack.c.bf16 %v747, %v746
          %749 = vst.msk [vmem:[#allocation2] sm:$0xff] %vm660, %v748
        $region60: #{tpu_custom_call.1} parent=47 // pred_fallthru
          _
        %p750 = scmp.eq.s32.totalorder %s30, 0
        // Predicated region
        $region61: #{tpu_custom_call.1} parent=47 // pred_check
          %p751 = pneg %p750
        $region62: #{tpu_custom_call.1} parent=47 // pred_check_branch
          %753 = sbr.rel (%p751) target = $region64
        $region63: #{tpu_custom_call.1} parent=47 // pred_region
          %754 = vst.msk [vmem:[#allocation2] sm:$0xff] %vm660, 0
        $region64: #{tpu_custom_call.1} parent=47 // pred_fallthru
          _
        %p755 = scmp.lt.s32.totalorder %s30, 0
        // Predicated region
        $region65: #{tpu_custom_call.1} parent=47 // pred_check
          %p756 = pneg %p755
        $region66: #{tpu_custom_call.1} parent=47 // pred_check_branch
          %758 = sbr.rel (%p756) target = $region68
        $region67: #{tpu_custom_call.1} parent=47 // pred_region
          %s759 = sadd.s32 %s328, 16
          %s760 = smul.u32 %s759, 16
          %s761 = scalar_lea.vmem %s291, %s760 [#allocation3]
          %v762 = vld [vmem:[%s761] sm:$0xff]
          %v763 = vld [vmem:[%s761 + $0x8] sm:$0xff]
          %v764 = vpack.c.bf16 %v763, %v762
          %765 = vmatprep.subr.bf16.mxu0 0
          %766 = vmatpush1.bf16.msra.mxu0 %v434
          %767 = vmatprep.subr.bf16.mxu0 0
          %768 = vmatpush1.bf16.msra.mxu0 %v435
          %769 = vmatprep.subr.bf16.mxu0 0
          %770 = vmatpush1.bf16.msra.mxu0 %v436
          %771 = vmatprep.subr.bf16.mxu0 0
          %772 = vmatpush1.bf16.msra.mxu0 %v437
          %773 = vmatprep.subr.bf16.mxu0 0
          %774 = vmatpush1.bf16.msra.mxu0 %v438
          %775 = vmatprep.subr.bf16.mxu0 0
          %776 = vmatpush1.bf16.msra.mxu0 %v439
          %777 = vmatprep.subr.bf16.mxu0 0
          %778 = vmatpush1.bf16.msra.mxu0 %v440
          %779 = vmatprep.subr.bf16.mxu0 0
          %780 = vmatpush1.bf16.msra.mxu0 %v441
          %781 = vmatprep.subr.bf16.mxu0 0
          %782 = vmatpush1.bf16.msra.mxu0 0
          %783 = vmatprep.subr.bf16.mxu0 0
          %784 = vmatpush1.bf16.msra.mxu0 0
          %785 = vmatprep.subr.bf16.mxu0 0
          %786 = vmatpush1.bf16.msra.mxu0 0
          %787 = vmatprep.subr.bf16.mxu0 0
          %788 = vmatpush1.bf16.msra.mxu0 0
          %789 = vmatprep.subr.bf16.mxu0 0
          %790 = vmatpush1.bf16.msra.mxu0 0
          %791 = vmatprep.subr.bf16.mxu0 0
          %792 = vmatpush1.bf16.msra.mxu0 0
          %793 = vmatprep.subr.bf16.mxu0 0
          %794 = vmatpush1.bf16.msra.mxu0 0
          %795 = vmatprep.subr.bf16.mxu0 0
          %796 = vmatpush1.bf16.msra.mxu0 0
          %797 = vmatprep.mubr.bf16.mxu0 0
          %798 = vmatmul.mubr.bf16.gmra.mrb[0].mxu0 %v764
          %v799 = vpop.f32.mrb[0].mxu0
          %v800 = vadd.f32 %v400, %v799
          %v801 = vpop.f32.mrb[0].mxu0
          %v802 = vpop.f32.mrb[0].mxu0
          %v803 = vadd.f32 %v400, %v802
          %v804 = vpop.f32.mrb[0].mxu0
          %805 = vdwg.mxu0
          %v806 = vmax.f32 %v800, 0.0
          %v807 = vmax.f32 %v803, 0.0
          %v808 = vpack.c.bf16 %v807, %v806
          %s809 = scalar_lea.vmem [#allocation2], 272
          %810 = vst.msk [vmem:[%s809] sm:$0xff] %vm660, %v808
        $region68: #{tpu_custom_call.1} parent=47 // pred_fallthru
          _
        // Predicated region
        $region69: #{tpu_custom_call.1} parent=47 // pred_check
          %p811 = pneg %p750
        $region70: #{tpu_custom_call.1} parent=47 // pred_check_branch
          %813 = sbr.rel (%p811) target = $region72
        $region71: #{tpu_custom_call.1} parent=47 // pred_region
          %s814 = scalar_lea.vmem [#allocation2], 272
          %815 = vst.msk [vmem:[%s814] sm:$0xff] %vm660, 0
        $region72: #{tpu_custom_call.1} parent=47 // pred_fallthru
          _
        %v816 = vld [vmem:[#allocation2] sm:$0xff]
        %v817 = vld [vmem:[#allocation2 + $0x8] sm:$0xff]
        %v818 = vld [vmem:[#allocation2 + $0x10] sm:$0xff]
        %v819 = vld [vmem:[#allocation2 + $0x18] sm:$0xff]
        %v820 = vld [vmem:[#allocation2 + $0x20] sm:$0xff]
        %v821 = vld [vmem:[#allocation2 + $0x28] sm:$0xff]
        %v822 = vld [vmem:[#allocation2 + $0x30] sm:$0xff]
        %v823 = vld [vmem:[#allocation2 + $0x38] sm:$0xff]
        %v824 = vld [vmem:[#allocation2 + $0x40] sm:$0xff]
        %v825 = vld [vmem:[#allocation2 + $0x48] sm:$0xff]
        %v826 = vld [vmem:[#allocation2 + $0x50] sm:$0xff]
        %v827 = vld [vmem:[#allocation2 + $0x58] sm:$0xff]
        %v828 = vld [vmem:[#allocation2 + $0x60] sm:$0xff]
        %v829 = vld [vmem:[#allocation2 + $0x68] sm:$0xff]
        %v830 = vld [vmem:[#allocation2 + $0x70] sm:$0xff]
        %v831 = vld [vmem:[#allocation2 + $0x78] sm:$0xff]
        %v832 = vld [vmem:[#allocation2 + $0x80] sm:$0xff]
        %v833 = vld [vmem:[#allocation2 + $0x88] sm:$0xff]
        %v834 = vld [vmem:[#allocation2 + $0x90] sm:$0xff]
        %v835 = vld [vmem:[#allocation2 + $0x98] sm:$0xff]
        %v836 = vld [vmem:[#allocation2 + $0xa0] sm:$0xff]
        %v837 = vld [vmem:[#allocation2 + $0xa8] sm:$0xff]
        %v838 = vld [vmem:[#allocation2 + $0xb0] sm:$0xff]
        %v839 = vld [vmem:[#allocation2 + $0xb8] sm:$0xff]
        %v840 = vld [vmem:[#allocation2 + $0xc0] sm:$0xff]
        %v841 = vld [vmem:[#allocation2 + $0xc8] sm:$0xff]
        %v842 = vld [vmem:[#allocation2 + $0xd0] sm:$0xff]
        %v843 = vld [vmem:[#allocation2 + $0xd8] sm:$0xff]
        %v844 = vld [vmem:[#allocation2 + $0xe0] sm:$0xff]
        %v845 = vld [vmem:[#allocation2 + $0xe8] sm:$0xff]
        %v846 = vld [vmem:[#allocation2 + $0xf0] sm:$0xff]
        %v847 = vld [vmem:[#allocation2 + $0xf8] sm:$0xff]
        %v848 = vld [vmem:[#allocation6] sm:$0xf]
        %v849 = vld [vmem:[#allocation6 + $0x4] sm:$0xf]
        %v850 = vld [vmem:[#allocation6 + $0x8] sm:$0xf]
        %v851 = vld [vmem:[#allocation6 + $0xc] sm:$0xf]
        %s852 = scalar_lea.vmem [#allocation6], 16
        %v853 = vld [vmem:[%s852] sm:$0xf]
        %v854 = vld [vmem:[%s852 + $0x4] sm:$0xf]
        %v855 = vld [vmem:[%s852 + $0x8] sm:$0xf]
        %v856 = vld [vmem:[%s852 + $0xc] sm:$0xf]
        %s857 = scalar_lea.vmem [#allocation6], 32
        %v858 = vld [vmem:[%s857] sm:$0xf]
        %v859 = vld [vmem:[%s857 + $0x4] sm:$0xf]
        %v860 = vld [vmem:[%s857 + $0x8] sm:$0xf]
        %v861 = vld [vmem:[%s857 + $0xc] sm:$0xf]
        %v862 = vld [vmem:[%s659] sm:$0xff]
        %v863 = vld [vmem:[%s659 + $0x8] sm:$0xff]
        %v864 = vld [vmem:[%s659 + $0x10] sm:$0xff]
        %v865 = vld [vmem:[%s659 + $0x18] sm:$0xff]
        %v866 = vld [vmem:[%s659 + $0x20] sm:$0xff]
        %v867 = vld [vmem:[%s659 + $0x28] sm:$0xff]
        %v868 = vld [vmem:[%s659 + $0x30] sm:$0xff]
        %v869 = vld [vmem:[%s659 + $0x38] sm:$0xff]
        %v870 = vld [vmem:[%s659 + $0x40] sm:$0xff]
        %v871 = vld [vmem:[%s659 + $0x48] sm:$0xff]
        %v872 = vld [vmem:[%s659 + $0x50] sm:$0xff]
        %v873 = vld [vmem:[%s659 + $0x58] sm:$0xff]
        %v874 = vld [vmem:[%s659 + $0x60] sm:$0xff]
        %v875 = vld [vmem:[%s659 + $0x68] sm:$0xff]
        %v876 = vld [vmem:[%s659 + $0x70] sm:$0xff]
        %v877 = vld [vmem:[%s659 + $0x78] sm:$0xff]
        %v878 = vld [vmem:[%s659 + $0x80] sm:$0xff]
        %v879 = vld [vmem:[%s659 + $0x88] sm:$0xff]
        %v880 = vld [vmem:[%s659 + $0x90] sm:$0xff]
        %v881 = vld [vmem:[%s659 + $0x98] sm:$0xff]
        %v882 = vld [vmem:[%s659 + $0xa0] sm:$0xff]
        %v883 = vld [vmem:[%s659 + $0xa8] sm:$0xff]
        %v884 = vld [vmem:[%s659 + $0xb0] sm:$0xff]
        %v885 = vld [vmem:[%s659 + $0xb8] sm:$0xff]
        %v886 = vld [vmem:[%s659 + $0xc0] sm:$0xff]
        %v887 = vld [vmem:[%s659 + $0xc8] sm:$0xff]
        %v888 = vld [vmem:[%s659 + $0xd0] sm:$0xff]
        %v889 = vld [vmem:[%s659 + $0xd8] sm:$0xff]
        %v890 = vld [vmem:[%s659 + $0xe0] sm:$0xff]
        %v891 = vld [vmem:[%s659 + $0xe8] sm:$0xff]
        %v892 = vld [vmem:[%s659 + $0xf0] sm:$0xff]
        %v893 = vld [vmem:[%s659 + $0xf8] sm:$0xff]
        %s894 = scalar_lea.vmem [#allocation6], 48
        %v895 = vld [vmem:[%s894] sm:$0xf]
        %v896 = vld [vmem:[%s894 + $0x4] sm:$0xf]
        %v897 = vld [vmem:[%s894 + $0x8] sm:$0xf]
        %v898 = vld [vmem:[%s894 + $0xc] sm:$0xf]
        %v903 = vunpack.c.l.b16 %v895
        %v904 = vunpack.c.l.b16 %v896
        %v905 = vunpack.c.l.b16 %v897
        %v906 = vunpack.c.l.b16 %v898
        %v907 = vpack.c.b16 %v904, %v903
        %v908 = vpack.c.b16 %v906, %v905
        %v912 = vsel %vm660, %v862, 0
        %v915 = vsel %vm660, %v863, 0
        %v918 = vsel %vm660, %v864, 0
        %v921 = vsel %vm660, %v865, 0
        %v924 = vsel %vm660, %v866, 0
        %v927 = vsel %vm660, %v867, 0
        %v930 = vsel %vm660, %v868, 0
        %v933 = vsel %vm660, %v869, 0
        %v936 = vsel %vm660, %v870, 0
        %v939 = vsel %vm660, %v871, 0
        %v942 = vsel %vm660, %v872, 0
        %v945 = vsel %vm660, %v873, 0
        %v948 = vsel %vm660, %v874, 0
        %v951 = vsel %vm660, %v875, 0
        %v954 = vsel %vm660, %v876, 0
        %v957 = vsel %vm660, %v877, 0
        %v960 = vsel %vm660, %v878, 0
        %v963 = vsel %vm660, %v879, 0
        %v966 = vsel %vm660, %v880, 0
        %v969 = vsel %vm660, %v881, 0
        %v972 = vsel %vm660, %v882, 0
        %v975 = vsel %vm660, %v883, 0
        %v978 = vsel %vm660, %v884, 0
        %v981 = vsel %vm660, %v885, 0
        %v984 = vsel %vm660, %v886, 0
        %v987 = vsel %vm660, %v887, 0
        %v990 = vsel %vm660, %v888, 0
        %v993 = vsel %vm660, %v889, 0
        %v996 = vsel %vm660, %v890, 0
        %v999 = vsel %vm660, %v891, 0
        %v1002 = vsel %vm660, %v892, 0
        %v1005 = vsel %vm660, %v893, 0
        %1007 = vmatprep.subr.bf16.mxu0 0
        %1008 = vmatpush1.bf16.msra.mxu0 %v907
        %1009 = vmatprep.subr.bf16.mxu0 0
        %1010 = vmatpush1.bf16.msra.mxu0 %v908
        %1011 = vmatprep.subr.bf16.mxu0 0
        %1012 = vmatpush1.bf16.msra.mxu0 0
        %1013 = vmatprep.subr.bf16.mxu0 0
        %1014 = vmatpush1.bf16.msra.mxu0 0
        %1015 = vmatprep.subr.bf16.mxu0 0
        %1016 = vmatpush1.bf16.msra.mxu0 0
        %1017 = vmatprep.subr.bf16.mxu0 0
        %1018 = vmatpush1.bf16.msra.mxu0 0
        %1019 = vmatprep.subr.bf16.mxu0 0
        %1020 = vmatpush1.bf16.msra.mxu0 0
        %1021 = vmatprep.subr.bf16.mxu0 0
        %1022 = vmatpush1.bf16.msra.mxu0 0
        %1023 = vmatprep.subr.bf16.mxu0 0
        %1024 = vmatpush1.bf16.msra.mxu0 0
        %1025 = vmatprep.subr.bf16.mxu0 0
        %1026 = vmatpush1.bf16.msra.mxu0 0
        %1027 = vmatprep.subr.bf16.mxu0 0
        %1028 = vmatpush1.bf16.msra.mxu0 0
        %1029 = vmatprep.subr.bf16.mxu0 0
        %1030 = vmatpush1.bf16.msra.mxu0 0
        %1031 = vmatprep.subr.bf16.mxu0 0
        %1032 = vmatpush1.bf16.msra.mxu0 0
        %1033 = vmatprep.subr.bf16.mxu0 0
        %1034 = vmatpush1.bf16.msra.mxu0 0
        %1035 = vmatprep.subr.bf16.mxu0 0
        %1036 = vmatpush1.bf16.msra.mxu0 0
        %1037 = vmatprep.subr.bf16.mxu0 0
        %1038 = vmatpush1.bf16.msra.mxu0 0
        %1039 = vmatprep.mubr.bf16.mxu0 0
        %1040 = vmatmul.mubr.bf16.gmra.mrb[0].mxu0 %v912
        %v1041 = vpop.f32.mrb[0].mxu0
        %v1042 = vadd.f32 0.0, %v1041
        %v1043 = vpop.f32.mrb[0].mxu0
        %v1044 = vpop.f32.mrb[0].mxu0
        %v1045 = vadd.f32 0.0, %v1044
        %v1046 = vpop.f32.mrb[0].mxu0
        %1047 = vmatprep.mubr.bf16.mxu0 0
        %1048 = vmatmul.mubr.bf16.gmra.mrb[0].mxu0 %v915
        %v1049 = vpop.f32.mrb[0].mxu0
        %v1050 = vpop.f32.mrb[0].mxu0
        %v1051 = vpop.f32.mrb[0].mxu0
        %v1052 = vadd.f32 0.0, %v1051
        %v1053 = vpop.f32.mrb[0].mxu0
        %1054 = vmatprep.mubr.bf16.mxu0 0
        %1055 = vmatmul.mubr.bf16.gmra.mrb[0].mxu0 %v918
        %v1056 = vpop.f32.mrb[0].mxu0
        %v1057 = vadd.f32 0.0, %v1056
        %v1058 = vpop.f32.mrb[0].mxu0
        %v1059 = vpop.f32.mrb[0].mxu0
        %v1060 = vadd.f32 0.0, %v1059
        %v1061 = vpop.f32.mrb[0].mxu0
        %1062 = vmatprep.mubr.bf16.mxu0 0
        %1063 = vmatmul.mubr.bf16.gmra.mrb[0].mxu0 %v921
        %v1064 = vpop.f32.mrb[0].mxu0
        %v1065 = vpop.f32.mrb[0].mxu0
        %v1066 = vpop.f32.mrb[0].mxu0
        %v1067 = vadd.f32 0.0, %v1066
        %v1068 = vpop.f32.mrb[0].mxu0
        %1069 = vmatprep.mubr.bf16.mxu0 0
        %1070 = vmatmul.mubr.bf16.gmra.mrb[0].mxu0 %v924
        %v1071 = vpop.f32.mrb[0].mxu0
        %v1072 = vadd.f32 0.0, %v1071
        %v1073 = vpop.f32.mrb[0].mxu0
        %v1074 = vpop.f32.mrb[0].mxu0
        %v1075 = vadd.f32 0.0, %v1074
        %v1076 = vpop.f32.mrb[0].mxu0
        %1077 = vmatprep.mubr.bf16.mxu0 0
        %1078 = vmatmul.mubr.bf16.gmra.mrb[0].mxu0 %v927
        %v1079 = vpop.f32.mrb[0].mxu0
        %v1080 = vpop.f32.mrb[0].mxu0
        %v1081 = vpop.f32.mrb[0].mxu0
        %v1082 = vadd.f32 0.0, %v1081
        %v1083 = vpop.f32.mrb[0].mxu0
        %1084 = vmatprep.mubr.bf16.mxu0 0
        %1085 = vmatmul.mubr.bf16.gmra.mrb[0].mxu0 %v930
        %v1086 = vpop.f32.mrb[0].mxu0
        %v1087 = vadd.f32 0.0, %v1086
        %v1088 = vpop.f32.mrb[0].mxu0
        %v1089 = vpop.f32.mrb[0].mxu0
        %v1090 = vadd.f32 0.0, %v1089
        %v1091 = vpop.f32.mrb[0].mxu0
        %1092 = vmatprep.mubr.bf16.mxu0 0
        %1093 = vmatmul.mubr.bf16.gmra.mrb[0].mxu0 %v933
        %v1094 = vpop.f32.mrb[0].mxu0
        %v1095 = vpop.f32.mrb[0].mxu0
        %v1096 = vpop.f32.mrb[0].mxu0
        %v1097 = vadd.f32 0.0, %v1096
        %v1098 = vpop.f32.mrb[0].mxu0
        %1099 = vmatprep.mubr.bf16.mxu0 0
        %1100 = vmatmul.mubr.bf16.gmra.mrb[0].mxu0 %v936
        %v1101 = vpop.f32.mrb[0].mxu0
        %v1102 = vadd.f32 0.0, %v1101
        %v1103 = vpop.f32.mrb[0].mxu0
        %v1104 = vpop.f32.mrb[0].mxu0
        %v1105 = vadd.f32 0.0, %v1104
        %v1106 = vpop.f32.mrb[0].mxu0
        %1107 = vmatprep.mubr.bf16.mxu0 0
        %1108 = vmatmul.mubr.bf16.gmra.mrb[0].mxu0 %v939
        %v1109 = vpop.f32.mrb[0].mxu0
        %v1110 = vpop.f32.mrb[0].mxu0
        %v1111 = vpop.f32.mrb[0].mxu0
        %v1112 = vadd.f32 0.0, %v1111
        %v1113 = vpop.f32.mrb[0].mxu0
        %1114 = vmatprep.mubr.bf16.mxu0 0
        %1115 = vmatmul.mubr.bf16.gmra.mrb[0].mxu0 %v942
        %v1116 = vpop.f32.mrb[0].mxu0
        %v1117 = vadd.f32 0.0, %v1116
        %v1118 = vpop.f32.mrb[0].mxu0
        %v1119 = vpop.f32.mrb[0].mxu0
        %v1120 = vadd.f32 0.0, %v1119
        %v1121 = vpop.f32.mrb[0].mxu0
        %1122 = vmatprep.mubr.bf16.mxu0 0
        %1123 = vmatmul.mubr.bf16.gmra.mrb[0].mxu0 %v945
        %v1124 = vpop.f32.mrb[0].mxu0
        %v1125 = vpop.f32.mrb[0].mxu0
        %v1126 = vpop.f32.mrb[0].mxu0
        %v1127 = vadd.f32 0.0, %v1126
        %v1128 = vpop.f32.mrb[0].mxu0
        %1129 = vmatprep.mubr.bf16.mxu0 0
        %1130 = vmatmul.mubr.bf16.gmra.mrb[0].mxu0 %v948
        %v1131 = vpop.f32.mrb[0].mxu0
        %v1132 = vadd.f32 0.0, %v1131
        %v1133 = vpop.f32.mrb[0].mxu0
        %v1134 = vpop.f32.mrb[0].mxu0
        %v1135 = vadd.f32 0.0, %v1134
        %v1136 = vpop.f32.mrb[0].mxu0
        %1137 = vmatprep.mubr.bf16.mxu0 0
        %1138 = vmatmul.mubr.bf16.gmra.mrb[0].mxu0 %v951
        %v1139 = vpop.f32.mrb[0].mxu0
        %v1140 = vpop.f32.mrb[0].mxu0
        %v1141 = vpop.f32.mrb[0].mxu0
        %v1142 = vadd.f32 0.0, %v1141
        %v1143 = vpop.f32.mrb[0].mxu0
        %1144 = vmatprep.mubr.bf16.mxu0 0
        %1145 = vmatmul.mubr.bf16.gmra.mrb[0].mxu0 %v954
        %v1146 = vpop.f32.mrb[0].mxu0
        %v1147 = vadd.f32 0.0, %v1146
        %v1148 = vpop.f32.mrb[0].mxu0
        %v1149 = vpop.f32.mrb[0].mxu0
        %v1150 = vadd.f32 0.0, %v1149
        %v1151 = vpop.f32.mrb[0].mxu0
        %1152 = vmatprep.mubr.bf16.mxu0 0
        %1153 = vmatmul.mubr.bf16.gmra.mrb[0].mxu0 %v957
        %v1154 = vpop.f32.mrb[0].mxu0
        %v1155 = vpop.f32.mrb[0].mxu0
        %v1156 = vpop.f32.mrb[0].mxu0
        %v1157 = vadd.f32 0.0, %v1156
        %v1158 = vpop.f32.mrb[0].mxu0
        %1159 = vmatprep.mubr.bf16.mxu0 0
        %1160 = vmatmul.mubr.bf16.gmra.mrb[0].mxu0 %v960
        %v1161 = vpop.f32.mrb[0].mxu0
        %v1162 = vadd.f32 0.0, %v1161
        %v1163 = vpop.f32.mrb[0].mxu0
        %v1164 = vpop.f32.mrb[0].mxu0
        %v1165 = vadd.f32 0.0, %v1164
        %v1166 = vpop.f32.mrb[0].mxu0
        %1167 = vmatprep.mubr.bf16.mxu0 0
        %1168 = vmatmul.mubr.bf16.gmra.mrb[0].mxu0 %v963
        %v1169 = vpop.f32.mrb[0].mxu0
        %v1170 = vpop.f32.mrb[0].mxu0
        %v1171 = vpop.f32.mrb[0].mxu0
        %v1172 = vadd.f32 0.0, %v1171
        %v1173 = vpop.f32.mrb[0].mxu0
        %1174 = vmatprep.mubr.bf16.mxu0 0
        %1175 = vmatmul.mubr.bf16.gmra.mrb[0].mxu0 %v966
        %v1176 = vpop.f32.mrb[0].mxu0
        %v1177 = vadd.f32 0.0, %v1176
        %v1178 = vpop.f32.mrb[0].mxu0
        %v1179 = vpop.f32.mrb[0].mxu0
        %v1180 = vadd.f32 0.0, %v1179
        %v1181 = vpop.f32.mrb[0].mxu0
        %1182 = vmatprep.mubr.bf16.mxu0 0
        %1183 = vmatmul.mubr.bf16.gmra.mrb[0].mxu0 %v969
        %v1184 = vpop.f32.mrb[0].mxu0
        %v1185 = vpop.f32.mrb[0].mxu0
        %v1186 = vpop.f32.mrb[0].mxu0
        %v1187 = vadd.f32 0.0, %v1186
        %v1188 = vpop.f32.mrb[0].mxu0
        %1189 = vmatprep.mubr.bf16.mxu0 0
        %1190 = vmatmul.mubr.bf16.gmra.mrb[0].mxu0 %v972
        %v1191 = vpop.f32.mrb[0].mxu0
        %v1192 = vadd.f32 0.0, %v1191
        %v1193 = vpop.f32.mrb[0].mxu0
        %v1194 = vpop.f32.mrb[0].mxu0
        %v1195 = vadd.f32 0.0, %v1194
        %v1196 = vpop.f32.mrb[0].mxu0
        %1197 = vmatprep.mubr.bf16.mxu0 0
        %1198 = vmatmul.mubr.bf16.gmra.mrb[0].mxu0 %v975
        %v1199 = vpop.f32.mrb[0].mxu0
        %v1200 = vpop.f32.mrb[0].mxu0
        %v1201 = vpop.f32.mrb[0].mxu0
        %v1202 = vadd.f32 0.0, %v1201
        %v1203 = vpop.f32.mrb[0].mxu0
        %1204 = vmatprep.mubr.bf16.mxu0 0
        %1205 = vmatmul.mubr.bf16.gmra.mrb[0].mxu0 %v978
        %v1206 = vpop.f32.mrb[0].mxu0
        %v1207 = vadd.f32 0.0, %v1206
        %v1208 = vpop.f32.mrb[0].mxu0
        %v1209 = vpop.f32.mrb[0].mxu0
        %v1210 = vadd.f32 0.0, %v1209
        %v1211 = vpop.f32.mrb[0].mxu0
        %1212 = vmatprep.mubr.bf16.mxu0 0
        %1213 = vmatmul.mubr.bf16.gmra.mrb[0].mxu0 %v981
        %v1214 = vpop.f32.mrb[0].mxu0
        %v1215 = vpop.f32.mrb[0].mxu0
        %v1216 = vpop.f32.mrb[0].mxu0
        %v1217 = vadd.f32 0.0, %v1216
        %v1218 = vpop.f32.mrb[0].mxu0
        %1219 = vmatprep.mubr.bf16.mxu0 0
        %1220 = vmatmul.mubr.bf16.gmra.mrb[0].mxu0 %v984
        %v1221 = vpop.f32.mrb[0].mxu0
        %v1222 = vadd.f32 0.0, %v1221
        %v1223 = vpop.f32.mrb[0].mxu0
        %v1224 = vpop.f32.mrb[0].mxu0
        %v1225 = vadd.f32 0.0, %v1224
        %v1226 = vpop.f32.mrb[0].mxu0
        %1227 = vmatprep.mubr.bf16.mxu0 0
        %1228 = vmatmul.mubr.bf16.gmra.mrb[0].mxu0 %v987
        %v1229 = vpop.f32.mrb[0].mxu0
        %v1230 = vpop.f32.mrb[0].mxu0
        %v1231 = vpop.f32.mrb[0].mxu0
        %v1232 = vadd.f32 0.0, %v1231
        %v1233 = vpop.f32.mrb[0].mxu0
        %1234 = vmatprep.mubr.bf16.mxu0 0
        %1235 = vmatmul.mubr.bf16.gmra.mrb[0].mxu0 %v990
        %v1236 = vpop.f32.mrb[0].mxu0
        %v1237 = vadd.f32 0.0, %v1236
        %v1238 = vpop.f32.mrb[0].mxu0
        %v1239 = vpop.f32.mrb[0].mxu0
        %v1240 = vadd.f32 0.0, %v1239
        %v1241 = vpop.f32.mrb[0].mxu0
        %1242 = vmatprep.mubr.bf16.mxu0 0
        %1243 = vmatmul.mubr.bf16.gmra.mrb[0].mxu0 %v993
        %v1244 = vpop.f32.mrb[0].mxu0
        %v1245 = vpop.f32.mrb[0].mxu0
        %v1246 = vpop.f32.mrb[0].mxu0
        %v1247 = vadd.f32 0.0, %v1246
        %v1248 = vpop.f32.mrb[0].mxu0
        %1249 = vmatprep.mubr.bf16.mxu0 0
        %1250 = vmatmul.mubr.bf16.gmra.mrb[0].mxu0 %v996
        %v1251 = vpop.f32.mrb[0].mxu0
        %v1252 = vadd.f32 0.0, %v1251
        %v1253 = vpop.f32.mrb[0].mxu0
        %v1254 = vpop.f32.mrb[0].mxu0
        %v1255 = vadd.f32 0.0, %v1254
        %v1256 = vpop.f32.mrb[0].mxu0
        %1257 = vmatprep.mubr.bf16.mxu0 0
        %1258 = vmatmul.mubr.bf16.gmra.mrb[0].mxu0 %v999
        %v1259 = vpop.f32.mrb[0].mxu0
        %v1260 = vpop.f32.mrb[0].mxu0
        %v1261 = vpop.f32.mrb[0].mxu0
        %v1262 = vadd.f32 0.0, %v1261
        %v1263 = vpop.f32.mrb[0].mxu0
        %1264 = vmatprep.mubr.bf16.mxu0 0
        %1265 = vmatmul.mubr.bf16.gmra.mrb[0].mxu0 %v1002
        %v1266 = vpop.f32.mrb[0].mxu0
        %v1267 = vadd.f32 0.0, %v1266
        %v1268 = vpop.f32.mrb[0].mxu0
        %v1269 = vpop.f32.mrb[0].mxu0
        %v1270 = vadd.f32 0.0, %v1269
        %v1271 = vpop.f32.mrb[0].mxu0
        %1272 = vmatprep.mubr.bf16.mxu0 0
        %1273 = vmatmul.mubr.bf16.gmra.mrb[0].mxu0 %v1005
        %v1274 = vpop.f32.mrb[0].mxu0
        %v1275 = vpop.f32.mrb[0].mxu0
        %v1276 = vpop.f32.mrb[0].mxu0
        %v1277 = vadd.f32 0.0, %v1276
        %v1278 = vpop.f32.mrb[0].mxu0
        %1279 = vdwg.mxu0
        %v1284 = vunpack.c.l.b16 %v848
        %v1285 = vunpack.c.l.b16 %v849
        %v1286 = vunpack.c.l.b16 %v850
        %v1287 = vunpack.c.l.b16 %v851
        %v1288 = vpack.c.b16 %v1285, %v1284
        %v1289 = vpack.c.b16 %v1287, %v1286
        %v1293 = vsel %vm660, %v816, 0
        %v1296 = vsel %vm660, %v817, 0
        %v1299 = vsel %vm660, %v818, 0
        %v1302 = vsel %vm660, %v819, 0
        %v1305 = vsel %vm660, %v820, 0
        %v1308 = vsel %vm660, %v821, 0
        %v1311 = vsel %vm660, %v822, 0
        %v1314 = vsel %vm660, %v823, 0
        %v1317 = vsel %vm660, %v824, 0
        %v1320 = vsel %vm660, %v825, 0
        %v1323 = vsel %vm660, %v826, 0
        %v1326 = vsel %vm660, %v827, 0
        %v1329 = vsel %vm660, %v828, 0
        %v1332 = vsel %vm660, %v829, 0
        %v1335 = vsel %vm660, %v830, 0
        %v1338 = vsel %vm660, %v831, 0
        %v1341 = vsel %vm660, %v832, 0
        %v1344 = vsel %vm660, %v833, 0
        %v1347 = vsel %vm660, %v834, 0
        %v1350 = vsel %vm660, %v835, 0
        %v1353 = vsel %vm660, %v836, 0
        %v1356 = vsel %vm660, %v837, 0
        %v1359 = vsel %vm660, %v838, 0
        %v1362 = vsel %vm660, %v839, 0
        %v1365 = vsel %vm660, %v840, 0
        %v1368 = vsel %vm660, %v841, 0
        %v1371 = vsel %vm660, %v842, 0
        %v1374 = vsel %vm660, %v843, 0
        %v1377 = vsel %vm660, %v844, 0
        %v1380 = vsel %vm660, %v845, 0
        %v1383 = vsel %vm660, %v846, 0
        %v1386 = vsel %vm660, %v847, 0
        %1388 = vmatprep.subr.bf16.mxu0 0
        %1389 = vmatpush1.bf16.msra.mxu0 %v1288
        %1390 = vmatprep.subr.bf16.mxu0 0
        %1391 = vmatpush1.bf16.msra.mxu0 %v1289
        %1392 = vmatprep.subr.bf16.mxu0 0
        %1393 = vmatpush1.bf16.msra.mxu0 0
        %1394 = vmatprep.subr.bf16.mxu0 0
        %1395 = vmatpush1.bf16.msra.mxu0 0
        %1396 = vmatprep.subr.bf16.mxu0 0
        %1397 = vmatpush1.bf16.msra.mxu0 0
        %1398 = vmatprep.subr.bf16.mxu0 0
        %1399 = vmatpush1.bf16.msra.mxu0 0
        %1400 = vmatprep.subr.bf16.mxu0 0
        %1401 = vmatpush1.bf16.msra.mxu0 0
        %1402 = vmatprep.subr.bf16.mxu0 0
        %1403 = vmatpush1.bf16.msra.mxu0 0
        %1404 = vmatprep.subr.bf16.mxu0 0
        %1405 = vmatpush1.bf16.msra.mxu0 0
        %1406 = vmatprep.subr.bf16.mxu0 0
        %1407 = vmatpush1.bf16.msra.mxu0 0
        %1408 = vmatprep.subr.bf16.mxu0 0
        %1409 = vmatpush1.bf16.msra.mxu0 0
        %1410 = vmatprep.subr.bf16.mxu0 0
        %1411 = vmatpush1.bf16.msra.mxu0 0
        %1412 = vmatprep.subr.bf16.mxu0 0
        %1413 = vmatpush1.bf16.msra.mxu0 0
        %1414 = vmatprep.subr.bf16.mxu0 0
        %1415 = vmatpush1.bf16.msra.mxu0 0
        %1416 = vmatprep.subr.bf16.mxu0 0
        %1417 = vmatpush1.bf16.msra.mxu0 0
        %1418 = vmatprep.subr.bf16.mxu0 0
        %1419 = vmatpush1.bf16.msra.mxu0 0
        %1420 = vmatprep.mubr.bf16.mxu0 0
        %1421 = vmatmul.mubr.bf16.gmra.mrb[0].mxu0 %v1293
        %v1422 = vpop.f32.mrb[0].mxu0
        %v1423 = vadd.f32 %v1042, %v1422
        %v1424 = vpop.f32.mrb[0].mxu0
        %v1425 = vpop.f32.mrb[0].mxu0
        %v1426 = vadd.f32 %v1045, %v1425
        %v1427 = vpop.f32.mrb[0].mxu0
        %1428 = vmatprep.mubr.bf16.mxu0 0
        %1429 = vmatmul.mubr.bf16.gmra.mrb[0].mxu0 %v1296
        %v1430 = vpop.f32.mrb[0].mxu0
        %v1431 = vpop.f32.mrb[0].mxu0
        %v1432 = vpop.f32.mrb[0].mxu0
        %v1433 = vadd.f32 %v1052, %v1432
        %v1434 = vpop.f32.mrb[0].mxu0
        %1435 = vmatprep.mubr.bf16.mxu0 0
        %1436 = vmatmul.mubr.bf16.gmra.mrb[0].mxu0 %v1299
        %v1437 = vpop.f32.mrb[0].mxu0
        %v1438 = vadd.f32 %v1057, %v1437
        %v1439 = vpop.f32.mrb[0].mxu0
        %v1440 = vpop.f32.mrb[0].mxu0
        %v1441 = vadd.f32 %v1060, %v1440
        %v1442 = vpop.f32.mrb[0].mxu0
        %1443 = vmatprep.mubr.bf16.mxu0 0
        %1444 = vmatmul.mubr.bf16.gmra.mrb[0].mxu0 %v1302
        %v1445 = vpop.f32.mrb[0].mxu0
        %v1446 = vpop.f32.mrb[0].mxu0
        %v1447 = vpop.f32.mrb[0].mxu0
        %v1448 = vadd.f32 %v1067, %v1447
        %v1449 = vpop.f32.mrb[0].mxu0
        %1450 = vmatprep.mubr.bf16.mxu0 0
        %1451 = vmatmul.mubr.bf16.gmra.mrb[0].mxu0 %v1305
        %v1452 = vpop.f32.mrb[0].mxu0
        %v1453 = vadd.f32 %v1072, %v1452
        %v1454 = vpop.f32.mrb[0].mxu0
        %v1455 = vpop.f32.mrb[0].mxu0
        %v1456 = vadd.f32 %v1075, %v1455
        %v1457 = vpop.f32.mrb[0].mxu0
        %1458 = vmatprep.mubr.bf16.mxu0 0
        %1459 = vmatmul.mubr.bf16.gmra.mrb[0].mxu0 %v1308
        %v1460 = vpop.f32.mrb[0].mxu0
        %v1461 = vpop.f32.mrb[0].mxu0
        %v1462 = vpop.f32.mrb[0].mxu0
        %v1463 = vadd.f32 %v1082, %v1462
        %v1464 = vpop.f32.mrb[0].mxu0
        %1465 = vmatprep.mubr.bf16.mxu0 0
        %1466 = vmatmul.mubr.bf16.gmra.mrb[0].mxu0 %v1311
        %v1467 = vpop.f32.mrb[0].mxu0
        %v1468 = vadd.f32 %v1087, %v1467
        %v1469 = vpop.f32.mrb[0].mxu0
        %v1470 = vpop.f32.mrb[0].mxu0
        %v1471 = vadd.f32 %v1090, %v1470
        %v1472 = vpop.f32.mrb[0].mxu0
        %1473 = vmatprep.mubr.bf16.mxu0 0
        %1474 = vmatmul.mubr.bf16.gmra.mrb[0].mxu0 %v1314
        %v1475 = vpop.f32.mrb[0].mxu0
        %v1476 = vpop.f32.mrb[0].mxu0
        %v1477 = vpop.f32.mrb[0].mxu0
        %v1478 = vadd.f32 %v1097, %v1477
        %v1479 = vpop.f32.mrb[0].mxu0
        %1480 = vmatprep.mubr.bf16.mxu0 0
        %1481 = vmatmul.mubr.bf16.gmra.mrb[0].mxu0 %v1317
        %v1482 = vpop.f32.mrb[0].mxu0
        %v1483 = vadd.f32 %v1102, %v1482
        %v1484 = vpop.f32.mrb[0].mxu0
        %v1485 = vpop.f32.mrb[0].mxu0
        %v1486 = vadd.f32 %v1105, %v1485
        %v1487 = vpop.f32.mrb[0].mxu0
        %1488 = vmatprep.mubr.bf16.mxu0 0
        %1489 = vmatmul.mubr.bf16.gmra.mrb[0].mxu0 %v1320
        %v1490 = vpop.f32.mrb[0].mxu0
        %v1491 = vpop.f32.mrb[0].mxu0
        %v1492 = vpop.f32.mrb[0].mxu0
        %v1493 = vadd.f32 %v1112, %v1492
        %v1494 = vpop.f32.mrb[0].mxu0
        %1495 = vmatprep.mubr.bf16.mxu0 0
        %1496 = vmatmul.mubr.bf16.gmra.mrb[0].mxu0 %v1323
        %v1497 = vpop.f32.mrb[0].mxu0
        %v1498 = vadd.f32 %v1117, %v1497
        %v1499 = vpop.f32.mrb[0].mxu0
        %v1500 = vpop.f32.mrb[0].mxu0
        %v1501 = vadd.f32 %v1120, %v1500
        %v1502 = vpop.f32.mrb[0].mxu0
        %1503 = vmatprep.mubr.bf16.mxu0 0
        %1504 = vmatmul.mubr.bf16.gmra.mrb[0].mxu0 %v1326
        %v1505 = vpop.f32.mrb[0].mxu0
        %v1506 = vpop.f32.mrb[0].mxu0
        %v1507 = vpop.f32.mrb[0].mxu0
        %v1508 = vadd.f32 %v1127, %v1507
        %v1509 = vpop.f32.mrb[0].mxu0
        %1510 = vmatprep.mubr.bf16.mxu0 0
        %1511 = vmatmul.mubr.bf16.gmra.mrb[0].mxu0 %v1329
        %v1512 = vpop.f32.mrb[0].mxu0
        %v1513 = vadd.f32 %v1132, %v1512
        %v1514 = vpop.f32.mrb[0].mxu0
        %v1515 = vpop.f32.mrb[0].mxu0
        %v1516 = vadd.f32 %v1135, %v1515
        %v1517 = vpop.f32.mrb[0].mxu0
        %1518 = vmatprep.mubr.bf16.mxu0 0
        %1519 = vmatmul.mubr.bf16.gmra.mrb[0].mxu0 %v1332
        %v1520 = vpop.f32.mrb[0].mxu0
        %v1521 = vpop.f32.mrb[0].mxu0
        %v1522 = vpop.f32.mrb[0].mxu0
        %v1523 = vadd.f32 %v1142, %v1522
        %v1524 = vpop.f32.mrb[0].mxu0
        %1525 = vmatprep.mubr.bf16.mxu0 0
        %1526 = vmatmul.mubr.bf16.gmra.mrb[0].mxu0 %v1335
        %v1527 = vpop.f32.mrb[0].mxu0
        %v1528 = vadd.f32 %v1147, %v1527
        %v1529 = vpop.f32.mrb[0].mxu0
        %v1530 = vpop.f32.mrb[0].mxu0
        %v1531 = vadd.f32 %v1150, %v1530
        %v1532 = vpop.f32.mrb[0].mxu0
        %1533 = vmatprep.mubr.bf16.mxu0 0
        %1534 = vmatmul.mubr.bf16.gmra.mrb[0].mxu0 %v1338
        %v1535 = vpop.f32.mrb[0].mxu0
        %v1536 = vpop.f32.mrb[0].mxu0
        %v1537 = vpop.f32.mrb[0].mxu0
        %v1538 = vadd.f32 %v1157, %v1537
        %v1539 = vpop.f32.mrb[0].mxu0
        %1540 = vmatprep.mubr.bf16.mxu0 0
        %1541 = vmatmul.mubr.bf16.gmra.mrb[0].mxu0 %v1341
        %v1542 = vpop.f32.mrb[0].mxu0
        %v1543 = vadd.f32 %v1162, %v1542
        %v1544 = vpop.f32.mrb[0].mxu0
        %v1545 = vpop.f32.mrb[0].mxu0
        %v1546 = vadd.f32 %v1165, %v1545
        %v1547 = vpop.f32.mrb[0].mxu0
        %1548 = vmatprep.mubr.bf16.mxu0 0
        %1549 = vmatmul.mubr.bf16.gmra.mrb[0].mxu0 %v1344
        %v1550 = vpop.f32.mrb[0].mxu0
        %v1551 = vpop.f32.mrb[0].mxu0
        %v1552 = vpop.f32.mrb[0].mxu0
        %v1553 = vadd.f32 %v1172, %v1552
        %v1554 = vpop.f32.mrb[0].mxu0
        %1555 = vmatprep.mubr.bf16.mxu0 0
        %1556 = vmatmul.mubr.bf16.gmra.mrb[0].mxu0 %v1347
        %v1557 = vpop.f32.mrb[0].mxu0
        %v1558 = vadd.f32 %v1177, %v1557
        %v1559 = vpop.f32.mrb[0].mxu0
        %v1560 = vpop.f32.mrb[0].mxu0
        %v1561 = vadd.f32 %v1180, %v1560
        %v1562 = vpop.f32.mrb[0].mxu0
        %1563 = vmatprep.mubr.bf16.mxu0 0
        %1564 = vmatmul.mubr.bf16.gmra.mrb[0].mxu0 %v1350
        %v1565 = vpop.f32.mrb[0].mxu0
        %v1566 = vpop.f32.mrb[0].mxu0
        %v1567 = vpop.f32.mrb[0].mxu0
        %v1568 = vadd.f32 %v1187, %v1567
        %v1569 = vpop.f32.mrb[0].mxu0
        %1570 = vmatprep.mubr.bf16.mxu0 0
        %1571 = vmatmul.mubr.bf16.gmra.mrb[0].mxu0 %v1353
        %v1572 = vpop.f32.mrb[0].mxu0
        %v1573 = vadd.f32 %v1192, %v1572
        %v1574 = vpop.f32.mrb[0].mxu0
        %v1575 = vpop.f32.mrb[0].mxu0
        %v1576 = vadd.f32 %v1195, %v1575
        %v1577 = vpop.f32.mrb[0].mxu0
        %1578 = vmatprep.mubr.bf16.mxu0 0
        %1579 = vmatmul.mubr.bf16.gmra.mrb[0].mxu0 %v1356
        %v1580 = vpop.f32.mrb[0].mxu0
        %v1581 = vpop.f32.mrb[0].mxu0
        %v1582 = vpop.f32.mrb[0].mxu0
        %v1583 = vadd.f32 %v1202, %v1582
        %v1584 = vpop.f32.mrb[0].mxu0
        %1585 = vmatprep.mubr.bf16.mxu0 0
        %1586 = vmatmul.mubr.bf16.gmra.mrb[0].mxu0 %v1359
        %v1587 = vpop.f32.mrb[0].mxu0
        %v1588 = vadd.f32 %v1207, %v1587
        %v1589 = vpop.f32.mrb[0].mxu0
        %v1590 = vpop.f32.mrb[0].mxu0
        %v1591 = vadd.f32 %v1210, %v1590
        %v1592 = vpop.f32.mrb[0].mxu0
        %1593 = vmatprep.mubr.bf16.mxu0 0
        %1594 = vmatmul.mubr.bf16.gmra.mrb[0].mxu0 %v1362
        %v1595 = vpop.f32.mrb[0].mxu0
        %v1596 = vpop.f32.mrb[0].mxu0
        %v1597 = vpop.f32.mrb[0].mxu0
        %v1598 = vadd.f32 %v1217, %v1597
        %v1599 = vpop.f32.mrb[0].mxu0
        %1600 = vmatprep.mubr.bf16.mxu0 0
        %1601 = vmatmul.mubr.bf16.gmra.mrb[0].mxu0 %v1365
        %v1602 = vpop.f32.mrb[0].mxu0
        %v1603 = vadd.f32 %v1222, %v1602
        %v1604 = vpop.f32.mrb[0].mxu0
        %v1605 = vpop.f32.mrb[0].mxu0
        %v1606 = vadd.f32 %v1225, %v1605
        %v1607 = vpop.f32.mrb[0].mxu0
        %1608 = vmatprep.mubr.bf16.mxu0 0
        %1609 = vmatmul.mubr.bf16.gmra.mrb[0].mxu0 %v1368
        %v1610 = vpop.f32.mrb[0].mxu0
        %v1611 = vpop.f32.mrb[0].mxu0
        %v1612 = vpop.f32.mrb[0].mxu0
        %v1613 = vadd.f32 %v1232, %v1612
        %v1614 = vpop.f32.mrb[0].mxu0
        %1615 = vmatprep.mubr.bf16.mxu0 0
        %1616 = vmatmul.mubr.bf16.gmra.mrb[0].mxu0 %v1371
        %v1617 = vpop.f32.mrb[0].mxu0
        %v1618 = vadd.f32 %v1237, %v1617
        %v1619 = vpop.f32.mrb[0].mxu0
        %v1620 = vpop.f32.mrb[0].mxu0
        %v1621 = vadd.f32 %v1240, %v1620
        %v1622 = vpop.f32.mrb[0].mxu0
        %1623 = vmatprep.mubr.bf16.mxu0 0
        %1624 = vmatmul.mubr.bf16.gmra.mrb[0].mxu0 %v1374
        %v1625 = vpop.f32.mrb[0].mxu0
        %v1626 = vpop.f32.mrb[0].mxu0
        %v1627 = vpop.f32.mrb[0].mxu0
        %v1628 = vadd.f32 %v1247, %v1627
        %v1629 = vpop.f32.mrb[0].mxu0
        %1630 = vmatprep.mubr.bf16.mxu0 0
        %1631 = vmatmul.mubr.bf16.gmra.mrb[0].mxu0 %v1377
        %v1632 = vpop.f32.mrb[0].mxu0
        %v1633 = vadd.f32 %v1252, %v1632
        %v1634 = vpop.f32.mrb[0].mxu0
        %v1635 = vpop.f32.mrb[0].mxu0
        %v1636 = vadd.f32 %v1255, %v1635
        %v1637 = vpop.f32.mrb[0].mxu0
        %1638 = vmatprep.mubr.bf16.mxu0 0
        %1639 = vmatmul.mubr.bf16.gmra.mrb[0].mxu0 %v1380
        %v1640 = vpop.f32.mrb[0].mxu0
        %v1641 = vpop.f32.mrb[0].mxu0
        %v1642 = vpop.f32.mrb[0].mxu0
        %v1643 = vadd.f32 %v1262, %v1642
        %v1644 = vpop.f32.mrb[0].mxu0
        %1645 = vmatprep.mubr.bf16.mxu0 0
        %1646 = vmatmul.mubr.bf16.gmra.mrb[0].mxu0 %v1383
        %v1647 = vpop.f32.mrb[0].mxu0
        %v1648 = vadd.f32 %v1267, %v1647
        %v1649 = vpop.f32.mrb[0].mxu0
        %v1650 = vpop.f32.mrb[0].mxu0
        %v1651 = vadd.f32 %v1270, %v1650
        %v1652 = vpop.f32.mrb[0].mxu0
        %1653 = vmatprep.mubr.bf16.mxu0 0
        %1654 = vmatmul.mubr.bf16.gmra.mrb[0].mxu0 %v1386
        %v1655 = vpop.f32.mrb[0].mxu0
        %v1656 = vpop.f32.mrb[0].mxu0
        %v1657 = vpop.f32.mrb[0].mxu0
        %v1658 = vadd.f32 %v1277, %v1657
        %v1659 = vpop.f32.mrb[0].mxu0
        %1660 = vdwg.mxu0
        %s1661 = scalar_lea.vmem [#allocation6], 64
        %v1662 = vld [vmem:[%s1661] sm:$0xf]
        %v1663 = vld [vmem:[%s1661 + $0x4] sm:$0xf]
        %v1664 = vld [vmem:[%s1661 + $0x8] sm:$0xf]
        %v1665 = vld [vmem:[%s1661 + $0xc] sm:$0xf]
        %v1670 = vunpack.c.l.b16 %v1662
        %v1671 = vunpack.c.l.b16 %v1663
        %v1672 = vunpack.c.l.b16 %v1664
        %v1673 = vunpack.c.l.b16 %v1665
        %v1674 = vpack.c.b16 %v1671, %v1670
        %v1675 = vpack.c.b16 %v1673, %v1672
        %1678 = vmatprep.subr.bf16.mxu0 0
        %1679 = vmatpush1.bf16.msra.mxu0 %v1674
        %1680 = vmatprep.subr.bf16.mxu0 0
        %1681 = vmatpush1.bf16.msra.mxu0 %v1675
        %1682 = vmatprep.subr.bf16.mxu0 0
        %1683 = vmatpush1.bf16.msra.mxu0 0
        %1684 = vmatprep.subr.bf16.mxu0 0
        %1685 = vmatpush1.bf16.msra.mxu0 0
        %1686 = vmatprep.subr.bf16.mxu0 0
        %1687 = vmatpush1.bf16.msra.mxu0 0
        %1688 = vmatprep.subr.bf16.mxu0 0
        %1689 = vmatpush1.bf16.msra.mxu0 0
        %1690 = vmatprep.subr.bf16.mxu0 0
        %1691 = vmatpush1.bf16.msra.mxu0 0
        %1692 = vmatprep.subr.bf16.mxu0 0
        %1693 = vmatpush1.bf16.msra.mxu0 0
        %1694 = vmatprep.subr.bf16.mxu0 0
        %1695 = vmatpush1.bf16.msra.mxu0 0
        %1696 = vmatprep.subr.bf16.mxu0 0
        %1697 = vmatpush1.bf16.msra.mxu0 0
        %1698 = vmatprep.subr.bf16.mxu0 0
        %1699 = vmatpush1.bf16.msra.mxu0 0
        %1700 = vmatprep.subr.bf16.mxu0 0
        %1701 = vmatpush1.bf16.msra.mxu0 0
        %1702 = vmatprep.subr.bf16.mxu0 0
        %1703 = vmatpush1.bf16.msra.mxu0 0
        %1704 = vmatprep.subr.bf16.mxu0 0
        %1705 = vmatpush1.bf16.msra.mxu0 0
        %1706 = vmatprep.subr.bf16.mxu0 0
        %1707 = vmatpush1.bf16.msra.mxu0 0
        %1708 = vmatprep.subr.bf16.mxu0 0
        %1709 = vmatpush1.bf16.msra.mxu0 0
        %1710 = vmatprep.mubr.bf16.mxu0 0
        %1711 = vmatmul.mubr.bf16.gmra.mrb[0].mxu0 %v912
        %v1712 = vpop.f32.mrb[0].mxu0
        %v1713 = vadd.f32 0.0, %v1712
        %v1714 = vpop.f32.mrb[0].mxu0
        %v1715 = vpop.f32.mrb[0].mxu0
        %v1716 = vadd.f32 0.0, %v1715
        %v1717 = vpop.f32.mrb[0].mxu0
        %1718 = vmatprep.mubr.bf16.mxu0 0
        %1719 = vmatmul.mubr.bf16.gmra.mrb[0].mxu0 %v915
        %v1720 = vpop.f32.mrb[0].mxu0
        %v1721 = vpop.f32.mrb[0].mxu0
        %v1722 = vpop.f32.mrb[0].mxu0
        %v1723 = vpop.f32.mrb[0].mxu0
        %1724 = vmatprep.mubr.bf16.mxu0 0
        %1725 = vmatmul.mubr.bf16.gmra.mrb[0].mxu0 %v918
        %v1726 = vpop.f32.mrb[0].mxu0
        %v1727 = vadd.f32 0.0, %v1726
        %v1728 = vpop.f32.mrb[0].mxu0
        %v1729 = vpop.f32.mrb[0].mxu0
        %v1730 = vadd.f32 0.0, %v1729
        %v1731 = vpop.f32.mrb[0].mxu0
        %1732 = vmatprep.mubr.bf16.mxu0 0
        %1733 = vmatmul.mubr.bf16.gmra.mrb[0].mxu0 %v921
        %v1734 = vpop.f32.mrb[0].mxu0
        %v1735 = vpop.f32.mrb[0].mxu0
        %v1736 = vpop.f32.mrb[0].mxu0
        %v1737 = vpop.f32.mrb[0].mxu0
        %1738 = vmatprep.mubr.bf16.mxu0 0
        %1739 = vmatmul.mubr.bf16.gmra.mrb[0].mxu0 %v924
        %v1740 = vpop.f32.mrb[0].mxu0
        %v1741 = vadd.f32 0.0, %v1740
        %v1742 = vpop.f32.mrb[0].mxu0
        %v1743 = vpop.f32.mrb[0].mxu0
        %v1744 = vadd.f32 0.0, %v1743
        %v1745 = vpop.f32.mrb[0].mxu0
        %1746 = vmatprep.mubr.bf16.mxu0 0
        %1747 = vmatmul.mubr.bf16.gmra.mrb[0].mxu0 %v927
        %v1748 = vpop.f32.mrb[0].mxu0
        %v1749 = vpop.f32.mrb[0].mxu0
        %v1750 = vpop.f32.mrb[0].mxu0
        %v1751 = vpop.f32.mrb[0].mxu0
        %1752 = vmatprep.mubr.bf16.mxu0 0
        %1753 = vmatmul.mubr.bf16.gmra.mrb[0].mxu0 %v930
        %v1754 = vpop.f32.mrb[0].mxu0
        %v1755 = vadd.f32 0.0, %v1754
        %v1756 = vpop.f32.mrb[0].mxu0
        %v1757 = vpop.f32.mrb[0].mxu0
        %v1758 = vadd.f32 0.0, %v1757
        %v1759 = vpop.f32.mrb[0].mxu0
        %1760 = vmatprep.mubr.bf16.mxu0 0
        %1761 = vmatmul.mubr.bf16.gmra.mrb[0].mxu0 %v933
        %v1762 = vpop.f32.mrb[0].mxu0
        %v1763 = vpop.f32.mrb[0].mxu0
        %v1764 = vpop.f32.mrb[0].mxu0
        %v1765 = vpop.f32.mrb[0].mxu0
        %1766 = vmatprep.mubr.bf16.mxu0 0
        %1767 = vmatmul.mubr.bf16.gmra.mrb[0].mxu0 %v936
        %v1768 = vpop.f32.mrb[0].mxu0
        %v1769 = vadd.f32 0.0, %v1768
        %v1770 = vpop.f32.mrb[0].mxu0
        %v1771 = vpop.f32.mrb[0].mxu0
        %v1772 = vadd.f32 0.0, %v1771
        %v1773 = vpop.f32.mrb[0].mxu0
        %1774 = vmatprep.mubr.bf16.mxu0 0
        %1775 = vmatmul.mubr.bf16.gmra.mrb[0].mxu0 %v939
        %v1776 = vpop.f32.mrb[0].mxu0
        %v1777 = vpop.f32.mrb[0].mxu0
        %v1778 = vpop.f32.mrb[0].mxu0
        %v1779 = vpop.f32.mrb[0].mxu0
        %1780 = vmatprep.mubr.bf16.mxu0 0
        %1781 = vmatmul.mubr.bf16.gmra.mrb[0].mxu0 %v942
        %v1782 = vpop.f32.mrb[0].mxu0
        %v1783 = vadd.f32 0.0, %v1782
        %v1784 = vpop.f32.mrb[0].mxu0
        %v1785 = vpop.f32.mrb[0].mxu0
        %v1786 = vadd.f32 0.0, %v1785
        %v1787 = vpop.f32.mrb[0].mxu0
        %1788 = vmatprep.mubr.bf16.mxu0 0
        %1789 = vmatmul.mubr.bf16.gmra.mrb[0].mxu0 %v945
        %v1790 = vpop.f32.mrb[0].mxu0
        %v1791 = vpop.f32.mrb[0].mxu0
        %v1792 = vpop.f32.mrb[0].mxu0
        %v1793 = vpop.f32.mrb[0].mxu0
        %1794 = vmatprep.mubr.bf16.mxu0 0
        %1795 = vmatmul.mubr.bf16.gmra.mrb[0].mxu0 %v948
        %v1796 = vpop.f32.mrb[0].mxu0
        %v1797 = vadd.f32 0.0, %v1796
        %v1798 = vpop.f32.mrb[0].mxu0
        %v1799 = vpop.f32.mrb[0].mxu0
        %v1800 = vadd.f32 0.0, %v1799
        %v1801 = vpop.f32.mrb[0].mxu0
        %1802 = vmatprep.mubr.bf16.mxu0 0
        %1803 = vmatmul.mubr.bf16.gmra.mrb[0].mxu0 %v951
        %v1804 = vpop.f32.mrb[0].mxu0
        %v1805 = vpop.f32.mrb[0].mxu0
        %v1806 = vpop.f32.mrb[0].mxu0
        %v1807 = vpop.f32.mrb[0].mxu0
        %1808 = vmatprep.mubr.bf16.mxu0 0
        %1809 = vmatmul.mubr.bf16.gmra.mrb[0].mxu0 %v954
        %v1810 = vpop.f32.mrb[0].mxu0
        %v1811 = vadd.f32 0.0, %v1810
        %v1812 = vpop.f32.mrb[0].mxu0
        %v1813 = vpop.f32.mrb[0].mxu0
        %v1814 = vadd.f32 0.0, %v1813
        %v1815 = vpop.f32.mrb[0].mxu0
        %1816 = vmatprep.mubr.bf16.mxu0 0
        %1817 = vmatmul.mubr.bf16.gmra.mrb[0].mxu0 %v957
        %v1818 = vpop.f32.mrb[0].mxu0
        %v1819 = vpop.f32.mrb[0].mxu0
        %v1820 = vpop.f32.mrb[0].mxu0
        %v1821 = vpop.f32.mrb[0].mxu0
        %1822 = vmatprep.mubr.bf16.mxu0 0
        %1823 = vmatmul.mubr.bf16.gmra.mrb[0].mxu0 %v960
        %v1824 = vpop.f32.mrb[0].mxu0
        %v1825 = vadd.f32 0.0, %v1824
        %v1826 = vpop.f32.mrb[0].mxu0
        %v1827 = vpop.f32.mrb[0].mxu0
        %v1828 = vadd.f32 0.0, %v1827
        %v1829 = vpop.f32.mrb[0].mxu0
        %1830 = vmatprep.mubr.bf16.mxu0 0
        %1831 = vmatmul.mubr.bf16.gmra.mrb[0].mxu0 %v963
        %v1832 = vpop.f32.mrb[0].mxu0
        %v1833 = vpop.f32.mrb[0].mxu0
        %v1834 = vpop.f32.mrb[0].mxu0
        %v1835 = vpop.f32.mrb[0].mxu0
        %1836 = vmatprep.mubr.bf16.mxu0 0
        %1837 = vmatmul.mubr.bf16.gmra.mrb[0].mxu0 %v966
        %v1838 = vpop.f32.mrb[0].mxu0
        %v1839 = vadd.f32 0.0, %v1838
        %v1840 = vpop.f32.mrb[0].mxu0
        %v1841 = vpop.f32.mrb[0].mxu0
        %v1842 = vadd.f32 0.0, %v1841
        %v1843 = vpop.f32.mrb[0].mxu0
        %1844 = vmatprep.mubr.bf16.mxu0 0
        %1845 = vmatmul.mubr.bf16.gmra.mrb[0].mxu0 %v969
        %v1846 = vpop.f32.mrb[0].mxu0
        %v1847 = vpop.f32.mrb[0].mxu0
        %v1848 = vpop.f32.mrb[0].mxu0
        %v1849 = vpop.f32.mrb[0].mxu0
        %1850 = vmatprep.mubr.bf16.mxu0 0
        %1851 = vmatmul.mubr.bf16.gmra.mrb[0].mxu0 %v972
        %v1852 = vpop.f32.mrb[0].mxu0
        %v1853 = vadd.f32 0.0, %v1852
        %v1854 = vpop.f32.mrb[0].mxu0
        %v1855 = vpop.f32.mrb[0].mxu0
        %v1856 = vadd.f32 0.0, %v1855
        %v1857 = vpop.f32.mrb[0].mxu0
        %1858 = vmatprep.mubr.bf16.mxu0 0
        %1859 = vmatmul.mubr.bf16.gmra.mrb[0].mxu0 %v975
        %v1860 = vpop.f32.mrb[0].mxu0
        %v1861 = vpop.f32.mrb[0].mxu0
        %v1862 = vpop.f32.mrb[0].mxu0
        %v1863 = vpop.f32.mrb[0].mxu0
        %1864 = vmatprep.mubr.bf16.mxu0 0
        %1865 = vmatmul.mubr.bf16.gmra.mrb[0].mxu0 %v978
        %v1866 = vpop.f32.mrb[0].mxu0
        %v1867 = vadd.f32 0.0, %v1866
        %v1868 = vpop.f32.mrb[0].mxu0
        %v1869 = vpop.f32.mrb[0].mxu0
        %v1870 = vadd.f32 0.0, %v1869
        %v1871 = vpop.f32.mrb[0].mxu0
        %1872 = vmatprep.mubr.bf16.mxu0 0
        %1873 = vmatmul.mubr.bf16.gmra.mrb[0].mxu0 %v981
        %v1874 = vpop.f32.mrb[0].mxu0
        %v1875 = vpop.f32.mrb[0].mxu0
        %v1876 = vpop.f32.mrb[0].mxu0
        %v1877 = vpop.f32.mrb[0].mxu0
        %1878 = vmatprep.mubr.bf16.mxu0 0
        %1879 = vmatmul.mubr.bf16.gmra.mrb[0].mxu0 %v984
        %v1880 = vpop.f32.mrb[0].mxu0
        %v1881 = vadd.f32 0.0, %v1880
        %v1882 = vpop.f32.mrb[0].mxu0
        %v1883 = vpop.f32.mrb[0].mxu0
        %v1884 = vadd.f32 0.0, %v1883
        %v1885 = vpop.f32.mrb[0].mxu0
        %1886 = vmatprep.mubr.bf16.mxu0 0
        %1887 = vmatmul.mubr.bf16.gmra.mrb[0].mxu0 %v987
        %v1888 = vpop.f32.mrb[0].mxu0
        %v1889 = vpop.f32.mrb[0].mxu0
        %v1890 = vpop.f32.mrb[0].mxu0
        %v1891 = vpop.f32.mrb[0].mxu0
        %1892 = vmatprep.mubr.bf16.mxu0 0
        %1893 = vmatmul.mubr.bf16.gmra.mrb[0].mxu0 %v990
        %v1894 = vpop.f32.mrb[0].mxu0
        %v1895 = vadd.f32 0.0, %v1894
        %v1896 = vpop.f32.mrb[0].mxu0
        %v1897 = vpop.f32.mrb[0].mxu0
        %v1898 = vadd.f32 0.0, %v1897
        %v1899 = vpop.f32.mrb[0].mxu0
        %1900 = vmatprep.mubr.bf16.mxu0 0
        %1901 = vmatmul.mubr.bf16.gmra.mrb[0].mxu0 %v993
        %v1902 = vpop.f32.mrb[0].mxu0
        %v1903 = vpop.f32.mrb[0].mxu0
        %v1904 = vpop.f32.mrb[0].mxu0
        %v1905 = vpop.f32.mrb[0].mxu0
        %1906 = vmatprep.mubr.bf16.mxu0 0
        %1907 = vmatmul.mubr.bf16.gmra.mrb[0].mxu0 %v996
        %v1908 = vpop.f32.mrb[0].mxu0
        %v1909 = vadd.f32 0.0, %v1908
        %v1910 = vpop.f32.mrb[0].mxu0
        %v1911 = vpop.f32.mrb[0].mxu0
        %v1912 = vadd.f32 0.0, %v1911
        %v1913 = vpop.f32.mrb[0].mxu0
        %1914 = vmatprep.mubr.bf16.mxu0 0
        %1915 = vmatmul.mubr.bf16.gmra.mrb[0].mxu0 %v999
        %v1916 = vpop.f32.mrb[0].mxu0
        %v1917 = vpop.f32.mrb[0].mxu0
        %v1918 = vpop.f32.mrb[0].mxu0
        %v1919 = vpop.f32.mrb[0].mxu0
        %1920 = vmatprep.mubr.bf16.mxu0 0
        %1921 = vmatmul.mubr.bf16.gmra.mrb[0].mxu0 %v1002
        %v1922 = vpop.f32.mrb[0].mxu0
        %v1923 = vadd.f32 0.0, %v1922
        %v1924 = vpop.f32.mrb[0].mxu0
        %v1925 = vpop.f32.mrb[0].mxu0
        %v1926 = vadd.f32 0.0, %v1925
        %v1927 = vpop.f32.mrb[0].mxu0
        %1928 = vmatprep.mubr.bf16.mxu0 0
        %1929 = vmatmul.mubr.bf16.gmra.mrb[0].mxu0 %v1005
        %v1930 = vpop.f32.mrb[0].mxu0
        %v1931 = vpop.f32.mrb[0].mxu0
        %v1932 = vpop.f32.mrb[0].mxu0
        %v1933 = vpop.f32.mrb[0].mxu0
        %1934 = vdwg.mxu0
        %v1939 = vunpack.c.l.b16 %v853
        %v1940 = vunpack.c.l.b16 %v854
        %v1941 = vunpack.c.l.b16 %v855
        %v1942 = vunpack.c.l.b16 %v856
        %v1943 = vpack.c.b16 %v1940, %v1939
        %v1944 = vpack.c.b16 %v1942, %v1941
        %1947 = vmatprep.subr.bf16.mxu0 0
        %1948 = vmatpush1.bf16.msra.mxu0 %v1943
        %1949 = vmatprep.subr.bf16.mxu0 0
        %1950 = vmatpush1.bf16.msra.mxu0 %v1944
        %1951 = vmatprep.subr.bf16.mxu0 0
        %1952 = vmatpush1.bf16.msra.mxu0 0
        %1953 = vmatprep.subr.bf16.mxu0 0
        %1954 = vmatpush1.bf16.msra.mxu0 0
        %1955 = vmatprep.subr.bf16.mxu0 0
        %1956 = vmatpush1.bf16.msra.mxu0 0
        %1957 = vmatprep.subr.bf16.mxu0 0
        %1958 = vmatpush1.bf16.msra.mxu0 0
        %1959 = vmatprep.subr.bf16.mxu0 0
        %1960 = vmatpush1.bf16.msra.mxu0 0
        %1961 = vmatprep.subr.bf16.mxu0 0
        %1962 = vmatpush1.bf16.msra.mxu0 0
        %1963 = vmatprep.subr.bf16.mxu0 0
        %1964 = vmatpush1.bf16.msra.mxu0 0
        %1965 = vmatprep.subr.bf16.mxu0 0
        %1966 = vmatpush1.bf16.msra.mxu0 0
        %1967 = vmatprep.subr.bf16.mxu0 0
        %1968 = vmatpush1.bf16.msra.mxu0 0
        %1969 = vmatprep.subr.bf16.mxu0 0
        %1970 = vmatpush1.bf16.msra.mxu0 0
        %1971 = vmatprep.subr.bf16.mxu0 0
        %1972 = vmatpush1.bf16.msra.mxu0 0
        %1973 = vmatprep.subr.bf16.mxu0 0
        %1974 = vmatpush1.bf16.msra.mxu0 0
        %1975 = vmatprep.subr.bf16.mxu0 0
        %1976 = vmatpush1.bf16.msra.mxu0 0
        %1977 = vmatprep.subr.bf16.mxu0 0
        %1978 = vmatpush1.bf16.msra.mxu0 0
        %1979 = vmatprep.mubr.bf16.mxu0 0
        %1980 = vmatmul.mubr.bf16.gmra.mrb[0].mxu0 %v1293
        %v1981 = vpop.f32.mrb[0].mxu0
        %v1982 = vadd.f32 %v1713, %v1981
        %v1983 = vpop.f32.mrb[0].mxu0
        %v1984 = vpop.f32.mrb[0].mxu0
        %v1985 = vadd.f32 %v1716, %v1984
        %v1986 = vpop.f32.mrb[0].mxu0
        %1987 = vmatprep.mubr.bf16.mxu0 0
        %1988 = vmatmul.mubr.bf16.gmra.mrb[0].mxu0 %v1296
        %v1989 = vpop.f32.mrb[0].mxu0
        %v1990 = vpop.f32.mrb[0].mxu0
        %v1991 = vpop.f32.mrb[0].mxu0
        %v1992 = vpop.f32.mrb[0].mxu0
        %1993 = vmatprep.mubr.bf16.mxu0 0
        %1994 = vmatmul.mubr.bf16.gmra.mrb[0].mxu0 %v1299
        %v1995 = vpop.f32.mrb[0].mxu0
        %v1996 = vadd.f32 %v1727, %v1995
        %v1997 = vpop.f32.mrb[0].mxu0
        %v1998 = vpop.f32.mrb[0].mxu0
        %v1999 = vadd.f32 %v1730, %v1998
        %v2000 = vpop.f32.mrb[0].mxu0
        %2001 = vmatprep.mubr.bf16.mxu0 0
        %2002 = vmatmul.mubr.bf16.gmra.mrb[0].mxu0 %v1302
        %v2003 = vpop.f32.mrb[0].mxu0
        %v2004 = vpop.f32.mrb[0].mxu0
        %v2005 = vpop.f32.mrb[0].mxu0
        %v2006 = vpop.f32.mrb[0].mxu0
        %2007 = vmatprep.mubr.bf16.mxu0 0
        %2008 = vmatmul.mubr.bf16.gmra.mrb[0].mxu0 %v1305
        %v2009 = vpop.f32.mrb[0].mxu0
        %v2010 = vadd.f32 %v1741, %v2009
        %v2011 = vpop.f32.mrb[0].mxu0
        %v2012 = vpop.f32.mrb[0].mxu0
        %v2013 = vadd.f32 %v1744, %v2012
        %v2014 = vpop.f32.mrb[0].mxu0
        %2015 = vmatprep.mubr.bf16.mxu0 0
        %2016 = vmatmul.mubr.bf16.gmra.mrb[0].mxu0 %v1308
        %v2017 = vpop.f32.mrb[0].mxu0
        %v2018 = vpop.f32.mrb[0].mxu0
        %v2019 = vpop.f32.mrb[0].mxu0
        %v2020 = vpop.f32.mrb[0].mxu0
        %2021 = vmatprep.mubr.bf16.mxu0 0
        %2022 = vmatmul.mubr.bf16.gmra.mrb[0].mxu0 %v1311
        %v2023 = vpop.f32.mrb[0].mxu0
        %v2024 = vadd.f32 %v1755, %v2023
        %v2025 = vpop.f32.mrb[0].mxu0
        %v2026 = vpop.f32.mrb[0].mxu0
        %v2027 = vadd.f32 %v1758, %v2026
        %v2028 = vpop.f32.mrb[0].mxu0
        %2029 = vmatprep.mubr.bf16.mxu0 0
        %2030 = vmatmul.mubr.bf16.gmra.mrb[0].mxu0 %v1314
        %v2031 = vpop.f32.mrb[0].mxu0
        %v2032 = vpop.f32.mrb[0].mxu0
        %v2033 = vpop.f32.mrb[0].mxu0
        %v2034 = vpop.f32.mrb[0].mxu0
        %2035 = vmatprep.mubr.bf16.mxu0 0
        %2036 = vmatmul.mubr.bf16.gmra.mrb[0].mxu0 %v1317
        %v2037 = vpop.f32.mrb[0].mxu0
        %v2038 = vadd.f32 %v1769, %v2037
        %v2039 = vpop.f32.mrb[0].mxu0
        %v2040 = vpop.f32.mrb[0].mxu0
        %v2041 = vadd.f32 %v1772, %v2040
        %v2042 = vpop.f32.mrb[0].mxu0
        %2043 = vmatprep.mubr.bf16.mxu0 0
        %2044 = vmatmul.mubr.bf16.gmra.mrb[0].mxu0 %v1320
        %v2045 = vpop.f32.mrb[0].mxu0
        %v2046 = vpop.f32.mrb[0].mxu0
        %v2047 = vpop.f32.mrb[0].mxu0
        %v2048 = vpop.f32.mrb[0].mxu0
        %2049 = vmatprep.mubr.bf16.mxu0 0
        %2050 = vmatmul.mubr.bf16.gmra.mrb[0].mxu0 %v1323
        %v2051 = vpop.f32.mrb[0].mxu0
        %v2052 = vadd.f32 %v1783, %v2051
        %v2053 = vpop.f32.mrb[0].mxu0
        %v2054 = vpop.f32.mrb[0].mxu0
        %v2055 = vadd.f32 %v1786, %v2054
        %v2056 = vpop.f32.mrb[0].mxu0
        %2057 = vmatprep.mubr.bf16.mxu0 0
        %2058 = vmatmul.mubr.bf16.gmra.mrb[0].mxu0 %v1326
        %v2059 = vpop.f32.mrb[0].mxu0
        %v2060 = vpop.f32.mrb[0].mxu0
        %v2061 = vpop.f32.mrb[0].mxu0
        %v2062 = vpop.f32.mrb[0].mxu0
        %2063 = vmatprep.mubr.bf16.mxu0 0
        %2064 = vmatmul.mubr.bf16.gmra.mrb[0].mxu0 %v1329
        %v2065 = vpop.f32.mrb[0].mxu0
        %v2066 = vadd.f32 %v1797, %v2065
        %v2067 = vpop.f32.mrb[0].mxu0
        %v2068 = vpop.f32.mrb[0].mxu0
        %v2069 = vadd.f32 %v1800, %v2068
        %v2070 = vpop.f32.mrb[0].mxu0
        %2071 = vmatprep.mubr.bf16.mxu0 0
        %2072 = vmatmul.mubr.bf16.gmra.mrb[0].mxu0 %v1332
        %v2073 = vpop.f32.mrb[0].mxu0
        %v2074 = vpop.f32.mrb[0].mxu0
        %v2075 = vpop.f32.mrb[0].mxu0
        %v2076 = vpop.f32.mrb[0].mxu0
        %2077 = vmatprep.mubr.bf16.mxu0 0
        %2078 = vmatmul.mubr.bf16.gmra.mrb[0].mxu0 %v1335
        %v2079 = vpop.f32.mrb[0].mxu0
        %v2080 = vadd.f32 %v1811, %v2079
        %v2081 = vpop.f32.mrb[0].mxu0
        %v2082 = vpop.f32.mrb[0].mxu0
        %v2083 = vadd.f32 %v1814, %v2082
        %v2084 = vpop.f32.mrb[0].mxu0
        %2085 = vmatprep.mubr.bf16.mxu0 0
        %2086 = vmatmul.mubr.bf16.gmra.mrb[0].mxu0 %v1338
        %v2087 = vpop.f32.mrb[0].mxu0
        %v2088 = vpop.f32.mrb[0].mxu0
        %v2089 = vpop.f32.mrb[0].mxu0
        %v2090 = vpop.f32.mrb[0].mxu0
        %2091 = vmatprep.mubr.bf16.mxu0 0
        %2092 = vmatmul.mubr.bf16.gmra.mrb[0].mxu0 %v1341
        %v2093 = vpop.f32.mrb[0].mxu0
        %v2094 = vadd.f32 %v1825, %v2093
        %v2095 = vpop.f32.mrb[0].mxu0
        %v2096 = vpop.f32.mrb[0].mxu0
        %v2097 = vadd.f32 %v1828, %v2096
        %v2098 = vpop.f32.mrb[0].mxu0
        %2099 = vmatprep.mubr.bf16.mxu0 0
        %2100 = vmatmul.mubr.bf16.gmra.mrb[0].mxu0 %v1344
        %v2101 = vpop.f32.mrb[0].mxu0
        %v2102 = vpop.f32.mrb[0].mxu0
        %v2103 = vpop.f32.mrb[0].mxu0
        %v2104 = vpop.f32.mrb[0].mxu0
        %2105 = vmatprep.mubr.bf16.mxu0 0
        %2106 = vmatmul.mubr.bf16.gmra.mrb[0].mxu0 %v1347
        %v2107 = vpop.f32.mrb[0].mxu0
        %v2108 = vadd.f32 %v1839, %v2107
        %v2109 = vpop.f32.mrb[0].mxu0
        %v2110 = vpop.f32.mrb[0].mxu0
        %v2111 = vadd.f32 %v1842, %v2110
        %v2112 = vpop.f32.mrb[0].mxu0
        %2113 = vmatprep.mubr.bf16.mxu0 0
        %2114 = vmatmul.mubr.bf16.gmra.mrb[0].mxu0 %v1350
        %v2115 = vpop.f32.mrb[0].mxu0
        %v2116 = vpop.f32.mrb[0].mxu0
        %v2117 = vpop.f32.mrb[0].mxu0
        %v2118 = vpop.f32.mrb[0].mxu0
        %2119 = vmatprep.mubr.bf16.mxu0 0
        %2120 = vmatmul.mubr.bf16.gmra.mrb[0].mxu0 %v1353
        %v2121 = vpop.f32.mrb[0].mxu0
        %v2122 = vadd.f32 %v1853, %v2121
        %v2123 = vpop.f32.mrb[0].mxu0
        %v2124 = vpop.f32.mrb[0].mxu0
        %v2125 = vadd.f32 %v1856, %v2124
        %v2126 = vpop.f32.mrb[0].mxu0
        %2127 = vmatprep.mubr.bf16.mxu0 0
        %2128 = vmatmul.mubr.bf16.gmra.mrb[0].mxu0 %v1356
        %v2129 = vpop.f32.mrb[0].mxu0
        %v2130 = vpop.f32.mrb[0].mxu0
        %v2131 = vpop.f32.mrb[0].mxu0
        %v2132 = vpop.f32.mrb[0].mxu0
        %2133 = vmatprep.mubr.bf16.mxu0 0
        %2134 = vmatmul.mubr.bf16.gmra.mrb[0].mxu0 %v1359
        %v2135 = vpop.f32.mrb[0].mxu0
        %v2136 = vadd.f32 %v1867, %v2135
        %v2137 = vpop.f32.mrb[0].mxu0
        %v2138 = vpop.f32.mrb[0].mxu0
        %v2139 = vadd.f32 %v1870, %v2138
        %v2140 = vpop.f32.mrb[0].mxu0
        %2141 = vmatprep.mubr.bf16.mxu0 0
        %2142 = vmatmul.mubr.bf16.gmra.mrb[0].mxu0 %v1362
        %v2143 = vpop.f32.mrb[0].mxu0
        %v2144 = vpop.f32.mrb[0].mxu0
        %v2145 = vpop.f32.mrb[0].mxu0
        %v2146 = vpop.f32.mrb[0].mxu0
        %2147 = vmatprep.mubr.bf16.mxu0 0
        %2148 = vmatmul.mubr.bf16.gmra.mrb[0].mxu0 %v1365
        %v2149 = vpop.f32.mrb[0].mxu0
        %v2150 = vadd.f32 %v1881, %v2149
        %v2151 = vpop.f32.mrb[0].mxu0
        %v2152 = vpop.f32.mrb[0].mxu0
        %v2153 = vadd.f32 %v1884, %v2152
        %v2154 = vpop.f32.mrb[0].mxu0
        %2155 = vmatprep.mubr.bf16.mxu0 0
        %2156 = vmatmul.mubr.bf16.gmra.mrb[0].mxu0 %v1368
        %v2157 = vpop.f32.mrb[0].mxu0
        %v2158 = vpop.f32.mrb[0].mxu0
        %v2159 = vpop.f32.mrb[0].mxu0
        %v2160 = vpop.f32.mrb[0].mxu0
        %2161 = vmatprep.mubr.bf16.mxu0 0
        %2162 = vmatmul.mubr.bf16.gmra.mrb[0].mxu0 %v1371
        %v2163 = vpop.f32.mrb[0].mxu0
        %v2164 = vadd.f32 %v1895, %v2163
        %v2165 = vpop.f32.mrb[0].mxu0
        %v2166 = vpop.f32.mrb[0].mxu0
        %v2167 = vadd.f32 %v1898, %v2166
        %v2168 = vpop.f32.mrb[0].mxu0
        %2169 = vmatprep.mubr.bf16.mxu0 0
        %2170 = vmatmul.mubr.bf16.gmra.mrb[0].mxu0 %v1374
        %v2171 = vpop.f32.mrb[0].mxu0
        %v2172 = vpop.f32.mrb[0].mxu0
        %v2173 = vpop.f32.mrb[0].mxu0
        %v2174 = vpop.f32.mrb[0].mxu0
        %2175 = vmatprep.mubr.bf16.mxu0 0
        %2176 = vmatmul.mubr.bf16.gmra.mrb[0].mxu0 %v1377
        %v2177 = vpop.f32.mrb[0].mxu0
        %v2178 = vadd.f32 %v1909, %v2177
        %v2179 = vpop.f32.mrb[0].mxu0
        %v2180 = vpop.f32.mrb[0].mxu0
        %v2181 = vadd.f32 %v1912, %v2180
        %v2182 = vpop.f32.mrb[0].mxu0
        %2183 = vmatprep.mubr.bf16.mxu0 0
        %2184 = vmatmul.mubr.bf16.gmra.mrb[0].mxu0 %v1380
        %v2185 = vpop.f32.mrb[0].mxu0
        %v2186 = vpop.f32.mrb[0].mxu0
        %v2187 = vpop.f32.mrb[0].mxu0
        %v2188 = vpop.f32.mrb[0].mxu0
        %2189 = vmatprep.mubr.bf16.mxu0 0
        %2190 = vmatmul.mubr.bf16.gmra.mrb[0].mxu0 %v1383
        %v2191 = vpop.f32.mrb[0].mxu0
        %v2192 = vadd.f32 %v1923, %v2191
        %v2193 = vpop.f32.mrb[0].mxu0
        %v2194 = vpop.f32.mrb[0].mxu0
        %v2195 = vadd.f32 %v1926, %v2194
        %v2196 = vpop.f32.mrb[0].mxu0
        %2197 = vmatprep.mubr.bf16.mxu0 0
        %2198 = vmatmul.mubr.bf16.gmra.mrb[0].mxu0 %v1386
        %v2199 = vpop.f32.mrb[0].mxu0
        %v2200 = vpop.f32.mrb[0].mxu0
        %v2201 = vpop.f32.mrb[0].mxu0
        %v2202 = vpop.f32.mrb[0].mxu0
        %2203 = vdwg.mxu0
        %s2204 = scalar_lea.vmem [#allocation6], 80
        %v2205 = vld [vmem:[%s2204] sm:$0xf]
        %v2206 = vld [vmem:[%s2204 + $0x4] sm:$0xf]
        %v2207 = vld [vmem:[%s2204 + $0x8] sm:$0xf]
        %v2208 = vld [vmem:[%s2204 + $0xc] sm:$0xf]
        %v2213 = vunpack.c.l.b16 %v2205
        %v2214 = vunpack.c.l.b16 %v2206
        %v2215 = vunpack.c.l.b16 %v2207
        %v2216 = vunpack.c.l.b16 %v2208
        %v2217 = vpack.c.b16 %v2214, %v2213
        %v2218 = vpack.c.b16 %v2216, %v2215
        %2221 = vmatprep.subr.bf16.mxu0 0
        %2222 = vmatpush1.bf16.msra.mxu0 %v2217
        %2223 = vmatprep.subr.bf16.mxu0 0
        %2224 = vmatpush1.bf16.msra.mxu0 %v2218
        %2225 = vmatprep.subr.bf16.mxu0 0
        %2226 = vmatpush1.bf16.msra.mxu0 0
        %2227 = vmatprep.subr.bf16.mxu0 0
        %2228 = vmatpush1.bf16.msra.mxu0 0
        %2229 = vmatprep.subr.bf16.mxu0 0
        %2230 = vmatpush1.bf16.msra.mxu0 0
        %2231 = vmatprep.subr.bf16.mxu0 0
        %2232 = vmatpush1.bf16.msra.mxu0 0
        %2233 = vmatprep.subr.bf16.mxu0 0
        %2234 = vmatpush1.bf16.msra.mxu0 0
        %2235 = vmatprep.subr.bf16.mxu0 0
        %2236 = vmatpush1.bf16.msra.mxu0 0
        %2237 = vmatprep.subr.bf16.mxu0 0
        %2238 = vmatpush1.bf16.msra.mxu0 0
        %2239 = vmatprep.subr.bf16.mxu0 0
        %2240 = vmatpush1.bf16.msra.mxu0 0
        %2241 = vmatprep.subr.bf16.mxu0 0
        %2242 = vmatpush1.bf16.msra.mxu0 0
        %2243 = vmatprep.subr.bf16.mxu0 0
        %2244 = vmatpush1.bf16.msra.mxu0 0
        %2245 = vmatprep.subr.bf16.mxu0 0
        %2246 = vmatpush1.bf16.msra.mxu0 0
        %2247 = vmatprep.subr.bf16.mxu0 0
        %2248 = vmatpush1.bf16.msra.mxu0 0
        %2249 = vmatprep.subr.bf16.mxu0 0
        %2250 = vmatpush1.bf16.msra.mxu0 0
        %2251 = vmatprep.subr.bf16.mxu0 0
        %2252 = vmatpush1.bf16.msra.mxu0 0
        %2253 = vmatprep.mubr.bf16.mxu0 0
        %2254 = vmatmul.mubr.bf16.gmra.mrb[0].mxu0 %v912
        %v2255 = vpop.f32.mrb[0].mxu0
        %v2256 = vadd.f32 0.0, %v2255
        %v2257 = vpop.f32.mrb[0].mxu0
        %v2258 = vpop.f32.mrb[0].mxu0
        %v2259 = vadd.f32 0.0, %v2258
        %v2260 = vpop.f32.mrb[0].mxu0
        %2261 = vmatprep.mubr.bf16.mxu0 0
        %2262 = vmatmul.mubr.bf16.gmra.mrb[0].mxu0 %v915
        %v2263 = vpop.f32.mrb[0].mxu0
        %v2264 = vadd.f32 0.0, %v2263
        %v2265 = vpop.f32.mrb[0].mxu0
        %v2266 = vpop.f32.mrb[0].mxu0
        %v2267 = vpop.f32.mrb[0].mxu0
        %2268 = vmatprep.mubr.bf16.mxu0 0
        %2269 = vmatmul.mubr.bf16.gmra.mrb[0].mxu0 %v918
        %v2270 = vpop.f32.mrb[0].mxu0
        %v2271 = vadd.f32 0.0, %v2270
        %v2272 = vpop.f32.mrb[0].mxu0
        %v2273 = vpop.f32.mrb[0].mxu0
        %v2274 = vadd.f32 0.0, %v2273
        %v2275 = vpop.f32.mrb[0].mxu0
        %2276 = vmatprep.mubr.bf16.mxu0 0
        %2277 = vmatmul.mubr.bf16.gmra.mrb[0].mxu0 %v921
        %v2278 = vpop.f32.mrb[0].mxu0
        %v2279 = vadd.f32 0.0, %v2278
        %v2280 = vpop.f32.mrb[0].mxu0
        %v2281 = vpop.f32.mrb[0].mxu0
        %v2282 = vpop.f32.mrb[0].mxu0
        %2283 = vmatprep.mubr.bf16.mxu0 0
        %2284 = vmatmul.mubr.bf16.gmra.mrb[0].mxu0 %v924
        %v2285 = vpop.f32.mrb[0].mxu0
        %v2286 = vadd.f32 0.0, %v2285
        %v2287 = vpop.f32.mrb[0].mxu0
        %v2288 = vpop.f32.mrb[0].mxu0
        %v2289 = vadd.f32 0.0, %v2288
        %v2290 = vpop.f32.mrb[0].mxu0
        %2291 = vmatprep.mubr.bf16.mxu0 0
        %2292 = vmatmul.mubr.bf16.gmra.mrb[0].mxu0 %v927
        %v2293 = vpop.f32.mrb[0].mxu0
        %v2294 = vadd.f32 0.0, %v2293
        %v2295 = vpop.f32.mrb[0].mxu0
        %v2296 = vpop.f32.mrb[0].mxu0
        %v2297 = vpop.f32.mrb[0].mxu0
        %2298 = vmatprep.mubr.bf16.mxu0 0
        %2299 = vmatmul.mubr.bf16.gmra.mrb[0].mxu0 %v930
        %v2300 = vpop.f32.mrb[0].mxu0
        %v2301 = vadd.f32 0.0, %v2300
        %v2302 = vpop.f32.mrb[0].mxu0
        %v2303 = vpop.f32.mrb[0].mxu0
        %v2304 = vadd.f32 0.0, %v2303
        %v2305 = vpop.f32.mrb[0].mxu0
        %2306 = vmatprep.mubr.bf16.mxu0 0
        %2307 = vmatmul.mubr.bf16.gmra.mrb[0].mxu0 %v933
        %v2308 = vpop.f32.mrb[0].mxu0
        %v2309 = vadd.f32 0.0, %v2308
        %v2310 = vpop.f32.mrb[0].mxu0
        %v2311 = vpop.f32.mrb[0].mxu0
        %v2312 = vpop.f32.mrb[0].mxu0
        %2313 = vmatprep.mubr.bf16.mxu0 0
        %2314 = vmatmul.mubr.bf16.gmra.mrb[0].mxu0 %v936
        %v2315 = vpop.f32.mrb[0].mxu0
        %v2316 = vadd.f32 0.0, %v2315
        %v2317 = vpop.f32.mrb[0].mxu0
        %v2318 = vpop.f32.mrb[0].mxu0
        %v2319 = vadd.f32 0.0, %v2318
        %v2320 = vpop.f32.mrb[0].mxu0
        %2321 = vmatprep.mubr.bf16.mxu0 0
        %2322 = vmatmul.mubr.bf16.gmra.mrb[0].mxu0 %v939
        %v2323 = vpop.f32.mrb[0].mxu0
        %v2324 = vadd.f32 0.0, %v2323
        %v2325 = vpop.f32.mrb[0].mxu0
        %v2326 = vpop.f32.mrb[0].mxu0
        %v2327 = vpop.f32.mrb[0].mxu0
        %2328 = vmatprep.mubr.bf16.mxu0 0
        %2329 = vmatmul.mubr.bf16.gmra.mrb[0].mxu0 %v942
        %v2330 = vpop.f32.mrb[0].mxu0
        %v2331 = vadd.f32 0.0, %v2330
        %v2332 = vpop.f32.mrb[0].mxu0
        %v2333 = vpop.f32.mrb[0].mxu0
        %v2334 = vadd.f32 0.0, %v2333
        %v2335 = vpop.f32.mrb[0].mxu0
        %2336 = vmatprep.mubr.bf16.mxu0 0
        %2337 = vmatmul.mubr.bf16.gmra.mrb[0].mxu0 %v945
        %v2338 = vpop.f32.mrb[0].mxu0
        %v2339 = vadd.f32 0.0, %v2338
        %v2340 = vpop.f32.mrb[0].mxu0
        %v2341 = vpop.f32.mrb[0].mxu0
        %v2342 = vpop.f32.mrb[0].mxu0
        %2343 = vmatprep.mubr.bf16.mxu0 0
        %2344 = vmatmul.mubr.bf16.gmra.mrb[0].mxu0 %v948
        %v2345 = vpop.f32.mrb[0].mxu0
        %v2346 = vadd.f32 0.0, %v2345
        %v2347 = vpop.f32.mrb[0].mxu0
        %v2348 = vpop.f32.mrb[0].mxu0
        %v2349 = vadd.f32 0.0, %v2348
        %v2350 = vpop.f32.mrb[0].mxu0
        %2351 = vmatprep.mubr.bf16.mxu0 0
        %2352 = vmatmul.mubr.bf16.gmra.mrb[0].mxu0 %v951
        %v2353 = vpop.f32.mrb[0].mxu0
        %v2354 = vadd.f32 0.0, %v2353
        %v2355 = vpop.f32.mrb[0].mxu0
        %v2356 = vpop.f32.mrb[0].mxu0
        %v2357 = vpop.f32.mrb[0].mxu0
        %2358 = vmatprep.mubr.bf16.mxu0 0
        %2359 = vmatmul.mubr.bf16.gmra.mrb[0].mxu0 %v954
        %v2360 = vpop.f32.mrb[0].mxu0
        %v2361 = vadd.f32 0.0, %v2360
        %v2362 = vpop.f32.mrb[0].mxu0
        %v2363 = vpop.f32.mrb[0].mxu0
        %v2364 = vadd.f32 0.0, %v2363
        %v2365 = vpop.f32.mrb[0].mxu0
        %2366 = vmatprep.mubr.bf16.mxu0 0
        %2367 = vmatmul.mubr.bf16.gmra.mrb[0].mxu0 %v957
        %v2368 = vpop.f32.mrb[0].mxu0
        %v2369 = vadd.f32 0.0, %v2368
        %v2370 = vpop.f32.mrb[0].mxu0
        %v2371 = vpop.f32.mrb[0].mxu0
        %v2372 = vpop.f32.mrb[0].mxu0
        %2373 = vmatprep.mubr.bf16.mxu0 0
        %2374 = vmatmul.mubr.bf16.gmra.mrb[0].mxu0 %v960
        %v2375 = vpop.f32.mrb[0].mxu0
        %v2376 = vadd.f32 0.0, %v2375
        %v2377 = vpop.f32.mrb[0].mxu0
        %v2378 = vpop.f32.mrb[0].mxu0
        %v2379 = vadd.f32 0.0, %v2378
        %v2380 = vpop.f32.mrb[0].mxu0
        %2381 = vmatprep.mubr.bf16.mxu0 0
        %2382 = vmatmul.mubr.bf16.gmra.mrb[0].mxu0 %v963
        %v2383 = vpop.f32.mrb[0].mxu0
        %v2384 = vadd.f32 0.0, %v2383
        %v2385 = vpop.f32.mrb[0].mxu0
        %v2386 = vpop.f32.mrb[0].mxu0
        %v2387 = vpop.f32.mrb[0].mxu0
        %2388 = vmatprep.mubr.bf16.mxu0 0
        %2389 = vmatmul.mubr.bf16.gmra.mrb[0].mxu0 %v966
        %v2390 = vpop.f32.mrb[0].mxu0
        %v2391 = vadd.f32 0.0, %v2390
        %v2392 = vpop.f32.mrb[0].mxu0
        %v2393 = vpop.f32.mrb[0].mxu0
        %v2394 = vadd.f32 0.0, %v2393
        %v2395 = vpop.f32.mrb[0].mxu0
        %2396 = vmatprep.mubr.bf16.mxu0 0
        %2397 = vmatmul.mubr.bf16.gmra.mrb[0].mxu0 %v969
        %v2398 = vpop.f32.mrb[0].mxu0
        %v2399 = vadd.f32 0.0, %v2398
        %v2400 = vpop.f32.mrb[0].mxu0
        %v2401 = vpop.f32.mrb[0].mxu0
        %v2402 = vpop.f32.mrb[0].mxu0
        %2403 = vmatprep.mubr.bf16.mxu0 0
        %2404 = vmatmul.mubr.bf16.gmra.mrb[0].mxu0 %v972
        %v2405 = vpop.f32.mrb[0].mxu0
        %v2406 = vadd.f32 0.0, %v2405
        %v2407 = vpop.f32.mrb[0].mxu0
        %v2408 = vpop.f32.mrb[0].mxu0
        %v2409 = vadd.f32 0.0, %v2408
        %v2410 = vpop.f32.mrb[0].mxu0
        %2411 = vmatprep.mubr.bf16.mxu0 0
        %2412 = vmatmul.mubr.bf16.gmra.mrb[0].mxu0 %v975
        %v2413 = vpop.f32.mrb[0].mxu0
        %v2414 = vadd.f32 0.0, %v2413
        %v2415 = vpop.f32.mrb[0].mxu0
        %v2416 = vpop.f32.mrb[0].mxu0
        %v2417 = vpop.f32.mrb[0].mxu0
        %2418 = vmatprep.mubr.bf16.mxu0 0
        %2419 = vmatmul.mubr.bf16.gmra.mrb[0].mxu0 %v978
        %v2420 = vpop.f32.mrb[0].mxu0
        %v2421 = vadd.f32 0.0, %v2420
        %v2422 = vpop.f32.mrb[0].mxu0
        %v2423 = vpop.f32.mrb[0].mxu0
        %v2424 = vadd.f32 0.0, %v2423
        %v2425 = vpop.f32.mrb[0].mxu0
        %2426 = vmatprep.mubr.bf16.mxu0 0
        %2427 = vmatmul.mubr.bf16.gmra.mrb[0].mxu0 %v981
        %v2428 = vpop.f32.mrb[0].mxu0
        %v2429 = vadd.f32 0.0, %v2428
        %v2430 = vpop.f32.mrb[0].mxu0
        %v2431 = vpop.f32.mrb[0].mxu0
        %v2432 = vpop.f32.mrb[0].mxu0
        %2433 = vmatprep.mubr.bf16.mxu0 0
        %2434 = vmatmul.mubr.bf16.gmra.mrb[0].mxu0 %v984
        %v2435 = vpop.f32.mrb[0].mxu0
        %v2436 = vadd.f32 0.0, %v2435
        %v2437 = vpop.f32.mrb[0].mxu0
        %v2438 = vpop.f32.mrb[0].mxu0
        %v2439 = vadd.f32 0.0, %v2438
        %v2440 = vpop.f32.mrb[0].mxu0
        %2441 = vmatprep.mubr.bf16.mxu0 0
        %2442 = vmatmul.mubr.bf16.gmra.mrb[0].mxu0 %v987
        %v2443 = vpop.f32.mrb[0].mxu0
        %v2444 = vadd.f32 0.0, %v2443
        %v2445 = vpop.f32.mrb[0].mxu0
        %v2446 = vpop.f32.mrb[0].mxu0
        %v2447 = vpop.f32.mrb[0].mxu0
        %2448 = vmatprep.mubr.bf16.mxu0 0
        %2449 = vmatmul.mubr.bf16.gmra.mrb[0].mxu0 %v990
        %v2450 = vpop.f32.mrb[0].mxu0
        %v2451 = vadd.f32 0.0, %v2450
        %v2452 = vpop.f32.mrb[0].mxu0
        %v2453 = vpop.f32.mrb[0].mxu0
        %v2454 = vadd.f32 0.0, %v2453
        %v2455 = vpop.f32.mrb[0].mxu0
        %2456 = vmatprep.mubr.bf16.mxu0 0
        %2457 = vmatmul.mubr.bf16.gmra.mrb[0].mxu0 %v993
        %v2458 = vpop.f32.mrb[0].mxu0
        %v2459 = vadd.f32 0.0, %v2458
        %v2460 = vpop.f32.mrb[0].mxu0
        %v2461 = vpop.f32.mrb[0].mxu0
        %v2462 = vpop.f32.mrb[0].mxu0
        %2463 = vmatprep.mubr.bf16.mxu0 0
        %2464 = vmatmul.mubr.bf16.gmra.mrb[0].mxu0 %v996
        %v2465 = vpop.f32.mrb[0].mxu0
        %v2466 = vadd.f32 0.0, %v2465
        %v2467 = vpop.f32.mrb[0].mxu0
        %v2468 = vpop.f32.mrb[0].mxu0
        %v2469 = vadd.f32 0.0, %v2468
        %v2470 = vpop.f32.mrb[0].mxu0
        %2471 = vmatprep.mubr.bf16.mxu0 0
        %2472 = vmatmul.mubr.bf16.gmra.mrb[0].mxu0 %v999
        %v2473 = vpop.f32.mrb[0].mxu0
        %v2474 = vadd.f32 0.0, %v2473
        %v2475 = vpop.f32.mrb[0].mxu0
        %v2476 = vpop.f32.mrb[0].mxu0
        %v2477 = vpop.f32.mrb[0].mxu0
        %2478 = vmatprep.mubr.bf16.mxu0 0
        %2479 = vmatmul.mubr.bf16.gmra.mrb[0].mxu0 %v1002
        %v2480 = vpop.f32.mrb[0].mxu0
        %v2481 = vadd.f32 0.0, %v2480
        %v2482 = vpop.f32.mrb[0].mxu0
        %v2483 = vpop.f32.mrb[0].mxu0
        %v2484 = vadd.f32 0.0, %v2483
        %v2485 = vpop.f32.mrb[0].mxu0
        %2486 = vmatprep.mubr.bf16.mxu0 0
        %2487 = vmatmul.mubr.bf16.gmra.mrb[0].mxu0 %v1005
        %v2488 = vpop.f32.mrb[0].mxu0
        %v2489 = vadd.f32 0.0, %v2488
        %v2490 = vpop.f32.mrb[0].mxu0
        %v2491 = vpop.f32.mrb[0].mxu0
        %v2492 = vpop.f32.mrb[0].mxu0
        %2493 = vdwg.mxu0
        %v2498 = vunpack.c.l.b16 %v858
        %v2499 = vunpack.c.l.b16 %v859
        %v2500 = vunpack.c.l.b16 %v860
        %v2501 = vunpack.c.l.b16 %v861
        %v2502 = vpack.c.b16 %v2499, %v2498
        %v2503 = vpack.c.b16 %v2501, %v2500
        %2506 = vmatprep.subr.bf16.mxu0 0
        %2507 = vmatpush1.bf16.msra.mxu0 %v2502
        %2508 = vmatprep.subr.bf16.mxu0 0
        %2509 = vmatpush1.bf16.msra.mxu0 %v2503
        %2510 = vmatprep.subr.bf16.mxu0 0
        %2511 = vmatpush1.bf16.msra.mxu0 0
        %2512 = vmatprep.subr.bf16.mxu0 0
        %2513 = vmatpush1.bf16.msra.mxu0 0
        %2514 = vmatprep.subr.bf16.mxu0 0
        %2515 = vmatpush1.bf16.msra.mxu0 0
        %2516 = vmatprep.subr.bf16.mxu0 0
        %2517 = vmatpush1.bf16.msra.mxu0 0
        %2518 = vmatprep.subr.bf16.mxu0 0
        %2519 = vmatpush1.bf16.msra.mxu0 0
        %2520 = vmatprep.subr.bf16.mxu0 0
        %2521 = vmatpush1.bf16.msra.mxu0 0
        %2522 = vmatprep.subr.bf16.mxu0 0
        %2523 = vmatpush1.bf16.msra.mxu0 0
        %2524 = vmatprep.subr.bf16.mxu0 0
        %2525 = vmatpush1.bf16.msra.mxu0 0
        %2526 = vmatprep.subr.bf16.mxu0 0
        %2527 = vmatpush1.bf16.msra.mxu0 0
        %2528 = vmatprep.subr.bf16.mxu0 0
        %2529 = vmatpush1.bf16.msra.mxu0 0
        %2530 = vmatprep.subr.bf16.mxu0 0
        %2531 = vmatpush1.bf16.msra.mxu0 0
        %2532 = vmatprep.subr.bf16.mxu0 0
        %2533 = vmatpush1.bf16.msra.mxu0 0
        %2534 = vmatprep.subr.bf16.mxu0 0
        %2535 = vmatpush1.bf16.msra.mxu0 0
        %2536 = vmatprep.subr.bf16.mxu0 0
        %2537 = vmatpush1.bf16.msra.mxu0 0
        %2538 = vmatprep.mubr.bf16.mxu0 0
        %2539 = vmatmul.mubr.bf16.gmra.mrb[0].mxu0 %v1293
        %v2540 = vpop.f32.mrb[0].mxu0
        %v2541 = vadd.f32 %v2256, %v2540
        %v2542 = vpop.f32.mrb[0].mxu0
        %v2543 = vpop.f32.mrb[0].mxu0
        %v2544 = vadd.f32 %v2259, %v2543
        %v2545 = vpop.f32.mrb[0].mxu0
        %2546 = vmatprep.mubr.bf16.mxu0 0
        %2547 = vmatmul.mubr.bf16.gmra.mrb[0].mxu0 %v1296
        %v2548 = vpop.f32.mrb[0].mxu0
        %v2549 = vadd.f32 %v2264, %v2548
        %v2550 = vpop.f32.mrb[0].mxu0
        %v2551 = vpop.f32.mrb[0].mxu0
        %v2552 = vpop.f32.mrb[0].mxu0
        %2553 = vmatprep.mubr.bf16.mxu0 0
        %2554 = vmatmul.mubr.bf16.gmra.mrb[0].mxu0 %v1299
        %v2555 = vpop.f32.mrb[0].mxu0
        %v2556 = vadd.f32 %v2271, %v2555
        %v2557 = vpop.f32.mrb[0].mxu0
        %v2558 = vpop.f32.mrb[0].mxu0
        %v2559 = vadd.f32 %v2274, %v2558
        %v2560 = vpop.f32.mrb[0].mxu0
        %2561 = vmatprep.mubr.bf16.mxu0 0
        %2562 = vmatmul.mubr.bf16.gmra.mrb[0].mxu0 %v1302
        %v2563 = vpop.f32.mrb[0].mxu0
        %v2564 = vadd.f32 %v2279, %v2563
        %v2565 = vpop.f32.mrb[0].mxu0
        %v2566 = vpop.f32.mrb[0].mxu0
        %v2567 = vpop.f32.mrb[0].mxu0
        %2568 = vmatprep.mubr.bf16.mxu0 0
        %2569 = vmatmul.mubr.bf16.gmra.mrb[0].mxu0 %v1305
        %v2570 = vpop.f32.mrb[0].mxu0
        %v2571 = vadd.f32 %v2286, %v2570
        %v2572 = vpop.f32.mrb[0].mxu0
        %v2573 = vpop.f32.mrb[0].mxu0
        %v2574 = vadd.f32 %v2289, %v2573
        %v2575 = vpop.f32.mrb[0].mxu0
        %2576 = vmatprep.mubr.bf16.mxu0 0
        %2577 = vmatmul.mubr.bf16.gmra.mrb[0].mxu0 %v1308
        %v2578 = vpop.f32.mrb[0].mxu0
        %v2579 = vadd.f32 %v2294, %v2578
        %v2580 = vpop.f32.mrb[0].mxu0
        %v2581 = vpop.f32.mrb[0].mxu0
        %v2582 = vpop.f32.mrb[0].mxu0
        %2583 = vmatprep.mubr.bf16.mxu0 0
        %2584 = vmatmul.mubr.bf16.gmra.mrb[0].mxu0 %v1311
        %v2585 = vpop.f32.mrb[0].mxu0
        %v2586 = vadd.f32 %v2301, %v2585
        %v2587 = vpop.f32.mrb[0].mxu0
        %v2588 = vpop.f32.mrb[0].mxu0
        %v2589 = vadd.f32 %v2304, %v2588
        %v2590 = vpop.f32.mrb[0].mxu0
        %2591 = vmatprep.mubr.bf16.mxu0 0
        %2592 = vmatmul.mubr.bf16.gmra.mrb[0].mxu0 %v1314
        %v2593 = vpop.f32.mrb[0].mxu0
        %v2594 = vadd.f32 %v2309, %v2593
        %v2595 = vpop.f32.mrb[0].mxu0
        %v2596 = vpop.f32.mrb[0].mxu0
        %v2597 = vpop.f32.mrb[0].mxu0
        %2598 = vmatprep.mubr.bf16.mxu0 0
        %2599 = vmatmul.mubr.bf16.gmra.mrb[0].mxu0 %v1317
        %v2600 = vpop.f32.mrb[0].mxu0
        %v2601 = vadd.f32 %v2316, %v2600
        %v2602 = vpop.f32.mrb[0].mxu0
        %v2603 = vpop.f32.mrb[0].mxu0
        %v2604 = vadd.f32 %v2319, %v2603
        %v2605 = vpop.f32.mrb[0].mxu0
        %2606 = vmatprep.mubr.bf16.mxu0 0
        %2607 = vmatmul.mubr.bf16.gmra.mrb[0].mxu0 %v1320
        %v2608 = vpop.f32.mrb[0].mxu0
        %v2609 = vadd.f32 %v2324, %v2608
        %v2610 = vpop.f32.mrb[0].mxu0
        %v2611 = vpop.f32.mrb[0].mxu0
        %v2612 = vpop.f32.mrb[0].mxu0
        %2613 = vmatprep.mubr.bf16.mxu0 0
        %2614 = vmatmul.mubr.bf16.gmra.mrb[0].mxu0 %v1323
        %v2615 = vpop.f32.mrb[0].mxu0
        %v2616 = vadd.f32 %v2331, %v2615
        %v2617 = vpop.f32.mrb[0].mxu0
        %v2618 = vpop.f32.mrb[0].mxu0
        %v2619 = vadd.f32 %v2334, %v2618
        %v2620 = vpop.f32.mrb[0].mxu0
        %2621 = vmatprep.mubr.bf16.mxu0 0
        %2622 = vmatmul.mubr.bf16.gmra.mrb[0].mxu0 %v1326
        %v2623 = vpop.f32.mrb[0].mxu0
        %v2624 = vadd.f32 %v2339, %v2623
        %v2625 = vpop.f32.mrb[0].mxu0
        %v2626 = vpop.f32.mrb[0].mxu0
        %v2627 = vpop.f32.mrb[0].mxu0
        %2628 = vmatprep.mubr.bf16.mxu0 0
        %2629 = vmatmul.mubr.bf16.gmra.mrb[0].mxu0 %v1329
        %v2630 = vpop.f32.mrb[0].mxu0
        %v2631 = vadd.f32 %v2346, %v2630
        %v2632 = vpop.f32.mrb[0].mxu0
        %v2633 = vpop.f32.mrb[0].mxu0
        %v2634 = vadd.f32 %v2349, %v2633
        %v2635 = vpop.f32.mrb[0].mxu0
        %2636 = vmatprep.mubr.bf16.mxu0 0
        %2637 = vmatmul.mubr.bf16.gmra.mrb[0].mxu0 %v1332
        %v2638 = vpop.f32.mrb[0].mxu0
        %v2639 = vadd.f32 %v2354, %v2638
        %v2640 = vpop.f32.mrb[0].mxu0
        %v2641 = vpop.f32.mrb[0].mxu0
        %v2642 = vpop.f32.mrb[0].mxu0
        %2643 = vmatprep.mubr.bf16.mxu0 0
        %2644 = vmatmul.mubr.bf16.gmra.mrb[0].mxu0 %v1335
        %v2645 = vpop.f32.mrb[0].mxu0
        %v2646 = vadd.f32 %v2361, %v2645
        %v2647 = vpop.f32.mrb[0].mxu0
        %v2648 = vpop.f32.mrb[0].mxu0
        %v2649 = vadd.f32 %v2364, %v2648
        %v2650 = vpop.f32.mrb[0].mxu0
        %2651 = vmatprep.mubr.bf16.mxu0 0
        %2652 = vmatmul.mubr.bf16.gmra.mrb[0].mxu0 %v1338
        %v2653 = vpop.f32.mrb[0].mxu0
        %v2654 = vadd.f32 %v2369, %v2653
        %v2655 = vpop.f32.mrb[0].mxu0
        %v2656 = vpop.f32.mrb[0].mxu0
        %v2657 = vpop.f32.mrb[0].mxu0
        %2658 = vmatprep.mubr.bf16.mxu0 0
        %2659 = vmatmul.mubr.bf16.gmra.mrb[0].mxu0 %v1341
        %v2660 = vpop.f32.mrb[0].mxu0
        %v2661 = vadd.f32 %v2376, %v2660
        %v2662 = vpop.f32.mrb[0].mxu0
        %v2663 = vpop.f32.mrb[0].mxu0
        %v2664 = vadd.f32 %v2379, %v2663
        %v2665 = vpop.f32.mrb[0].mxu0
        %2666 = vmatprep.mubr.bf16.mxu0 0
        %2667 = vmatmul.mubr.bf16.gmra.mrb[0].mxu0 %v1344
        %v2668 = vpop.f32.mrb[0].mxu0
        %v2669 = vadd.f32 %v2384, %v2668
        %v2670 = vpop.f32.mrb[0].mxu0
        %v2671 = vpop.f32.mrb[0].mxu0
        %v2672 = vpop.f32.mrb[0].mxu0
        %2673 = vmatprep.mubr.bf16.mxu0 0
        %2674 = vmatmul.mubr.bf16.gmra.mrb[0].mxu0 %v1347
        %v2675 = vpop.f32.mrb[0].mxu0
        %v2676 = vadd.f32 %v2391, %v2675
        %v2677 = vpop.f32.mrb[0].mxu0
        %v2678 = vpop.f32.mrb[0].mxu0
        %v2679 = vadd.f32 %v2394, %v2678
        %v2680 = vpop.f32.mrb[0].mxu0
        %2681 = vmatprep.mubr.bf16.mxu0 0
        %2682 = vmatmul.mubr.bf16.gmra.mrb[0].mxu0 %v1350
        %v2683 = vpop.f32.mrb[0].mxu0
        %v2684 = vadd.f32 %v2399, %v2683
        %v2685 = vpop.f32.mrb[0].mxu0
        %v2686 = vpop.f32.mrb[0].mxu0
        %v2687 = vpop.f32.mrb[0].mxu0
        %2688 = vmatprep.mubr.bf16.mxu0 0
        %2689 = vmatmul.mubr.bf16.gmra.mrb[0].mxu0 %v1353
        %v2690 = vpop.f32.mrb[0].mxu0
        %v2691 = vadd.f32 %v2406, %v2690
        %v2692 = vpop.f32.mrb[0].mxu0
        %v2693 = vpop.f32.mrb[0].mxu0
        %v2694 = vadd.f32 %v2409, %v2693
        %v2695 = vpop.f32.mrb[0].mxu0
        %2696 = vmatprep.mubr.bf16.mxu0 0
        %2697 = vmatmul.mubr.bf16.gmra.mrb[0].mxu0 %v1356
        %v2698 = vpop.f32.mrb[0].mxu0
        %v2699 = vadd.f32 %v2414, %v2698
        %v2700 = vpop.f32.mrb[0].mxu0
        %v2701 = vpop.f32.mrb[0].mxu0
        %v2702 = vpop.f32.mrb[0].mxu0
        %2703 = vmatprep.mubr.bf16.mxu0 0
        %2704 = vmatmul.mubr.bf16.gmra.mrb[0].mxu0 %v1359
        %v2705 = vpop.f32.mrb[0].mxu0
        %v2706 = vadd.f32 %v2421, %v2705
        %v2707 = vpop.f32.mrb[0].mxu0
        %v2708 = vpop.f32.mrb[0].mxu0
        %v2709 = vadd.f32 %v2424, %v2708
        %v2710 = vpop.f32.mrb[0].mxu0
        %2711 = vmatprep.mubr.bf16.mxu0 0
        %2712 = vmatmul.mubr.bf16.gmra.mrb[0].mxu0 %v1362
        %v2713 = vpop.f32.mrb[0].mxu0
        %v2714 = vadd.f32 %v2429, %v2713
        %v2715 = vpop.f32.mrb[0].mxu0
        %v2716 = vpop.f32.mrb[0].mxu0
        %v2717 = vpop.f32.mrb[0].mxu0
        %2718 = vmatprep.mubr.bf16.mxu0 0
        %2719 = vmatmul.mubr.bf16.gmra.mrb[0].mxu0 %v1365
        %v2720 = vpop.f32.mrb[0].mxu0
        %v2721 = vadd.f32 %v2436, %v2720
        %v2722 = vpop.f32.mrb[0].mxu0
        %v2723 = vpop.f32.mrb[0].mxu0
        %v2724 = vadd.f32 %v2439, %v2723
        %v2725 = vpop.f32.mrb[0].mxu0
        %2726 = vmatprep.mubr.bf16.mxu0 0
        %2727 = vmatmul.mubr.bf16.gmra.mrb[0].mxu0 %v1368
        %v2728 = vpop.f32.mrb[0].mxu0
        %v2729 = vadd.f32 %v2444, %v2728
        %v2730 = vpop.f32.mrb[0].mxu0
        %v2731 = vpop.f32.mrb[0].mxu0
        %v2732 = vpop.f32.mrb[0].mxu0
        %2733 = vmatprep.mubr.bf16.mxu0 0
        %2734 = vmatmul.mubr.bf16.gmra.mrb[0].mxu0 %v1371
        %v2735 = vpop.f32.mrb[0].mxu0
        %v2736 = vadd.f32 %v2451, %v2735
        %v2737 = vpop.f32.mrb[0].mxu0
        %v2738 = vpop.f32.mrb[0].mxu0
        %v2739 = vadd.f32 %v2454, %v2738
        %v2740 = vpop.f32.mrb[0].mxu0
        %2741 = vmatprep.mubr.bf16.mxu0 0
        %2742 = vmatmul.mubr.bf16.gmra.mrb[0].mxu0 %v1374
        %v2743 = vpop.f32.mrb[0].mxu0
        %v2744 = vadd.f32 %v2459, %v2743
        %v2745 = vpop.f32.mrb[0].mxu0
        %v2746 = vpop.f32.mrb[0].mxu0
        %v2747 = vpop.f32.mrb[0].mxu0
        %2748 = vmatprep.mubr.bf16.mxu0 0
        %2749 = vmatmul.mubr.bf16.gmra.mrb[0].mxu0 %v1377
        %v2750 = vpop.f32.mrb[0].mxu0
        %v2751 = vadd.f32 %v2466, %v2750
        %v2752 = vpop.f32.mrb[0].mxu0
        %v2753 = vpop.f32.mrb[0].mxu0
        %v2754 = vadd.f32 %v2469, %v2753
        %v2755 = vpop.f32.mrb[0].mxu0
        %2756 = vmatprep.mubr.bf16.mxu0 0
        %2757 = vmatmul.mubr.bf16.gmra.mrb[0].mxu0 %v1380
        %v2758 = vpop.f32.mrb[0].mxu0
        %v2759 = vadd.f32 %v2474, %v2758
        %v2760 = vpop.f32.mrb[0].mxu0
        %v2761 = vpop.f32.mrb[0].mxu0
        %v2762 = vpop.f32.mrb[0].mxu0
        %2763 = vmatprep.mubr.bf16.mxu0 0
        %2764 = vmatmul.mubr.bf16.gmra.mrb[0].mxu0 %v1383
        %v2765 = vpop.f32.mrb[0].mxu0
        %v2766 = vadd.f32 %v2481, %v2765
        %v2767 = vpop.f32.mrb[0].mxu0
        %v2768 = vpop.f32.mrb[0].mxu0
        %v2769 = vadd.f32 %v2484, %v2768
        %v2770 = vpop.f32.mrb[0].mxu0
        %2771 = vmatprep.mubr.bf16.mxu0 0
        %2772 = vmatmul.mubr.bf16.gmra.mrb[0].mxu0 %v1386
        %v2773 = vpop.f32.mrb[0].mxu0
        %v2774 = vadd.f32 %v2489, %v2773
        %v2775 = vpop.f32.mrb[0].mxu0
        %v2776 = vpop.f32.mrb[0].mxu0
        %v2777 = vpop.f32.mrb[0].mxu0
        %2778 = vdwg.mxu0
        %s2779 = scalar_lea.vmem [#allocation2], 32
        %v2780 = vld [vmem:[%s2779] sm:$0xff]
        %v2781 = vld [vmem:[%s2779 + $0x8] sm:$0xff]
        %v2782 = vld [vmem:[%s2779 + $0x10] sm:$0xff]
        %v2783 = vld [vmem:[%s2779 + $0x18] sm:$0xff]
        %v2784 = vld [vmem:[%s2779 + $0x20] sm:$0xff]
        %v2785 = vld [vmem:[%s2779 + $0x28] sm:$0xff]
        %v2786 = vld [vmem:[%s2779 + $0x30] sm:$0xff]
        %v2787 = vld [vmem:[%s2779 + $0x38] sm:$0xff]
        %v2788 = vld [vmem:[%s2779 + $0x40] sm:$0xff]
        %v2789 = vld [vmem:[%s2779 + $0x48] sm:$0xff]
        %v2790 = vld [vmem:[%s2779 + $0x50] sm:$0xff]
        %v2791 = vld [vmem:[%s2779 + $0x58] sm:$0xff]
        %v2792 = vld [vmem:[%s2779 + $0x60] sm:$0xff]
        %v2793 = vld [vmem:[%s2779 + $0x68] sm:$0xff]
        %v2794 = vld [vmem:[%s2779 + $0x70] sm:$0xff]
        %v2795 = vld [vmem:[%s2779 + $0x78] sm:$0xff]
        %v2796 = vld [vmem:[%s2779 + $0x80] sm:$0xff]
        %v2797 = vld [vmem:[%s2779 + $0x88] sm:$0xff]
        %v2798 = vld [vmem:[%s2779 + $0x90] sm:$0xff]
        %v2799 = vld [vmem:[%s2779 + $0x98] sm:$0xff]
        %v2800 = vld [vmem:[%s2779 + $0xa0] sm:$0xff]
        %v2801 = vld [vmem:[%s2779 + $0xa8] sm:$0xff]
        %v2802 = vld [vmem:[%s2779 + $0xb0] sm:$0xff]
        %v2803 = vld [vmem:[%s2779 + $0xb8] sm:$0xff]
        %v2804 = vld [vmem:[%s2779 + $0xc0] sm:$0xff]
        %v2805 = vld [vmem:[%s2779 + $0xc8] sm:$0xff]
        %v2806 = vld [vmem:[%s2779 + $0xd0] sm:$0xff]
        %v2807 = vld [vmem:[%s2779 + $0xd8] sm:$0xff]
        %v2808 = vld [vmem:[%s2779 + $0xe0] sm:$0xff]
        %v2809 = vld [vmem:[%s2779 + $0xe8] sm:$0xff]
        %v2810 = vld [vmem:[%s2779 + $0xf0] sm:$0xff]
        %v2811 = vld [vmem:[%s2779 + $0xf8] sm:$0xff]
        %s2812 = scalar_lea.vmem [#allocation6], 96
        %v2813 = vld [vmem:[%s2812] sm:$0xf]
        %v2814 = vld [vmem:[%s2812 + $0x4] sm:$0xf]
        %v2815 = vld [vmem:[%s2812 + $0x8] sm:$0xf]
        %v2816 = vld [vmem:[%s2812 + $0xc] sm:$0xf]
        %v2821 = vunpack.c.l.b16 %v2813
        %v2822 = vunpack.c.l.b16 %v2814
        %v2823 = vunpack.c.l.b16 %v2815
        %v2824 = vunpack.c.l.b16 %v2816
        %v2825 = vpack.c.b16 %v2822, %v2821
        %v2826 = vpack.c.b16 %v2824, %v2823
        %v2830 = vsel %vm660, %v2780, 0
        %v2833 = vsel %vm660, %v2781, 0
        %v2836 = vsel %vm660, %v2782, 0
        %v2839 = vsel %vm660, %v2783, 0
        %v2842 = vsel %vm660, %v2784, 0
        %v2845 = vsel %vm660, %v2785, 0
        %v2848 = vsel %vm660, %v2786, 0
        %v2851 = vsel %vm660, %v2787, 0
        %v2854 = vsel %vm660, %v2788, 0
        %v2857 = vsel %vm660, %v2789, 0
        %v2860 = vsel %vm660, %v2790, 0
        %v2863 = vsel %vm660, %v2791, 0
        %v2866 = vsel %vm660, %v2792, 0
        %v2869 = vsel %vm660, %v2793, 0
        %v2872 = vsel %vm660, %v2794, 0
        %v2875 = vsel %vm660, %v2795, 0
        %v2878 = vsel %vm660, %v2796, 0
        %v2881 = vsel %vm660, %v2797, 0
        %v2884 = vsel %vm660, %v2798, 0
        %v2887 = vsel %vm660, %v2799, 0
        %v2890 = vsel %vm660, %v2800, 0
        %v2893 = vsel %vm660, %v2801, 0
        %v2896 = vsel %vm660, %v2802, 0
        %v2899 = vsel %vm660, %v2803, 0
        %v2902 = vsel %vm660, %v2804, 0
        %v2905 = vsel %vm660, %v2805, 0
        %v2908 = vsel %vm660, %v2806, 0
        %v2911 = vsel %vm660, %v2807, 0
        %v2914 = vsel %vm660, %v2808, 0
        %v2917 = vsel %vm660, %v2809, 0
        %v2920 = vsel %vm660, %v2810, 0
        %v2923 = vsel %vm660, %v2811, 0
        %2925 = vmatprep.subr.bf16.mxu0 0
        %2926 = vmatpush1.bf16.msra.mxu0 %v2825
        %2927 = vmatprep.subr.bf16.mxu0 0
        %2928 = vmatpush1.bf16.msra.mxu0 %v2826
        %2929 = vmatprep.subr.bf16.mxu0 0
        %2930 = vmatpush1.bf16.msra.mxu0 0
        %2931 = vmatprep.subr.bf16.mxu0 0
        %2932 = vmatpush1.bf16.msra.mxu0 0
        %2933 = vmatprep.subr.bf16.mxu0 0
        %2934 = vmatpush1.bf16.msra.mxu0 0
        %2935 = vmatprep.subr.bf16.mxu0 0
        %2936 = vmatpush1.bf16.msra.mxu0 0
        %2937 = vmatprep.subr.bf16.mxu0 0
        %2938 = vmatpush1.bf16.msra.mxu0 0
        %2939 = vmatprep.subr.bf16.mxu0 0
        %2940 = vmatpush1.bf16.msra.mxu0 0
        %2941 = vmatprep.subr.bf16.mxu0 0
        %2942 = vmatpush1.bf16.msra.mxu0 0
        %2943 = vmatprep.subr.bf16.mxu0 0
        %2944 = vmatpush1.bf16.msra.mxu0 0
        %2945 = vmatprep.subr.bf16.mxu0 0
        %2946 = vmatpush1.bf16.msra.mxu0 0
        %2947 = vmatprep.subr.bf16.mxu0 0
        %2948 = vmatpush1.bf16.msra.mxu0 0
        %2949 = vmatprep.subr.bf16.mxu0 0
        %2950 = vmatpush1.bf16.msra.mxu0 0
        %2951 = vmatprep.subr.bf16.mxu0 0
        %2952 = vmatpush1.bf16.msra.mxu0 0
        %2953 = vmatprep.subr.bf16.mxu0 0
        %2954 = vmatpush1.bf16.msra.mxu0 0
        %2955 = vmatprep.subr.bf16.mxu0 0
        %2956 = vmatpush1.bf16.msra.mxu0 0
        %2957 = vmatprep.mubr.bf16.mxu0 0
        %2958 = vmatmul.mubr.bf16.gmra.mrb[0].mxu0 %v2830
        %v2959 = vpop.f32.mrb[0].mxu0
        %v2960 = vadd.f32 0.0, %v2959
        %v2961 = vpop.f32.mrb[0].mxu0
        %v2962 = vpop.f32.mrb[0].mxu0
        %v2963 = vadd.f32 0.0, %v2962
        %v2964 = vpop.f32.mrb[0].mxu0
        %2965 = vmatprep.mubr.bf16.mxu0 0
        %2966 = vmatmul.mubr.bf16.gmra.mrb[0].mxu0 %v2833
        %v2967 = vpop.f32.mrb[0].mxu0
        %v2968 = vpop.f32.mrb[0].mxu0
        %v2969 = vpop.f32.mrb[0].mxu0
        %v2970 = vadd.f32 0.0, %v2969
        %v2971 = vpop.f32.mrb[0].mxu0
        %2972 = vmatprep.mubr.bf16.mxu0 0
        %2973 = vmatmul.mubr.bf16.gmra.mrb[0].mxu0 %v2836
        %v2974 = vpop.f32.mrb[0].mxu0
        %v2975 = vadd.f32 0.0, %v2974
        %v2976 = vpop.f32.mrb[0].mxu0
        %v2977 = vpop.f32.mrb[0].mxu0
        %v2978 = vadd.f32 0.0, %v2977
        %v2979 = vpop.f32.mrb[0].mxu0
        %2980 = vmatprep.mubr.bf16.mxu0 0
        %2981 = vmatmul.mubr.bf16.gmra.mrb[0].mxu0 %v2839
        %v2982 = vpop.f32.mrb[0].mxu0
        %v2983 = vpop.f32.mrb[0].mxu0
        %v2984 = vpop.f32.mrb[0].mxu0
        %v2985 = vadd.f32 0.0, %v2984
        %v2986 = vpop.f32.mrb[0].mxu0
        %2987 = vmatprep.mubr.bf16.mxu0 0
        %2988 = vmatmul.mubr.bf16.gmra.mrb[0].mxu0 %v2842
        %v2989 = vpop.f32.mrb[0].mxu0
        %v2990 = vadd.f32 0.0, %v2989
        %v2991 = vpop.f32.mrb[0].mxu0
        %v2992 = vpop.f32.mrb[0].mxu0
        %v2993 = vadd.f32 0.0, %v2992
        %v2994 = vpop.f32.mrb[0].mxu0
        %2995 = vmatprep.mubr.bf16.mxu0 0
        %2996 = vmatmul.mubr.bf16.gmra.mrb[0].mxu0 %v2845
        %v2997 = vpop.f32.mrb[0].mxu0
        %v2998 = vpop.f32.mrb[0].mxu0
        %v2999 = vpop.f32.mrb[0].mxu0
        %v3000 = vadd.f32 0.0, %v2999
        %v3001 = vpop.f32.mrb[0].mxu0
        %3002 = vmatprep.mubr.bf16.mxu0 0
        %3003 = vmatmul.mubr.bf16.gmra.mrb[0].mxu0 %v2848
        %v3004 = vpop.f32.mrb[0].mxu0
        %v3005 = vadd.f32 0.0, %v3004
        %v3006 = vpop.f32.mrb[0].mxu0
        %v3007 = vpop.f32.mrb[0].mxu0
        %v3008 = vadd.f32 0.0, %v3007
        %v3009 = vpop.f32.mrb[0].mxu0
        %3010 = vmatprep.mubr.bf16.mxu0 0
        %3011 = vmatmul.mubr.bf16.gmra.mrb[0].mxu0 %v2851
        %v3012 = vpop.f32.mrb[0].mxu0
        %v3013 = vpop.f32.mrb[0].mxu0
        %v3014 = vpop.f32.mrb[0].mxu0
        %v3015 = vadd.f32 0.0, %v3014
        %v3016 = vpop.f32.mrb[0].mxu0
        %3017 = vmatprep.mubr.bf16.mxu0 0
        %3018 = vmatmul.mubr.bf16.gmra.mrb[0].mxu0 %v2854
        %v3019 = vpop.f32.mrb[0].mxu0
        %v3020 = vadd.f32 0.0, %v3019
        %v3021 = vpop.f32.mrb[0].mxu0
        %v3022 = vpop.f32.mrb[0].mxu0
        %v3023 = vadd.f32 0.0, %v3022
        %v3024 = vpop.f32.mrb[0].mxu0
        %3025 = vmatprep.mubr.bf16.mxu0 0
        %3026 = vmatmul.mubr.bf16.gmra.mrb[0].mxu0 %v2857
        %v3027 = vpop.f32.mrb[0].mxu0
        %v3028 = vpop.f32.mrb[0].mxu0
        %v3029 = vpop.f32.mrb[0].mxu0
        %v3030 = vadd.f32 0.0, %v3029
        %v3031 = vpop.f32.mrb[0].mxu0
        %3032 = vmatprep.mubr.bf16.mxu0 0
        %3033 = vmatmul.mubr.bf16.gmra.mrb[0].mxu0 %v2860
        %v3034 = vpop.f32.mrb[0].mxu0
        %v3035 = vadd.f32 0.0, %v3034
        %v3036 = vpop.f32.mrb[0].mxu0
        %v3037 = vpop.f32.mrb[0].mxu0
        %v3038 = vadd.f32 0.0, %v3037
        %v3039 = vpop.f32.mrb[0].mxu0
        %3040 = vmatprep.mubr.bf16.mxu0 0
        %3041 = vmatmul.mubr.bf16.gmra.mrb[0].mxu0 %v2863
        %v3042 = vpop.f32.mrb[0].mxu0
        %v3043 = vpop.f32.mrb[0].mxu0
        %v3044 = vpop.f32.mrb[0].mxu0
        %v3045 = vadd.f32 0.0, %v3044
        %v3046 = vpop.f32.mrb[0].mxu0
        %3047 = vmatprep.mubr.bf16.mxu0 0
        %3048 = vmatmul.mubr.bf16.gmra.mrb[0].mxu0 %v2866
        %v3049 = vpop.f32.mrb[0].mxu0
        %v3050 = vadd.f32 0.0, %v3049
        %v3051 = vpop.f32.mrb[0].mxu0
        %v3052 = vpop.f32.mrb[0].mxu0
        %v3053 = vadd.f32 0.0, %v3052
        %v3054 = vpop.f32.mrb[0].mxu0
        %3055 = vmatprep.mubr.bf16.mxu0 0
        %3056 = vmatmul.mubr.bf16.gmra.mrb[0].mxu0 %v2869
        %v3057 = vpop.f32.mrb[0].mxu0
        %v3058 = vpop.f32.mrb[0].mxu0
        %v3059 = vpop.f32.mrb[0].mxu0
        %v3060 = vadd.f32 0.0, %v3059
        %v3061 = vpop.f32.mrb[0].mxu0
        %3062 = vmatprep.mubr.bf16.mxu0 0
        %3063 = vmatmul.mubr.bf16.gmra.mrb[0].mxu0 %v2872
        %v3064 = vpop.f32.mrb[0].mxu0
        %v3065 = vadd.f32 0.0, %v3064
        %v3066 = vpop.f32.mrb[0].mxu0
        %v3067 = vpop.f32.mrb[0].mxu0
        %v3068 = vadd.f32 0.0, %v3067
        %v3069 = vpop.f32.mrb[0].mxu0
        %3070 = vmatprep.mubr.bf16.mxu0 0
        %3071 = vmatmul.mubr.bf16.gmra.mrb[0].mxu0 %v2875
        %v3072 = vpop.f32.mrb[0].mxu0
        %v3073 = vpop.f32.mrb[0].mxu0
        %v3074 = vpop.f32.mrb[0].mxu0
        %v3075 = vadd.f32 0.0, %v3074
        %v3076 = vpop.f32.mrb[0].mxu0
        %3077 = vmatprep.mubr.bf16.mxu0 0
        %3078 = vmatmul.mubr.bf16.gmra.mrb[0].mxu0 %v2878
        %v3079 = vpop.f32.mrb[0].mxu0
        %v3080 = vadd.f32 0.0, %v3079
        %v3081 = vpop.f32.mrb[0].mxu0
        %v3082 = vpop.f32.mrb[0].mxu0
        %v3083 = vadd.f32 0.0, %v3082
        %v3084 = vpop.f32.mrb[0].mxu0
        %3085 = vmatprep.mubr.bf16.mxu0 0
        %3086 = vmatmul.mubr.bf16.gmra.mrb[0].mxu0 %v2881
        %v3087 = vpop.f32.mrb[0].mxu0
        %v3088 = vpop.f32.mrb[0].mxu0
        %v3089 = vpop.f32.mrb[0].mxu0
        %v3090 = vadd.f32 0.0, %v3089
        %v3091 = vpop.f32.mrb[0].mxu0
        %3092 = vmatprep.mubr.bf16.mxu0 0
        %3093 = vmatmul.mubr.bf16.gmra.mrb[0].mxu0 %v2884
        %v3094 = vpop.f32.mrb[0].mxu0
        %v3095 = vadd.f32 0.0, %v3094
        %v3096 = vpop.f32.mrb[0].mxu0
        %v3097 = vpop.f32.mrb[0].mxu0
        %v3098 = vadd.f32 0.0, %v3097
        %v3099 = vpop.f32.mrb[0].mxu0
        %3100 = vmatprep.mubr.bf16.mxu0 0
        %3101 = vmatmul.mubr.bf16.gmra.mrb[0].mxu0 %v2887
        %v3102 = vpop.f32.mrb[0].mxu0
        %v3103 = vpop.f32.mrb[0].mxu0
        %v3104 = vpop.f32.mrb[0].mxu0
        %v3105 = vadd.f32 0.0, %v3104
        %v3106 = vpop.f32.mrb[0].mxu0
        %3107 = vmatprep.mubr.bf16.mxu0 0
        %3108 = vmatmul.mubr.bf16.gmra.mrb[0].mxu0 %v2890
        %v3109 = vpop.f32.mrb[0].mxu0
        %v3110 = vadd.f32 0.0, %v3109
        %v3111 = vpop.f32.mrb[0].mxu0
        %v3112 = vpop.f32.mrb[0].mxu0
        %v3113 = vadd.f32 0.0, %v3112
        %v3114 = vpop.f32.mrb[0].mxu0
        %3115 = vmatprep.mubr.bf16.mxu0 0
        %3116 = vmatmul.mubr.bf16.gmra.mrb[0].mxu0 %v2893
        %v3117 = vpop.f32.mrb[0].mxu0
        %v3118 = vpop.f32.mrb[0].mxu0
        %v3119 = vpop.f32.mrb[0].mxu0
        %v3120 = vadd.f32 0.0, %v3119
        %v3121 = vpop.f32.mrb[0].mxu0
        %3122 = vmatprep.mubr.bf16.mxu0 0
        %3123 = vmatmul.mubr.bf16.gmra.mrb[0].mxu0 %v2896
        %v3124 = vpop.f32.mrb[0].mxu0
        %v3125 = vadd.f32 0.0, %v3124
        %v3126 = vpop.f32.mrb[0].mxu0
        %v3127 = vpop.f32.mrb[0].mxu0
        %v3128 = vadd.f32 0.0, %v3127
        %v3129 = vpop.f32.mrb[0].mxu0
        %3130 = vmatprep.mubr.bf16.mxu0 0
        %3131 = vmatmul.mubr.bf16.gmra.mrb[0].mxu0 %v2899
        %v3132 = vpop.f32.mrb[0].mxu0
        %v3133 = vpop.f32.mrb[0].mxu0
        %v3134 = vpop.f32.mrb[0].mxu0
        %v3135 = vadd.f32 0.0, %v3134
        %v3136 = vpop.f32.mrb[0].mxu0
        %3137 = vmatprep.mubr.bf16.mxu0 0
        %3138 = vmatmul.mubr.bf16.gmra.mrb[0].mxu0 %v2902
        %v3139 = vpop.f32.mrb[0].mxu0
        %v3140 = vadd.f32 0.0, %v3139
        %v3141 = vpop.f32.mrb[0].mxu0
        %v3142 = vpop.f32.mrb[0].mxu0
        %v3143 = vadd.f32 0.0, %v3142
        %v3144 = vpop.f32.mrb[0].mxu0
        %3145 = vmatprep.mubr.bf16.mxu0 0
        %3146 = vmatmul.mubr.bf16.gmra.mrb[0].mxu0 %v2905
        %v3147 = vpop.f32.mrb[0].mxu0
        %v3148 = vpop.f32.mrb[0].mxu0
        %v3149 = vpop.f32.mrb[0].mxu0
        %v3150 = vadd.f32 0.0, %v3149
        %v3151 = vpop.f32.mrb[0].mxu0
        %3152 = vmatprep.mubr.bf16.mxu0 0
        %3153 = vmatmul.mubr.bf16.gmra.mrb[0].mxu0 %v2908
        %v3154 = vpop.f32.mrb[0].mxu0
        %v3155 = vadd.f32 0.0, %v3154
        %v3156 = vpop.f32.mrb[0].mxu0
        %v3157 = vpop.f32.mrb[0].mxu0
        %v3158 = vadd.f32 0.0, %v3157
        %v3159 = vpop.f32.mrb[0].mxu0
        %3160 = vmatprep.mubr.bf16.mxu0 0
        %3161 = vmatmul.mubr.bf16.gmra.mrb[0].mxu0 %v2911
        %v3162 = vpop.f32.mrb[0].mxu0
        %v3163 = vpop.f32.mrb[0].mxu0
        %v3164 = vpop.f32.mrb[0].mxu0
        %v3165 = vadd.f32 0.0, %v3164
        %v3166 = vpop.f32.mrb[0].mxu0
        %3167 = vmatprep.mubr.bf16.mxu0 0
        %3168 = vmatmul.mubr.bf16.gmra.mrb[0].mxu0 %v2914
        %v3169 = vpop.f32.mrb[0].mxu0
        %v3170 = vadd.f32 0.0, %v3169
        %v3171 = vpop.f32.mrb[0].mxu0
        %v3172 = vpop.f32.mrb[0].mxu0
        %v3173 = vadd.f32 0.0, %v3172
        %v3174 = vpop.f32.mrb[0].mxu0
        %3175 = vmatprep.mubr.bf16.mxu0 0
        %3176 = vmatmul.mubr.bf16.gmra.mrb[0].mxu0 %v2917
        %v3177 = vpop.f32.mrb[0].mxu0
        %v3178 = vpop.f32.mrb[0].mxu0
        %v3179 = vpop.f32.mrb[0].mxu0
        %v3180 = vadd.f32 0.0, %v3179
        %v3181 = vpop.f32.mrb[0].mxu0
        %3182 = vmatprep.mubr.bf16.mxu0 0
        %3183 = vmatmul.mubr.bf16.gmra.mrb[0].mxu0 %v2920
        %v3184 = vpop.f32.mrb[0].mxu0
        %v3185 = vadd.f32 0.0, %v3184
        %v3186 = vpop.f32.mrb[0].mxu0
        %v3187 = vpop.f32.mrb[0].mxu0
        %v3188 = vadd.f32 0.0, %v3187
        %v3189 = vpop.f32.mrb[0].mxu0
        %3190 = vmatprep.mubr.bf16.mxu0 0
        %3191 = vmatmul.mubr.bf16.gmra.mrb[0].mxu0 %v2923
        %v3192 = vpop.f32.mrb[0].mxu0
        %v3193 = vpop.f32.mrb[0].mxu0
        %v3194 = vpop.f32.mrb[0].mxu0
        %v3195 = vadd.f32 0.0, %v3194
        %v3196 = vpop.f32.mrb[0].mxu0
        %3197 = vdwg.mxu0
        %v3198 = vadd.f32 %v1423, %v2960
        %v3199 = vadd.f32 %v1426, %v2963
        %v3200 = vadd.f32 %v1433, %v2970
        %v3201 = vadd.f32 %v1438, %v2975
        %v3202 = vadd.f32 %v1441, %v2978
        %v3203 = vadd.f32 %v1448, %v2985
        %v3204 = vadd.f32 %v1453, %v2990
        %v3205 = vadd.f32 %v1456, %v2993
        %v3206 = vadd.f32 %v1463, %v3000
        %v3207 = vadd.f32 %v1468, %v3005
        %v3208 = vadd.f32 %v1471, %v3008
        %v3209 = vadd.f32 %v1478, %v3015
        %v3210 = vadd.f32 %v1483, %v3020
        %v3211 = vadd.f32 %v1486, %v3023
        %v3212 = vadd.f32 %v1493, %v3030
        %v3213 = vadd.f32 %v1498, %v3035
        %v3214 = vadd.f32 %v1501, %v3038
        %v3215 = vadd.f32 %v1508, %v3045
        %v3216 = vadd.f32 %v1513, %v3050
        %v3217 = vadd.f32 %v1516, %v3053
        %v3218 = vadd.f32 %v1523, %v3060
        %v3219 = vadd.f32 %v1528, %v3065
        %v3220 = vadd.f32 %v1531, %v3068
        %v3221 = vadd.f32 %v1538, %v3075
        %v3222 = vadd.f32 %v1543, %v3080
        %v3223 = vadd.f32 %v1546, %v3083
        %v3224 = vadd.f32 %v1553, %v3090
        %v3225 = vadd.f32 %v1558, %v3095
        %v3226 = vadd.f32 %v1561, %v3098
        %v3227 = vadd.f32 %v1568, %v3105
        %v3228 = vadd.f32 %v1573, %v3110
        %v3229 = vadd.f32 %v1576, %v3113
        %v3230 = vadd.f32 %v1583, %v3120
        %v3231 = vadd.f32 %v1588, %v3125
        %v3232 = vadd.f32 %v1591, %v3128
        %v3233 = vadd.f32 %v1598, %v3135
        %v3234 = vadd.f32 %v1603, %v3140
        %v3235 = vadd.f32 %v1606, %v3143
        %v3236 = vadd.f32 %v1613, %v3150
        %v3237 = vadd.f32 %v1618, %v3155
        %v3238 = vadd.f32 %v1621, %v3158
        %v3239 = vadd.f32 %v1628, %v3165
        %v3240 = vadd.f32 %v1633, %v3170
        %v3241 = vadd.f32 %v1636, %v3173
        %v3242 = vadd.f32 %v1643, %v3180
        %v3243 = vadd.f32 %v1648, %v3185
        %v3244 = vadd.f32 %v1651, %v3188
        %v3245 = vadd.f32 %v1658, %v3195
        %s3246 = scalar_lea.vmem [#allocation6], 112
        %v3247 = vld [vmem:[%s3246] sm:$0xf]
        %v3248 = vld [vmem:[%s3246 + $0x4] sm:$0xf]
        %v3249 = vld [vmem:[%s3246 + $0x8] sm:$0xf]
        %v3250 = vld [vmem:[%s3246 + $0xc] sm:$0xf]
        %v3255 = vunpack.c.l.b16 %v3247
        %v3256 = vunpack.c.l.b16 %v3248
        %v3257 = vunpack.c.l.b16 %v3249
        %v3258 = vunpack.c.l.b16 %v3250
        %v3259 = vpack.c.b16 %v3256, %v3255
        %v3260 = vpack.c.b16 %v3258, %v3257
        %3263 = vmatprep.subr.bf16.mxu0 0
        %3264 = vmatpush1.bf16.msra.mxu0 %v3259
        %3265 = vmatprep.subr.bf16.mxu0 0
        %3266 = vmatpush1.bf16.msra.mxu0 %v3260
        %3267 = vmatprep.subr.bf16.mxu0 0
        %3268 = vmatpush1.bf16.msra.mxu0 0
        %3269 = vmatprep.subr.bf16.mxu0 0
        %3270 = vmatpush1.bf16.msra.mxu0 0
        %3271 = vmatprep.subr.bf16.mxu0 0
        %3272 = vmatpush1.bf16.msra.mxu0 0
        %3273 = vmatprep.subr.bf16.mxu0 0
        %3274 = vmatpush1.bf16.msra.mxu0 0
        %3275 = vmatprep.subr.bf16.mxu0 0
        %3276 = vmatpush1.bf16.msra.mxu0 0
        %3277 = vmatprep.subr.bf16.mxu0 0
        %3278 = vmatpush1.bf16.msra.mxu0 0
        %3279 = vmatprep.subr.bf16.mxu0 0
        %3280 = vmatpush1.bf16.msra.mxu0 0
        %3281 = vmatprep.subr.bf16.mxu0 0
        %3282 = vmatpush1.bf16.msra.mxu0 0
        %3283 = vmatprep.subr.bf16.mxu0 0
        %3284 = vmatpush1.bf16.msra.mxu0 0
        %3285 = vmatprep.subr.bf16.mxu0 0
        %3286 = vmatpush1.bf16.msra.mxu0 0
        %3287 = vmatprep.subr.bf16.mxu0 0
        %3288 = vmatpush1.bf16.msra.mxu0 0
        %3289 = vmatprep.subr.bf16.mxu0 0
        %3290 = vmatpush1.bf16.msra.mxu0 0
        %3291 = vmatprep.subr.bf16.mxu0 0
        %3292 = vmatpush1.bf16.msra.mxu0 0
        %3293 = vmatprep.subr.bf16.mxu0 0
        %3294 = vmatpush1.bf16.msra.mxu0 0
        %3295 = vmatprep.mubr.bf16.mxu0 0
        %3296 = vmatmul.mubr.bf16.gmra.mrb[0].mxu0 %v2830
        %v3297 = vpop.f32.mrb[0].mxu0
        %v3298 = vadd.f32 0.0, %v3297
        %v3299 = vpop.f32.mrb[0].mxu0
        %v3300 = vpop.f32.mrb[0].mxu0
        %v3301 = vadd.f32 0.0, %v3300
        %v3302 = vpop.f32.mrb[0].mxu0
        %3303 = vmatprep.mubr.bf16.mxu0 0
        %3304 = vmatmul.mubr.bf16.gmra.mrb[0].mxu0 %v2833
        %v3305 = vpop.f32.mrb[0].mxu0
        %v3306 = vpop.f32.mrb[0].mxu0
        %v3307 = vpop.f32.mrb[0].mxu0
        %v3308 = vpop.f32.mrb[0].mxu0
        %3309 = vmatprep.mubr.bf16.mxu0 0
        %3310 = vmatmul.mubr.bf16.gmra.mrb[0].mxu0 %v2836
        %v3311 = vpop.f32.mrb[0].mxu0
        %v3312 = vadd.f32 0.0, %v3311
        %v3313 = vpop.f32.mrb[0].mxu0
        %v3314 = vpop.f32.mrb[0].mxu0
        %v3315 = vadd.f32 0.0, %v3314
        %v3316 = vpop.f32.mrb[0].mxu0
        %3317 = vmatprep.mubr.bf16.mxu0 0
        %3318 = vmatmul.mubr.bf16.gmra.mrb[0].mxu0 %v2839
        %v3319 = vpop.f32.mrb[0].mxu0
        %v3320 = vpop.f32.mrb[0].mxu0
        %v3321 = vpop.f32.mrb[0].mxu0
        %v3322 = vpop.f32.mrb[0].mxu0
        %3323 = vmatprep.mubr.bf16.mxu0 0
        %3324 = vmatmul.mubr.bf16.gmra.mrb[0].mxu0 %v2842
        %v3325 = vpop.f32.mrb[0].mxu0
        %v3326 = vadd.f32 0.0, %v3325
        %v3327 = vpop.f32.mrb[0].mxu0
        %v3328 = vpop.f32.mrb[0].mxu0
        %v3329 = vadd.f32 0.0, %v3328
        %v3330 = vpop.f32.mrb[0].mxu0
        %3331 = vmatprep.mubr.bf16.mxu0 0
        %3332 = vmatmul.mubr.bf16.gmra.mrb[0].mxu0 %v2845
        %v3333 = vpop.f32.mrb[0].mxu0
        %v3334 = vpop.f32.mrb[0].mxu0
        %v3335 = vpop.f32.mrb[0].mxu0
        %v3336 = vpop.f32.mrb[0].mxu0
        %3337 = vmatprep.mubr.bf16.mxu0 0
        %3338 = vmatmul.mubr.bf16.gmra.mrb[0].mxu0 %v2848
        %v3339 = vpop.f32.mrb[0].mxu0
        %v3340 = vadd.f32 0.0, %v3339
        %v3341 = vpop.f32.mrb[0].mxu0
        %v3342 = vpop.f32.mrb[0].mxu0
        %v3343 = vadd.f32 0.0, %v3342
        %v3344 = vpop.f32.mrb[0].mxu0
        %3345 = vmatprep.mubr.bf16.mxu0 0
        %3346 = vmatmul.mubr.bf16.gmra.mrb[0].mxu0 %v2851
        %v3347 = vpop.f32.mrb[0].mxu0
        %v3348 = vpop.f32.mrb[0].mxu0
        %v3349 = vpop.f32.mrb[0].mxu0
        %v3350 = vpop.f32.mrb[0].mxu0
        %3351 = vmatprep.mubr.bf16.mxu0 0
        %3352 = vmatmul.mubr.bf16.gmra.mrb[0].mxu0 %v2854
        %v3353 = vpop.f32.mrb[0].mxu0
        %v3354 = vadd.f32 0.0, %v3353
        %v3355 = vpop.f32.mrb[0].mxu0
        %v3356 = vpop.f32.mrb[0].mxu0
        %v3357 = vadd.f32 0.0, %v3356
        %v3358 = vpop.f32.mrb[0].mxu0
        %3359 = vmatprep.mubr.bf16.mxu0 0
        %3360 = vmatmul.mubr.bf16.gmra.mrb[0].mxu0 %v2857
        %v3361 = vpop.f32.mrb[0].mxu0
        %v3362 = vpop.f32.mrb[0].mxu0
        %v3363 = vpop.f32.mrb[0].mxu0
        %v3364 = vpop.f32.mrb[0].mxu0
        %3365 = vmatprep.mubr.bf16.mxu0 0
        %3366 = vmatmul.mubr.bf16.gmra.mrb[0].mxu0 %v2860
        %v3367 = vpop.f32.mrb[0].mxu0
        %v3368 = vadd.f32 0.0, %v3367
        %v3369 = vpop.f32.mrb[0].mxu0
        %v3370 = vpop.f32.mrb[0].mxu0
        %v3371 = vadd.f32 0.0, %v3370
        %v3372 = vpop.f32.mrb[0].mxu0
        %3373 = vmatprep.mubr.bf16.mxu0 0
        %3374 = vmatmul.mubr.bf16.gmra.mrb[0].mxu0 %v2863
        %v3375 = vpop.f32.mrb[0].mxu0
        %v3376 = vpop.f32.mrb[0].mxu0
        %v3377 = vpop.f32.mrb[0].mxu0
        %v3378 = vpop.f32.mrb[0].mxu0
        %3379 = vmatprep.mubr.bf16.mxu0 0
        %3380 = vmatmul.mubr.bf16.gmra.mrb[0].mxu0 %v2866
        %v3381 = vpop.f32.mrb[0].mxu0
        %v3382 = vadd.f32 0.0, %v3381
        %v3383 = vpop.f32.mrb[0].mxu0
        %v3384 = vpop.f32.mrb[0].mxu0
        %v3385 = vadd.f32 0.0, %v3384
        %v3386 = vpop.f32.mrb[0].mxu0
        %3387 = vmatprep.mubr.bf16.mxu0 0
        %3388 = vmatmul.mubr.bf16.gmra.mrb[0].mxu0 %v2869
        %v3389 = vpop.f32.mrb[0].mxu0
        %v3390 = vpop.f32.mrb[0].mxu0
        %v3391 = vpop.f32.mrb[0].mxu0
        %v3392 = vpop.f32.mrb[0].mxu0
        %3393 = vmatprep.mubr.bf16.mxu0 0
        %3394 = vmatmul.mubr.bf16.gmra.mrb[0].mxu0 %v2872
        %v3395 = vpop.f32.mrb[0].mxu0
        %v3396 = vadd.f32 0.0, %v3395
        %v3397 = vpop.f32.mrb[0].mxu0
        %v3398 = vpop.f32.mrb[0].mxu0
        %v3399 = vadd.f32 0.0, %v3398
        %v3400 = vpop.f32.mrb[0].mxu0
        %3401 = vmatprep.mubr.bf16.mxu0 0
        %3402 = vmatmul.mubr.bf16.gmra.mrb[0].mxu0 %v2875
        %v3403 = vpop.f32.mrb[0].mxu0
        %v3404 = vpop.f32.mrb[0].mxu0
        %v3405 = vpop.f32.mrb[0].mxu0
        %v3406 = vpop.f32.mrb[0].mxu0
        %3407 = vmatprep.mubr.bf16.mxu0 0
        %3408 = vmatmul.mubr.bf16.gmra.mrb[0].mxu0 %v2878
        %v3409 = vpop.f32.mrb[0].mxu0
        %v3410 = vadd.f32 0.0, %v3409
        %v3411 = vpop.f32.mrb[0].mxu0
        %v3412 = vpop.f32.mrb[0].mxu0
        %v3413 = vadd.f32 0.0, %v3412
        %v3414 = vpop.f32.mrb[0].mxu0
        %3415 = vmatprep.mubr.bf16.mxu0 0
        %3416 = vmatmul.mubr.bf16.gmra.mrb[0].mxu0 %v2881
        %v3417 = vpop.f32.mrb[0].mxu0
        %v3418 = vpop.f32.mrb[0].mxu0
        %v3419 = vpop.f32.mrb[0].mxu0
        %v3420 = vpop.f32.mrb[0].mxu0
        %3421 = vmatprep.mubr.bf16.mxu0 0
        %3422 = vmatmul.mubr.bf16.gmra.mrb[0].mxu0 %v2884
        %v3423 = vpop.f32.mrb[0].mxu0
        %v3424 = vadd.f32 0.0, %v3423
        %v3425 = vpop.f32.mrb[0].mxu0
        %v3426 = vpop.f32.mrb[0].mxu0
        %v3427 = vadd.f32 0.0, %v3426
        %v3428 = vpop.f32.mrb[0].mxu0
        %3429 = vmatprep.mubr.bf16.mxu0 0
        %3430 = vmatmul.mubr.bf16.gmra.mrb[0].mxu0 %v2887
        %v3431 = vpop.f32.mrb[0].mxu0
        %v3432 = vpop.f32.mrb[0].mxu0
        %v3433 = vpop.f32.mrb[0].mxu0
        %v3434 = vpop.f32.mrb[0].mxu0
        %3435 = vmatprep.mubr.bf16.mxu0 0
        %3436 = vmatmul.mubr.bf16.gmra.mrb[0].mxu0 %v2890
        %v3437 = vpop.f32.mrb[0].mxu0
        %v3438 = vadd.f32 0.0, %v3437
        %v3439 = vpop.f32.mrb[0].mxu0
        %v3440 = vpop.f32.mrb[0].mxu0
        %v3441 = vadd.f32 0.0, %v3440
        %v3442 = vpop.f32.mrb[0].mxu0
        %3443 = vmatprep.mubr.bf16.mxu0 0
        %3444 = vmatmul.mubr.bf16.gmra.mrb[0].mxu0 %v2893
        %v3445 = vpop.f32.mrb[0].mxu0
        %v3446 = vpop.f32.mrb[0].mxu0
        %v3447 = vpop.f32.mrb[0].mxu0
        %v3448 = vpop.f32.mrb[0].mxu0
        %3449 = vmatprep.mubr.bf16.mxu0 0
        %3450 = vmatmul.mubr.bf16.gmra.mrb[0].mxu0 %v2896
        %v3451 = vpop.f32.mrb[0].mxu0
        %v3452 = vadd.f32 0.0, %v3451
        %v3453 = vpop.f32.mrb[0].mxu0
        %v3454 = vpop.f32.mrb[0].mxu0
        %v3455 = vadd.f32 0.0, %v3454
        %v3456 = vpop.f32.mrb[0].mxu0
        %3457 = vmatprep.mubr.bf16.mxu0 0
        %3458 = vmatmul.mubr.bf16.gmra.mrb[0].mxu0 %v2899
        %v3459 = vpop.f32.mrb[0].mxu0
        %v3460 = vpop.f32.mrb[0].mxu0
        %v3461 = vpop.f32.mrb[0].mxu0
        %v3462 = vpop.f32.mrb[0].mxu0
        %3463 = vmatprep.mubr.bf16.mxu0 0
        %3464 = vmatmul.mubr.bf16.gmra.mrb[0].mxu0 %v2902
        %v3465 = vpop.f32.mrb[0].mxu0
        %v3466 = vadd.f32 0.0, %v3465
        %v3467 = vpop.f32.mrb[0].mxu0
        %v3468 = vpop.f32.mrb[0].mxu0
        %v3469 = vadd.f32 0.0, %v3468
        %v3470 = vpop.f32.mrb[0].mxu0
        %3471 = vmatprep.mubr.bf16.mxu0 0
        %3472 = vmatmul.mubr.bf16.gmra.mrb[0].mxu0 %v2905
        %v3473 = vpop.f32.mrb[0].mxu0
        %v3474 = vpop.f32.mrb[0].mxu0
        %v3475 = vpop.f32.mrb[0].mxu0
        %v3476 = vpop.f32.mrb[0].mxu0
        %3477 = vmatprep.mubr.bf16.mxu0 0
        %3478 = vmatmul.mubr.bf16.gmra.mrb[0].mxu0 %v2908
        %v3479 = vpop.f32.mrb[0].mxu0
        %v3480 = vadd.f32 0.0, %v3479
        %v3481 = vpop.f32.mrb[0].mxu0
        %v3482 = vpop.f32.mrb[0].mxu0
        %v3483 = vadd.f32 0.0, %v3482
        %v3484 = vpop.f32.mrb[0].mxu0
        %3485 = vmatprep.mubr.bf16.mxu0 0
        %3486 = vmatmul.mubr.bf16.gmra.mrb[0].mxu0 %v2911
        %v3487 = vpop.f32.mrb[0].mxu0
        %v3488 = vpop.f32.mrb[0].mxu0
        %v3489 = vpop.f32.mrb[0].mxu0
        %v3490 = vpop.f32.mrb[0].mxu0
        %3491 = vmatprep.mubr.bf16.mxu0 0
        %3492 = vmatmul.mubr.bf16.gmra.mrb[0].mxu0 %v2914
        %v3493 = vpop.f32.mrb[0].mxu0
        %v3494 = vadd.f32 0.0, %v3493
        %v3495 = vpop.f32.mrb[0].mxu0
        %v3496 = vpop.f32.mrb[0].mxu0
        %v3497 = vadd.f32 0.0, %v3496
        %v3498 = vpop.f32.mrb[0].mxu0
        %3499 = vmatprep.mubr.bf16.mxu0 0
        %3500 = vmatmul.mubr.bf16.gmra.mrb[0].mxu0 %v2917
        %v3501 = vpop.f32.mrb[0].mxu0
        %v3502 = vpop.f32.mrb[0].mxu0
        %v3503 = vpop.f32.mrb[0].mxu0
        %v3504 = vpop.f32.mrb[0].mxu0
        %3505 = vmatprep.mubr.bf16.mxu0 0
        %3506 = vmatmul.mubr.bf16.gmra.mrb[0].mxu0 %v2920
        %v3507 = vpop.f32.mrb[0].mxu0
        %v3508 = vadd.f32 0.0, %v3507
        %v3509 = vpop.f32.mrb[0].mxu0
        %v3510 = vpop.f32.mrb[0].mxu0
        %v3511 = vadd.f32 0.0, %v3510
        %v3512 = vpop.f32.mrb[0].mxu0
        %3513 = vmatprep.mubr.bf16.mxu0 0
        %3514 = vmatmul.mubr.bf16.gmra.mrb[0].mxu0 %v2923
        %v3515 = vpop.f32.mrb[0].mxu0
        %v3516 = vpop.f32.mrb[0].mxu0
        %v3517 = vpop.f32.mrb[0].mxu0
        %v3518 = vpop.f32.mrb[0].mxu0
        %3519 = vdwg.mxu0
        %v3520 = vadd.f32 %v1982, %v3298
        %v3521 = vadd.f32 %v1985, %v3301
        %v3522 = vadd.f32 %v1996, %v3312
        %v3523 = vadd.f32 %v1999, %v3315
        %v3524 = vadd.f32 %v2010, %v3326
        %v3525 = vadd.f32 %v2013, %v3329
        %v3526 = vadd.f32 %v2024, %v3340
        %v3527 = vadd.f32 %v2027, %v3343
        %v3528 = vadd.f32 %v2038, %v3354
        %v3529 = vadd.f32 %v2041, %v3357
        %v3530 = vadd.f32 %v2052, %v3368
        %v3531 = vadd.f32 %v2055, %v3371
        %v3532 = vadd.f32 %v2066, %v3382
        %v3533 = vadd.f32 %v2069, %v3385
        %v3534 = vadd.f32 %v2080, %v3396
        %v3535 = vadd.f32 %v2083, %v3399
        %v3536 = vadd.f32 %v2094, %v3410
        %v3537 = vadd.f32 %v2097, %v3413
        %v3538 = vadd.f32 %v2108, %v3424
        %v3539 = vadd.f32 %v2111, %v3427
        %v3540 = vadd.f32 %v2122, %v3438
        %v3541 = vadd.f32 %v2125, %v3441
        %v3542 = vadd.f32 %v2136, %v3452
        %v3543 = vadd.f32 %v2139, %v3455
        %v3544 = vadd.f32 %v2150, %v3466
        %v3545 = vadd.f32 %v2153, %v3469
        %v3546 = vadd.f32 %v2164, %v3480
        %v3547 = vadd.f32 %v2167, %v3483
        %v3548 = vadd.f32 %v2178, %v3494
        %v3549 = vadd.f32 %v2181, %v3497
        %v3550 = vadd.f32 %v2192, %v3508
        %v3551 = vadd.f32 %v2195, %v3511
        %s3552 = scalar_lea.vmem [#allocation6], 128
        %v3553 = vld [vmem:[%s3552] sm:$0xf]
        %v3554 = vld [vmem:[%s3552 + $0x4] sm:$0xf]
        %v3555 = vld [vmem:[%s3552 + $0x8] sm:$0xf]
        %v3556 = vld [vmem:[%s3552 + $0xc] sm:$0xf]
        %v3561 = vunpack.c.l.b16 %v3553
        %v3562 = vunpack.c.l.b16 %v3554
        %v3563 = vunpack.c.l.b16 %v3555
        %v3564 = vunpack.c.l.b16 %v3556
        %v3565 = vpack.c.b16 %v3562, %v3561
        %v3566 = vpack.c.b16 %v3564, %v3563
        %3569 = vmatprep.subr.bf16.mxu0 0
        %3570 = vmatpush1.bf16.msra.mxu0 %v3565
        %3571 = vmatprep.subr.bf16.mxu0 0
        %3572 = vmatpush1.bf16.msra.mxu0 %v3566
        %3573 = vmatprep.subr.bf16.mxu0 0
        %3574 = vmatpush1.bf16.msra.mxu0 0
        %3575 = vmatprep.subr.bf16.mxu0 0
        %3576 = vmatpush1.bf16.msra.mxu0 0
        %3577 = vmatprep.subr.bf16.mxu0 0
        %3578 = vmatpush1.bf16.msra.mxu0 0
        %3579 = vmatprep.subr.bf16.mxu0 0
        %3580 = vmatpush1.bf16.msra.mxu0 0
        %3581 = vmatprep.subr.bf16.mxu0 0
        %3582 = vmatpush1.bf16.msra.mxu0 0
        %3583 = vmatprep.subr.bf16.mxu0 0
        %3584 = vmatpush1.bf16.msra.mxu0 0
        %3585 = vmatprep.subr.bf16.mxu0 0
        %3586 = vmatpush1.bf16.msra.mxu0 0
        %3587 = vmatprep.subr.bf16.mxu0 0
        %3588 = vmatpush1.bf16.msra.mxu0 0
        %3589 = vmatprep.subr.bf16.mxu0 0
        %3590 = vmatpush1.bf16.msra.mxu0 0
        %3591 = vmatprep.subr.bf16.mxu0 0
        %3592 = vmatpush1.bf16.msra.mxu0 0
        %3593 = vmatprep.subr.bf16.mxu0 0
        %3594 = vmatpush1.bf16.msra.mxu0 0
        %3595 = vmatprep.subr.bf16.mxu0 0
        %3596 = vmatpush1.bf16.msra.mxu0 0
        %3597 = vmatprep.subr.bf16.mxu0 0
        %3598 = vmatpush1.bf16.msra.mxu0 0
        %3599 = vmatprep.subr.bf16.mxu0 0
        %3600 = vmatpush1.bf16.msra.mxu0 0
        %3601 = vmatprep.mubr.bf16.mxu0 0
        %3602 = vmatmul.mubr.bf16.gmra.mrb[0].mxu0 %v2830
        %v3603 = vpop.f32.mrb[0].mxu0
        %v3604 = vadd.f32 0.0, %v3603
        %v3605 = vpop.f32.mrb[0].mxu0
        %v3606 = vpop.f32.mrb[0].mxu0
        %v3607 = vadd.f32 0.0, %v3606
        %v3608 = vpop.f32.mrb[0].mxu0
        %3609 = vmatprep.mubr.bf16.mxu0 0
        %3610 = vmatmul.mubr.bf16.gmra.mrb[0].mxu0 %v2833
        %v3611 = vpop.f32.mrb[0].mxu0
        %v3612 = vadd.f32 0.0, %v3611
        %v3613 = vpop.f32.mrb[0].mxu0
        %v3614 = vpop.f32.mrb[0].mxu0
        %v3615 = vpop.f32.mrb[0].mxu0
        %3616 = vmatprep.mubr.bf16.mxu0 0
        %3617 = vmatmul.mubr.bf16.gmra.mrb[0].mxu0 %v2836
        %v3618 = vpop.f32.mrb[0].mxu0
        %v3619 = vadd.f32 0.0, %v3618
        %v3620 = vpop.f32.mrb[0].mxu0
        %v3621 = vpop.f32.mrb[0].mxu0
        %v3622 = vadd.f32 0.0, %v3621
        %v3623 = vpop.f32.mrb[0].mxu0
        %3624 = vmatprep.mubr.bf16.mxu0 0
        %3625 = vmatmul.mubr.bf16.gmra.mrb[0].mxu0 %v2839
        %v3626 = vpop.f32.mrb[0].mxu0
        %v3627 = vadd.f32 0.0, %v3626
        %v3628 = vpop.f32.mrb[0].mxu0
        %v3629 = vpop.f32.mrb[0].mxu0
        %v3630 = vpop.f32.mrb[0].mxu0
        %3631 = vmatprep.mubr.bf16.mxu0 0
        %3632 = vmatmul.mubr.bf16.gmra.mrb[0].mxu0 %v2842
        %v3633 = vpop.f32.mrb[0].mxu0
        %v3634 = vadd.f32 0.0, %v3633
        %v3635 = vpop.f32.mrb[0].mxu0
        %v3636 = vpop.f32.mrb[0].mxu0
        %v3637 = vadd.f32 0.0, %v3636
        %v3638 = vpop.f32.mrb[0].mxu0
        %3639 = vmatprep.mubr.bf16.mxu0 0
        %3640 = vmatmul.mubr.bf16.gmra.mrb[0].mxu0 %v2845
        %v3641 = vpop.f32.mrb[0].mxu0
        %v3642 = vadd.f32 0.0, %v3641
        %v3643 = vpop.f32.mrb[0].mxu0
        %v3644 = vpop.f32.mrb[0].mxu0
        %v3645 = vpop.f32.mrb[0].mxu0
        %3646 = vmatprep.mubr.bf16.mxu0 0
        %3647 = vmatmul.mubr.bf16.gmra.mrb[0].mxu0 %v2848
        %v3648 = vpop.f32.mrb[0].mxu0
        %v3649 = vadd.f32 0.0, %v3648
        %v3650 = vpop.f32.mrb[0].mxu0
        %v3651 = vpop.f32.mrb[0].mxu0
        %v3652 = vadd.f32 0.0, %v3651
        %v3653 = vpop.f32.mrb[0].mxu0
        %3654 = vmatprep.mubr.bf16.mxu0 0
        %3655 = vmatmul.mubr.bf16.gmra.mrb[0].mxu0 %v2851
        %v3656 = vpop.f32.mrb[0].mxu0
        %v3657 = vadd.f32 0.0, %v3656
        %v3658 = vpop.f32.mrb[0].mxu0
        %v3659 = vpop.f32.mrb[0].mxu0
        %v3660 = vpop.f32.mrb[0].mxu0
        %3661 = vmatprep.mubr.bf16.mxu0 0
        %3662 = vmatmul.mubr.bf16.gmra.mrb[0].mxu0 %v2854
        %v3663 = vpop.f32.mrb[0].mxu0
        %v3664 = vadd.f32 0.0, %v3663
        %v3665 = vpop.f32.mrb[0].mxu0
        %v3666 = vpop.f32.mrb[0].mxu0
        %v3667 = vadd.f32 0.0, %v3666
        %v3668 = vpop.f32.mrb[0].mxu0
        %3669 = vmatprep.mubr.bf16.mxu0 0
        %3670 = vmatmul.mubr.bf16.gmra.mrb[0].mxu0 %v2857
        %v3671 = vpop.f32.mrb[0].mxu0
        %v3672 = vadd.f32 0.0, %v3671
        %v3673 = vpop.f32.mrb[0].mxu0
        %v3674 = vpop.f32.mrb[0].mxu0
        %v3675 = vpop.f32.mrb[0].mxu0
        %3676 = vmatprep.mubr.bf16.mxu0 0
        %3677 = vmatmul.mubr.bf16.gmra.mrb[0].mxu0 %v2860
        %v3678 = vpop.f32.mrb[0].mxu0
        %v3679 = vadd.f32 0.0, %v3678
        %v3680 = vpop.f32.mrb[0].mxu0
        %v3681 = vpop.f32.mrb[0].mxu0
        %v3682 = vadd.f32 0.0, %v3681
        %v3683 = vpop.f32.mrb[0].mxu0
        %3684 = vmatprep.mubr.bf16.mxu0 0
        %3685 = vmatmul.mubr.bf16.gmra.mrb[0].mxu0 %v2863
        %v3686 = vpop.f32.mrb[0].mxu0
        %v3687 = vadd.f32 0.0, %v3686
        %v3688 = vpop.f32.mrb[0].mxu0
        %v3689 = vpop.f32.mrb[0].mxu0
        %v3690 = vpop.f32.mrb[0].mxu0
        %3691 = vmatprep.mubr.bf16.mxu0 0
        %3692 = vmatmul.mubr.bf16.gmra.mrb[0].mxu0 %v2866
        %v3693 = vpop.f32.mrb[0].mxu0
        %v3694 = vadd.f32 0.0, %v3693
        %v3695 = vpop.f32.mrb[0].mxu0
        %v3696 = vpop.f32.mrb[0].mxu0
        %v3697 = vadd.f32 0.0, %v3696
        %v3698 = vpop.f32.mrb[0].mxu0
        %3699 = vmatprep.mubr.bf16.mxu0 0
        %3700 = vmatmul.mubr.bf16.gmra.mrb[0].mxu0 %v2869
        %v3701 = vpop.f32.mrb[0].mxu0
        %v3702 = vadd.f32 0.0, %v3701
        %v3703 = vpop.f32.mrb[0].mxu0
        %v3704 = vpop.f32.mrb[0].mxu0
        %v3705 = vpop.f32.mrb[0].mxu0
        %3706 = vmatprep.mubr.bf16.mxu0 0
        %3707 = vmatmul.mubr.bf16.gmra.mrb[0].mxu0 %v2872
        %v3708 = vpop.f32.mrb[0].mxu0
        %v3709 = vadd.f32 0.0, %v3708
        %v3710 = vpop.f32.mrb[0].mxu0
        %v3711 = vpop.f32.mrb[0].mxu0
        %v3712 = vadd.f32 0.0, %v3711
        %v3713 = vpop.f32.mrb[0].mxu0
        %3714 = vmatprep.mubr.bf16.mxu0 0
        %3715 = vmatmul.mubr.bf16.gmra.mrb[0].mxu0 %v2875
        %v3716 = vpop.f32.mrb[0].mxu0
        %v3717 = vadd.f32 0.0, %v3716
        %v3718 = vpop.f32.mrb[0].mxu0
        %v3719 = vpop.f32.mrb[0].mxu0
        %v3720 = vpop.f32.mrb[0].mxu0
        %3721 = vmatprep.mubr.bf16.mxu0 0
        %3722 = vmatmul.mubr.bf16.gmra.mrb[0].mxu0 %v2878
        %v3723 = vpop.f32.mrb[0].mxu0
        %v3724 = vadd.f32 0.0, %v3723
        %v3725 = vpop.f32.mrb[0].mxu0
        %v3726 = vpop.f32.mrb[0].mxu0
        %v3727 = vadd.f32 0.0, %v3726
        %v3728 = vpop.f32.mrb[0].mxu0
        %3729 = vmatprep.mubr.bf16.mxu0 0
        %3730 = vmatmul.mubr.bf16.gmra.mrb[0].mxu0 %v2881
        %v3731 = vpop.f32.mrb[0].mxu0
        %v3732 = vadd.f32 0.0, %v3731
        %v3733 = vpop.f32.mrb[0].mxu0
        %v3734 = vpop.f32.mrb[0].mxu0
        %v3735 = vpop.f32.mrb[0].mxu0
        %3736 = vmatprep.mubr.bf16.mxu0 0
        %3737 = vmatmul.mubr.bf16.gmra.mrb[0].mxu0 %v2884
        %v3738 = vpop.f32.mrb[0].mxu0
        %v3739 = vadd.f32 0.0, %v3738
        %v3740 = vpop.f32.mrb[0].mxu0
        %v3741 = vpop.f32.mrb[0].mxu0
        %v3742 = vadd.f32 0.0, %v3741
        %v3743 = vpop.f32.mrb[0].mxu0
        %3744 = vmatprep.mubr.bf16.mxu0 0
        %3745 = vmatmul.mubr.bf16.gmra.mrb[0].mxu0 %v2887
        %v3746 = vpop.f32.mrb[0].mxu0
        %v3747 = vadd.f32 0.0, %v3746
        %v3748 = vpop.f32.mrb[0].mxu0
        %v3749 = vpop.f32.mrb[0].mxu0
        %v3750 = vpop.f32.mrb[0].mxu0
        %3751 = vmatprep.mubr.bf16.mxu0 0
        %3752 = vmatmul.mubr.bf16.gmra.mrb[0].mxu0 %v2890
        %v3753 = vpop.f32.mrb[0].mxu0
        %v3754 = vadd.f32 0.0, %v3753
        %v3755 = vpop.f32.mrb[0].mxu0
        %v3756 = vpop.f32.mrb[0].mxu0
        %v3757 = vadd.f32 0.0, %v3756
        %v3758 = vpop.f32.mrb[0].mxu0
        %3759 = vmatprep.mubr.bf16.mxu0 0
        %3760 = vmatmul.mubr.bf16.gmra.mrb[0].mxu0 %v2893
        %v3761 = vpop.f32.mrb[0].mxu0
        %v3762 = vadd.f32 0.0, %v3761
        %v3763 = vpop.f32.mrb[0].mxu0
        %v3764 = vpop.f32.mrb[0].mxu0
        %v3765 = vpop.f32.mrb[0].mxu0
        %3766 = vmatprep.mubr.bf16.mxu0 0
        %3767 = vmatmul.mubr.bf16.gmra.mrb[0].mxu0 %v2896
        %v3768 = vpop.f32.mrb[0].mxu0
        %v3769 = vadd.f32 0.0, %v3768
        %v3770 = vpop.f32.mrb[0].mxu0
        %v3771 = vpop.f32.mrb[0].mxu0
        %v3772 = vadd.f32 0.0, %v3771
        %v3773 = vpop.f32.mrb[0].mxu0
        %3774 = vmatprep.mubr.bf16.mxu0 0
        %3775 = vmatmul.mubr.bf16.gmra.mrb[0].mxu0 %v2899
        %v3776 = vpop.f32.mrb[0].mxu0
        %v3777 = vadd.f32 0.0, %v3776
        %v3778 = vpop.f32.mrb[0].mxu0
        %v3779 = vpop.f32.mrb[0].mxu0
        %v3780 = vpop.f32.mrb[0].mxu0
        %3781 = vmatprep.mubr.bf16.mxu0 0
        %3782 = vmatmul.mubr.bf16.gmra.mrb[0].mxu0 %v2902
        %v3783 = vpop.f32.mrb[0].mxu0
        %v3784 = vadd.f32 0.0, %v3783
        %v3785 = vpop.f32.mrb[0].mxu0
        %v3786 = vpop.f32.mrb[0].mxu0
        %v3787 = vadd.f32 0.0, %v3786
        %v3788 = vpop.f32.mrb[0].mxu0
        %3789 = vmatprep.mubr.bf16.mxu0 0
        %3790 = vmatmul.mubr.bf16.gmra.mrb[0].mxu0 %v2905
        %v3791 = vpop.f32.mrb[0].mxu0
        %v3792 = vadd.f32 0.0, %v3791
        %v3793 = vpop.f32.mrb[0].mxu0
        %v3794 = vpop.f32.mrb[0].mxu0
        %v3795 = vpop.f32.mrb[0].mxu0
        %3796 = vmatprep.mubr.bf16.mxu0 0
        %3797 = vmatmul.mubr.bf16.gmra.mrb[0].mxu0 %v2908
        %v3798 = vpop.f32.mrb[0].mxu0
        %v3799 = vadd.f32 0.0, %v3798
        %v3800 = vpop.f32.mrb[0].mxu0
        %v3801 = vpop.f32.mrb[0].mxu0
        %v3802 = vadd.f32 0.0, %v3801
        %v3803 = vpop.f32.mrb[0].mxu0
        %3804 = vmatprep.mubr.bf16.mxu0 0
        %3805 = vmatmul.mubr.bf16.gmra.mrb[0].mxu0 %v2911
        %v3806 = vpop.f32.mrb[0].mxu0
        %v3807 = vadd.f32 0.0, %v3806
        %v3808 = vpop.f32.mrb[0].mxu0
        %v3809 = vpop.f32.mrb[0].mxu0
        %v3810 = vpop.f32.mrb[0].mxu0
        %3811 = vmatprep.mubr.bf16.mxu0 0
        %3812 = vmatmul.mubr.bf16.gmra.mrb[0].mxu0 %v2914
        %v3813 = vpop.f32.mrb[0].mxu0
        %v3814 = vadd.f32 0.0, %v3813
        %v3815 = vpop.f32.mrb[0].mxu0
        %v3816 = vpop.f32.mrb[0].mxu0
        %v3817 = vadd.f32 0.0, %v3816
        %v3818 = vpop.f32.mrb[0].mxu0
        %3819 = vmatprep.mubr.bf16.mxu0 0
        %3820 = vmatmul.mubr.bf16.gmra.mrb[0].mxu0 %v2917
        %v3821 = vpop.f32.mrb[0].mxu0
        %v3822 = vadd.f32 0.0, %v3821
        %v3823 = vpop.f32.mrb[0].mxu0
        %v3824 = vpop.f32.mrb[0].mxu0
        %v3825 = vpop.f32.mrb[0].mxu0
        %3826 = vmatprep.mubr.bf16.mxu0 0
        %3827 = vmatmul.mubr.bf16.gmra.mrb[0].mxu0 %v2920
        %v3828 = vpop.f32.mrb[0].mxu0
        %v3829 = vadd.f32 0.0, %v3828
        %v3830 = vpop.f32.mrb[0].mxu0
        %v3831 = vpop.f32.mrb[0].mxu0
        %v3832 = vadd.f32 0.0, %v3831
        %v3833 = vpop.f32.mrb[0].mxu0
        %3834 = vmatprep.mubr.bf16.mxu0 0
        %3835 = vmatmul.mubr.bf16.gmra.mrb[0].mxu0 %v2923
        %v3836 = vpop.f32.mrb[0].mxu0
        %v3837 = vadd.f32 0.0, %v3836
        %v3838 = vpop.f32.mrb[0].mxu0
        %v3839 = vpop.f32.mrb[0].mxu0
        %v3840 = vpop.f32.mrb[0].mxu0
        %3841 = vdwg.mxu0
        %v3842 = vadd.f32 %v2541, %v3604
        %v3843 = vadd.f32 %v2544, %v3607
        %v3844 = vadd.f32 %v2549, %v3612
        %v3845 = vadd.f32 %v2556, %v3619
        %v3846 = vadd.f32 %v2559, %v3622
        %v3847 = vadd.f32 %v2564, %v3627
        %v3848 = vadd.f32 %v2571, %v3634
        %v3849 = vadd.f32 %v2574, %v3637
        %v3850 = vadd.f32 %v2579, %v3642
        %v3851 = vadd.f32 %v2586, %v3649
        %v3852 = vadd.f32 %v2589, %v3652
        %v3853 = vadd.f32 %v2594, %v3657
        %v3854 = vadd.f32 %v2601, %v3664
        %v3855 = vadd.f32 %v2604, %v3667
        %v3856 = vadd.f32 %v2609, %v3672
        %v3857 = vadd.f32 %v2616, %v3679
        %v3858 = vadd.f32 %v2619, %v3682
        %v3859 = vadd.f32 %v2624, %v3687
        %v3860 = vadd.f32 %v2631, %v3694
        %v3861 = vadd.f32 %v2634, %v3697
        %v3862 = vadd.f32 %v2639, %v3702
        %v3863 = vadd.f32 %v2646, %v3709
        %v3864 = vadd.f32 %v2649, %v3712
        %v3865 = vadd.f32 %v2654, %v3717
        %v3866 = vadd.f32 %v2661, %v3724
        %v3867 = vadd.f32 %v2664, %v3727
        %v3868 = vadd.f32 %v2669, %v3732
        %v3869 = vadd.f32 %v2676, %v3739
        %v3870 = vadd.f32 %v2679, %v3742
        %v3871 = vadd.f32 %v2684, %v3747
        %v3872 = vadd.f32 %v2691, %v3754
        %v3873 = vadd.f32 %v2694, %v3757
        %v3874 = vadd.f32 %v2699, %v3762
        %v3875 = vadd.f32 %v2706, %v3769
        %v3876 = vadd.f32 %v2709, %v3772
        %v3877 = vadd.f32 %v2714, %v3777
        %v3878 = vadd.f32 %v2721, %v3784
        %v3879 = vadd.f32 %v2724, %v3787
        %v3880 = vadd.f32 %v2729, %v3792
        %v3881 = vadd.f32 %v2736, %v3799
        %v3882 = vadd.f32 %v2739, %v3802
        %v3883 = vadd.f32 %v2744, %v3807
        %v3884 = vadd.f32 %v2751, %v3814
        %v3885 = vadd.f32 %v2754, %v3817
        %v3886 = vadd.f32 %v2759, %v3822
        %v3887 = vadd.f32 %v2766, %v3829
        %v3888 = vadd.f32 %v2769, %v3832
        %v3889 = vadd.f32 %v2774, %v3837
        %v3906 = vrot.slane %v3200, 7
        %v3907 = vrot.slane %v3203, 7
        %v3908 = vrot.slane %v3206, 7
        %v3909 = vrot.slane %v3209, 7
        %v3910 = vrot.slane %v3212, 7
        %v3911 = vrot.slane %v3215, 7
        %v3912 = vrot.slane %v3218, 7
        %v3913 = vrot.slane %v3221, 7
        %v3914 = vrot.slane %v3224, 7
        %v3915 = vrot.slane %v3227, 7
        %v3916 = vrot.slane %v3230, 7
        %v3917 = vrot.slane %v3233, 7
        %v3918 = vrot.slane %v3236, 7
        %v3919 = vrot.slane %v3239, 7
        %v3920 = vrot.slane %v3242, 7
        %v3921 = vrot.slane %v3245, 7
        %vm3970 = vcmask 1040384
        %v3971 = vrot.slane %v3198, 7
        %v3972 = vrot.slane %v3199, 7
        %v3973 = vsel %vm3970, %v3971, %v3972
        %v3974 = vrot.slane %v3201, 7
        %v3975 = vrot.slane %v3202, 7
        %v3976 = vsel %vm3970, %v3974, %v3975
        %v3977 = vrot.slane %v3204, 7
        %v3978 = vrot.slane %v3205, 7
        %v3979 = vsel %vm3970, %v3977, %v3978
        %v3980 = vrot.slane %v3207, 7
        %v3981 = vrot.slane %v3208, 7
        %v3982 = vsel %vm3970, %v3980, %v3981
        %v3983 = vrot.slane %v3210, 7
        %v3984 = vrot.slane %v3211, 7
        %v3985 = vsel %vm3970, %v3983, %v3984
        %v3986 = vrot.slane %v3213, 7
        %v3987 = vrot.slane %v3214, 7
        %v3988 = vsel %vm3970, %v3986, %v3987
        %v3989 = vrot.slane %v3216, 7
        %v3990 = vrot.slane %v3217, 7
        %v3991 = vsel %vm3970, %v3989, %v3990
        %v3992 = vrot.slane %v3219, 7
        %v3993 = vrot.slane %v3220, 7
        %v3994 = vsel %vm3970, %v3992, %v3993
        %v3995 = vrot.slane %v3222, 7
        %v3996 = vrot.slane %v3223, 7
        %v3997 = vsel %vm3970, %v3995, %v3996
        %v3998 = vrot.slane %v3225, 7
        %v3999 = vrot.slane %v3226, 7
        %v4000 = vsel %vm3970, %v3998, %v3999
        %v4001 = vrot.slane %v3228, 7
        %v4002 = vrot.slane %v3229, 7
        %v4003 = vsel %vm3970, %v4001, %v4002
        %v4004 = vrot.slane %v3231, 7
        %v4005 = vrot.slane %v3232, 7
        %v4006 = vsel %vm3970, %v4004, %v4005
        %v4007 = vrot.slane %v3234, 7
        %v4008 = vrot.slane %v3235, 7
        %v4009 = vsel %vm3970, %v4007, %v4008
        %v4010 = vrot.slane %v3237, 7
        %v4011 = vrot.slane %v3238, 7
        %v4012 = vsel %vm3970, %v4010, %v4011
        %v4013 = vrot.slane %v3240, 7
        %v4014 = vrot.slane %v3241, 7
        %v4015 = vsel %vm3970, %v4013, %v4014
        %v4016 = vrot.slane %v3243, 7
        %v4017 = vrot.slane %v3244, 7
        %v4018 = vsel %vm3970, %v4016, %v4017
        %v4051 = vsel %vm3970, %v3906, %v3971
        %v4052 = vsel %vm3970, %v3907, %v3974
        %v4053 = vsel %vm3970, %v3908, %v3977
        %v4054 = vsel %vm3970, %v3909, %v3980
        %v4055 = vsel %vm3970, %v3910, %v3983
        %v4056 = vsel %vm3970, %v3911, %v3986
        %v4057 = vsel %vm3970, %v3912, %v3989
        %v4058 = vsel %vm3970, %v3913, %v3992
        %v4059 = vsel %vm3970, %v3914, %v3995
        %v4060 = vsel %vm3970, %v3915, %v3998
        %v4061 = vsel %vm3970, %v3916, %v4001
        %v4062 = vsel %vm3970, %v3917, %v4004
        %v4063 = vsel %vm3970, %v3918, %v4007
        %v4064 = vsel %vm3970, %v3919, %v4010
        %v4065 = vsel %vm3970, %v3920, %v4013
        %v4066 = vsel %vm3970, %v3921, %v4016
        %v4067 = vadd.f32 %v4051, %v3520
        %v4068 = vadd.f32 %v3973, %v3521
        %v4069 = vadd.f32 %v4052, %v3522
        %v4070 = vadd.f32 %v3976, %v3523
        %v4071 = vadd.f32 %v4053, %v3524
        %v4072 = vadd.f32 %v3979, %v3525
        %v4073 = vadd.f32 %v4054, %v3526
        %v4074 = vadd.f32 %v3982, %v3527
        %v4075 = vadd.f32 %v4055, %v3528
        %v4076 = vadd.f32 %v3985, %v3529
        %v4077 = vadd.f32 %v4056, %v3530
        %v4078 = vadd.f32 %v3988, %v3531
        %v4079 = vadd.f32 %v4057, %v3532
        %v4080 = vadd.f32 %v3991, %v3533
        %v4081 = vadd.f32 %v4058, %v3534
        %v4082 = vadd.f32 %v3994, %v3535
        %v4083 = vadd.f32 %v4059, %v3536
        %v4084 = vadd.f32 %v3997, %v3537
        %v4085 = vadd.f32 %v4060, %v3538
        %v4086 = vadd.f32 %v4000, %v3539
        %v4087 = vadd.f32 %v4061, %v3540
        %v4088 = vadd.f32 %v4003, %v3541
        %v4089 = vadd.f32 %v4062, %v3542
        %v4090 = vadd.f32 %v4006, %v3543
        %v4091 = vadd.f32 %v4063, %v3544
        %v4092 = vadd.f32 %v4009, %v3545
        %v4093 = vadd.f32 %v4064, %v3546
        %v4094 = vadd.f32 %v4012, %v3547
        %v4095 = vadd.f32 %v4065, %v3548
        %v4096 = vadd.f32 %v4015, %v3549
        %v4097 = vadd.f32 %v4066, %v3550
        %v4098 = vadd.f32 %v4018, %v3551
        %vm4147 = vcmask 1046528
        %v4148 = vrot.slane %v3842, 1
        %v4149 = vrot.slane %v3843, 1
        %v4150 = vsel %vm4147, %v4148, %v4149
        %v4151 = vrot.slane %v3844, 1
        %v4152 = vsel %vm4147, %v4149, %v4151
        %v4153 = vrot.slane %v3845, 1
        %v4154 = vrot.slane %v3846, 1
        %v4155 = vsel %vm4147, %v4153, %v4154
        %v4156 = vrot.slane %v3847, 1
        %v4157 = vsel %vm4147, %v4154, %v4156
        %v4158 = vrot.slane %v3848, 1
        %v4159 = vrot.slane %v3849, 1
        %v4160 = vsel %vm4147, %v4158, %v4159
        %v4161 = vrot.slane %v3850, 1
        %v4162 = vsel %vm4147, %v4159, %v4161
        %v4163 = vrot.slane %v3851, 1
        %v4164 = vrot.slane %v3852, 1
        %v4165 = vsel %vm4147, %v4163, %v4164
        %v4166 = vrot.slane %v3853, 1
        %v4167 = vsel %vm4147, %v4164, %v4166
        %v4168 = vrot.slane %v3854, 1
        %v4169 = vrot.slane %v3855, 1
        %v4170 = vsel %vm4147, %v4168, %v4169
        %v4171 = vrot.slane %v3856, 1
        %v4172 = vsel %vm4147, %v4169, %v4171
        %v4173 = vrot.slane %v3857, 1
        %v4174 = vrot.slane %v3858, 1
        %v4175 = vsel %vm4147, %v4173, %v4174
        %v4176 = vrot.slane %v3859, 1
        %v4177 = vsel %vm4147, %v4174, %v4176
        %v4178 = vrot.slane %v3860, 1
        %v4179 = vrot.slane %v3861, 1
        %v4180 = vsel %vm4147, %v4178, %v4179
        %v4181 = vrot.slane %v3862, 1
        %v4182 = vsel %vm4147, %v4179, %v4181
        %v4183 = vrot.slane %v3863, 1
        %v4184 = vrot.slane %v3864, 1
        %v4185 = vsel %vm4147, %v4183, %v4184
        %v4186 = vrot.slane %v3865, 1
        %v4187 = vsel %vm4147, %v4184, %v4186
        %v4188 = vrot.slane %v3866, 1
        %v4189 = vrot.slane %v3867, 1
        %v4190 = vsel %vm4147, %v4188, %v4189
        %v4191 = vrot.slane %v3868, 1
        %v4192 = vsel %vm4147, %v4189, %v4191
        %v4193 = vrot.slane %v3869, 1
        %v4194 = vrot.slane %v3870, 1
        %v4195 = vsel %vm4147, %v4193, %v4194
        %v4196 = vrot.slane %v3871, 1
        %v4197 = vsel %vm4147, %v4194, %v4196
        %v4198 = vrot.slane %v3872, 1
        %v4199 = vrot.slane %v3873, 1
        %v4200 = vsel %vm4147, %v4198, %v4199
        %v4201 = vrot.slane %v3874, 1
        %v4202 = vsel %vm4147, %v4199, %v4201
        %v4203 = vrot.slane %v3875, 1
        %v4204 = vrot.slane %v3876, 1
        %v4205 = vsel %vm4147, %v4203, %v4204
        %v4206 = vrot.slane %v3877, 1
        %v4207 = vsel %vm4147, %v4204, %v4206
        %v4208 = vrot.slane %v3878, 1
        %v4209 = vrot.slane %v3879, 1
        %v4210 = vsel %vm4147, %v4208, %v4209
        %v4211 = vrot.slane %v3880, 1
        %v4212 = vsel %vm4147, %v4209, %v4211
        %v4213 = vrot.slane %v3881, 1
        %v4214 = vrot.slane %v3882, 1
        %v4215 = vsel %vm4147, %v4213, %v4214
        %v4216 = vrot.slane %v3883, 1
        %v4217 = vsel %vm4147, %v4214, %v4216
        %v4218 = vrot.slane %v3884, 1
        %v4219 = vrot.slane %v3885, 1
        %v4220 = vsel %vm4147, %v4218, %v4219
        %v4221 = vrot.slane %v3886, 1
        %v4222 = vsel %vm4147, %v4219, %v4221
        %v4223 = vrot.slane %v3887, 1
        %v4224 = vrot.slane %v3888, 1
        %v4225 = vsel %vm4147, %v4223, %v4224
        %v4226 = vrot.slane %v3889, 1
        %v4227 = vsel %vm4147, %v4224, %v4226
        %v4260 = vadd.f32 %v4067, %v4150
        %v4261 = vadd.f32 %v4068, %v4152
        %v4262 = vadd.f32 %v4069, %v4155
        %v4263 = vadd.f32 %v4070, %v4157
        %v4264 = vadd.f32 %v4071, %v4160
        %v4265 = vadd.f32 %v4072, %v4162
        %v4266 = vadd.f32 %v4073, %v4165
        %v4267 = vadd.f32 %v4074, %v4167
        %v4268 = vadd.f32 %v4075, %v4170
        %v4269 = vadd.f32 %v4076, %v4172
        %v4270 = vadd.f32 %v4077, %v4175
        %v4271 = vadd.f32 %v4078, %v4177
        %v4272 = vadd.f32 %v4079, %v4180
        %v4273 = vadd.f32 %v4080, %v4182
        %v4274 = vadd.f32 %v4081, %v4185
        %v4275 = vadd.f32 %v4082, %v4187
        %v4276 = vadd.f32 %v4083, %v4190
        %v4277 = vadd.f32 %v4084, %v4192
        %v4278 = vadd.f32 %v4085, %v4195
        %v4279 = vadd.f32 %v4086, %v4197
        %v4280 = vadd.f32 %v4087, %v4200
        %v4281 = vadd.f32 %v4088, %v4202
        %v4282 = vadd.f32 %v4089, %v4205
        %v4283 = vadd.f32 %v4090, %v4207
        %v4284 = vadd.f32 %v4091, %v4210
        %v4285 = vadd.f32 %v4092, %v4212
        %v4286 = vadd.f32 %v4093, %v4215
        %v4287 = vadd.f32 %v4094, %v4217
        %v4288 = vadd.f32 %v4095, %v4220
        %v4289 = vadd.f32 %v4096, %v4222
        %v4290 = vadd.f32 %v4097, %v4225
        %v4291 = vadd.f32 %v4098, %v4227
        %v4292 = vld [vmem:[%s5] sm:$0x1]
        %v4294 = vlaneseq
        %v4295 = vshrl.u32 %v4294, 7
        %v4296 = vsub.s32 0, %v4295
        %v4297 = vrot.slane %v4292, %v4296
        %v4299 = vadd.f32 %v4260, %v4297
        %v4300 = vadd.f32 %v4261, %v4297
        %v4301 = vadd.f32 %v4262, %v4297
        %v4302 = vadd.f32 %v4263, %v4297
        %v4303 = vadd.f32 %v4264, %v4297
        %v4304 = vadd.f32 %v4265, %v4297
        %v4305 = vadd.f32 %v4266, %v4297
        %v4306 = vadd.f32 %v4267, %v4297
        %v4307 = vadd.f32 %v4268, %v4297
        %v4308 = vadd.f32 %v4269, %v4297
        %v4309 = vadd.f32 %v4270, %v4297
        %v4310 = vadd.f32 %v4271, %v4297
        %v4311 = vadd.f32 %v4272, %v4297
        %v4312 = vadd.f32 %v4273, %v4297
        %v4313 = vadd.f32 %v4274, %v4297
        %v4314 = vadd.f32 %v4275, %v4297
        %v4315 = vadd.f32 %v4276, %v4297
        %v4316 = vadd.f32 %v4277, %v4297
        %v4317 = vadd.f32 %v4278, %v4297
        %v4318 = vadd.f32 %v4279, %v4297
        %v4319 = vadd.f32 %v4280, %v4297
        %v4320 = vadd.f32 %v4281, %v4297
        %v4321 = vadd.f32 %v4282, %v4297
        %v4322 = vadd.f32 %v4283, %v4297
        %v4323 = vadd.f32 %v4284, %v4297
        %v4324 = vadd.f32 %v4285, %v4297
        %v4325 = vadd.f32 %v4286, %v4297
        %v4326 = vadd.f32 %v4287, %v4297
        %v4327 = vadd.f32 %v4288, %v4297
        %v4328 = vadd.f32 %v4289, %v4297
        %v4329 = vadd.f32 %v4290, %v4297
        %v4330 = vadd.f32 %v4291, %v4297
        %v4331 = vmax.f32 %v4299, 0.0
        %v4332 = vmax.f32 %v4300, 0.0
        %v4333 = vmax.f32 %v4301, 0.0
        %v4334 = vmax.f32 %v4302, 0.0
        %v4335 = vmax.f32 %v4303, 0.0
        %v4336 = vmax.f32 %v4304, 0.0
        %v4337 = vmax.f32 %v4305, 0.0
        %v4338 = vmax.f32 %v4306, 0.0
        %v4339 = vmax.f32 %v4307, 0.0
        %v4340 = vmax.f32 %v4308, 0.0
        %v4341 = vmax.f32 %v4309, 0.0
        %v4342 = vmax.f32 %v4310, 0.0
        %v4343 = vmax.f32 %v4311, 0.0
        %v4344 = vmax.f32 %v4312, 0.0
        %v4345 = vmax.f32 %v4313, 0.0
        %v4346 = vmax.f32 %v4314, 0.0
        %v4347 = vmax.f32 %v4315, 0.0
        %v4348 = vmax.f32 %v4316, 0.0
        %v4349 = vmax.f32 %v4317, 0.0
        %v4350 = vmax.f32 %v4318, 0.0
        %v4351 = vmax.f32 %v4319, 0.0
        %v4352 = vmax.f32 %v4320, 0.0
        %v4353 = vmax.f32 %v4321, 0.0
        %v4354 = vmax.f32 %v4322, 0.0
        %v4355 = vmax.f32 %v4323, 0.0
        %v4356 = vmax.f32 %v4324, 0.0
        %v4357 = vmax.f32 %v4325, 0.0
        %v4358 = vmax.f32 %v4326, 0.0
        %v4359 = vmax.f32 %v4327, 0.0
        %v4360 = vmax.f32 %v4328, 0.0
        %v4361 = vmax.f32 %v4329, 0.0
        %v4362 = vmax.f32 %v4330, 0.0
        %v4363 = vpack.c.bf16 %v4332, %v4331
        %v4364 = vpack.c.bf16 %v4334, %v4333
        %v4365 = vpack.c.bf16 %v4336, %v4335
        %v4366 = vpack.c.bf16 %v4338, %v4337
        %v4367 = vpack.c.bf16 %v4340, %v4339
        %v4368 = vpack.c.bf16 %v4342, %v4341
        %v4369 = vpack.c.bf16 %v4344, %v4343
        %v4370 = vpack.c.bf16 %v4346, %v4345
        %v4371 = vpack.c.bf16 %v4348, %v4347
        %v4372 = vpack.c.bf16 %v4350, %v4349
        %v4373 = vpack.c.bf16 %v4352, %v4351
        %v4374 = vpack.c.bf16 %v4354, %v4353
        %v4375 = vpack.c.bf16 %v4356, %v4355
        %v4376 = vpack.c.bf16 %v4358, %v4357
        %v4377 = vpack.c.bf16 %v4360, %v4359
        %v4378 = vpack.c.bf16 %v4362, %v4361
        %v4379 = vld [vmem:[%s3] sm:$0xf]
        %v4380 = vld [vmem:[%s3 + $0x4] sm:$0xf]
        %v4381 = vld [vmem:[%s3 + $0x8] sm:$0xf]
        %v4382 = vld [vmem:[%s3 + $0xc] sm:$0xf]
        %v4383 = vld [vmem:[%s6] sm:$0x1]
        %v4385 = vlaneseq
        %v4386 = vshrl.u32 %v4385, 7
        %v4387 = vsub.s32 0, %v4386
        %v4388 = vrot.slane %v4383, %v4387
        %v4394 = vunpack.c.l.b16 %v4379
        %v4395 = vunpack.c.l.b16 %v4380
        %v4396 = vunpack.c.l.b16 %v4381
        %v4397 = vunpack.c.l.b16 %v4382
        %v4398 = vpack.c.b16 %v4395, %v4394
        %v4399 = vpack.c.b16 %v4397, %v4396
        %v4403 = vsel %vm660, %v4363, 0
        %v4406 = vsel %vm660, %v4364, 0
        %v4409 = vsel %vm660, %v4365, 0
        %v4412 = vsel %vm660, %v4366, 0
        %v4415 = vsel %vm660, %v4367, 0
        %v4418 = vsel %vm660, %v4368, 0
        %v4421 = vsel %vm660, %v4369, 0
        %v4424 = vsel %vm660, %v4370, 0
        %v4427 = vsel %vm660, %v4371, 0
        %v4430 = vsel %vm660, %v4372, 0
        %v4433 = vsel %vm660, %v4373, 0
        %v4436 = vsel %vm660, %v4374, 0
        %v4439 = vsel %vm660, %v4375, 0
        %v4442 = vsel %vm660, %v4376, 0
        %v4445 = vsel %vm660, %v4377, 0
        %v4448 = vsel %vm660, %v4378, 0
        %4450 = vmatprep.subr.bf16.mxu0 0
        %4451 = vmatpush1.bf16.msra.mxu0 %v4398
        %4452 = vmatprep.subr.bf16.mxu0 0
        %4453 = vmatpush1.bf16.msra.mxu0 %v4399
        %4454 = vmatprep.subr.bf16.mxu0 0
        %4455 = vmatpush1.bf16.msra.mxu0 0
        %4456 = vmatprep.subr.bf16.mxu0 0
        %4457 = vmatpush1.bf16.msra.mxu0 0
        %4458 = vmatprep.subr.bf16.mxu0 0
        %4459 = vmatpush1.bf16.msra.mxu0 0
        %4460 = vmatprep.subr.bf16.mxu0 0
        %4461 = vmatpush1.bf16.msra.mxu0 0
        %4462 = vmatprep.subr.bf16.mxu0 0
        %4463 = vmatpush1.bf16.msra.mxu0 0
        %4464 = vmatprep.subr.bf16.mxu0 0
        %4465 = vmatpush1.bf16.msra.mxu0 0
        %4466 = vmatprep.subr.bf16.mxu0 0
        %4467 = vmatpush1.bf16.msra.mxu0 0
        %4468 = vmatprep.subr.bf16.mxu0 0
        %4469 = vmatpush1.bf16.msra.mxu0 0
        %4470 = vmatprep.subr.bf16.mxu0 0
        %4471 = vmatpush1.bf16.msra.mxu0 0
        %4472 = vmatprep.subr.bf16.mxu0 0
        %4473 = vmatpush1.bf16.msra.mxu0 0
        %4474 = vmatprep.subr.bf16.mxu0 0
        %4475 = vmatpush1.bf16.msra.mxu0 0
        %4476 = vmatprep.subr.bf16.mxu0 0
        %4477 = vmatpush1.bf16.msra.mxu0 0
        %4478 = vmatprep.subr.bf16.mxu0 0
        %4479 = vmatpush1.bf16.msra.mxu0 0
        %4480 = vmatprep.subr.bf16.mxu0 0
        %4481 = vmatpush1.bf16.msra.mxu0 0
        %4482 = vmatprep.mubr.bf16.mxu0 0
        %4483 = vmatmul.mubr.bf16.gmra.mrb[0].mxu0 %v4403
        %v4484 = vpop.f32.mrb[0].mxu0
        %v4485 = vadd.f32 %v4388, %v4484
        %v4486 = vpop.f32.mrb[0].mxu0
        %v4487 = vpop.f32.mrb[0].mxu0
        %v4488 = vadd.f32 %v4388, %v4487
        %v4489 = vpop.f32.mrb[0].mxu0
        %4490 = vmatprep.mubr.bf16.mxu0 0
        %4491 = vmatmul.mubr.bf16.gmra.mrb[0].mxu0 %v4406
        %v4492 = vpop.f32.mrb[0].mxu0
        %v4493 = vadd.f32 %v4388, %v4492
        %v4494 = vpop.f32.mrb[0].mxu0
        %v4495 = vpop.f32.mrb[0].mxu0
        %v4496 = vadd.f32 %v4388, %v4495
        %v4497 = vpop.f32.mrb[0].mxu0
        %4498 = vmatprep.mubr.bf16.mxu0 0
        %4499 = vmatmul.mubr.bf16.gmra.mrb[0].mxu0 %v4409
        %v4500 = vpop.f32.mrb[0].mxu0
        %v4501 = vadd.f32 %v4388, %v4500
        %v4502 = vpop.f32.mrb[0].mxu0
        %v4503 = vpop.f32.mrb[0].mxu0
        %v4504 = vadd.f32 %v4388, %v4503
        %v4505 = vpop.f32.mrb[0].mxu0
        %4506 = vmatprep.mubr.bf16.mxu0 0
        %4507 = vmatmul.mubr.bf16.gmra.mrb[0].mxu0 %v4412
        %v4508 = vpop.f32.mrb[0].mxu0
        %v4509 = vadd.f32 %v4388, %v4508
        %v4510 = vpop.f32.mrb[0].mxu0
        %v4511 = vpop.f32.mrb[0].mxu0
        %v4512 = vadd.f32 %v4388, %v4511
        %v4513 = vpop.f32.mrb[0].mxu0
        %4514 = vmatprep.mubr.bf16.mxu0 0
        %4515 = vmatmul.mubr.bf16.gmra.mrb[0].mxu0 %v4415
        %v4516 = vpop.f32.mrb[0].mxu0
        %v4517 = vadd.f32 %v4388, %v4516
        %v4518 = vpop.f32.mrb[0].mxu0
        %v4519 = vpop.f32.mrb[0].mxu0
        %v4520 = vadd.f32 %v4388, %v4519
        %v4521 = vpop.f32.mrb[0].mxu0
        %4522 = vmatprep.mubr.bf16.mxu0 0
        %4523 = vmatmul.mubr.bf16.gmra.mrb[0].mxu0 %v4418
        %v4524 = vpop.f32.mrb[0].mxu0
        %v4525 = vadd.f32 %v4388, %v4524
        %v4526 = vpop.f32.mrb[0].mxu0
        %v4527 = vpop.f32.mrb[0].mxu0
        %v4528 = vadd.f32 %v4388, %v4527
        %v4529 = vpop.f32.mrb[0].mxu0
        %4530 = vmatprep.mubr.bf16.mxu0 0
        %4531 = vmatmul.mubr.bf16.gmra.mrb[0].mxu0 %v4421
        %v4532 = vpop.f32.mrb[0].mxu0
        %v4533 = vadd.f32 %v4388, %v4532
        %v4534 = vpop.f32.mrb[0].mxu0
        %v4535 = vpop.f32.mrb[0].mxu0
        %v4536 = vadd.f32 %v4388, %v4535
        %v4537 = vpop.f32.mrb[0].mxu0
        %4538 = vmatprep.mubr.bf16.mxu0 0
        %4539 = vmatmul.mubr.bf16.gmra.mrb[0].mxu0 %v4424
        %v4540 = vpop.f32.mrb[0].mxu0
        %v4541 = vadd.f32 %v4388, %v4540
        %v4542 = vpop.f32.mrb[0].mxu0
        %v4543 = vpop.f32.mrb[0].mxu0
        %v4544 = vadd.f32 %v4388, %v4543
        %v4545 = vpop.f32.mrb[0].mxu0
        %4546 = vmatprep.mubr.bf16.mxu0 0
        %4547 = vmatmul.mubr.bf16.gmra.mrb[0].mxu0 %v4427
        %v4548 = vpop.f32.mrb[0].mxu0
        %v4549 = vadd.f32 %v4388, %v4548
        %v4550 = vpop.f32.mrb[0].mxu0
        %v4551 = vpop.f32.mrb[0].mxu0
        %v4552 = vadd.f32 %v4388, %v4551
        %v4553 = vpop.f32.mrb[0].mxu0
        %4554 = vmatprep.mubr.bf16.mxu0 0
        %4555 = vmatmul.mubr.bf16.gmra.mrb[0].mxu0 %v4430
        %v4556 = vpop.f32.mrb[0].mxu0
        %v4557 = vadd.f32 %v4388, %v4556
        %v4558 = vpop.f32.mrb[0].mxu0
        %v4559 = vpop.f32.mrb[0].mxu0
        %v4560 = vadd.f32 %v4388, %v4559
        %v4561 = vpop.f32.mrb[0].mxu0
        %4562 = vmatprep.mubr.bf16.mxu0 0
        %4563 = vmatmul.mubr.bf16.gmra.mrb[0].mxu0 %v4433
        %v4564 = vpop.f32.mrb[0].mxu0
        %v4565 = vadd.f32 %v4388, %v4564
        %v4566 = vpop.f32.mrb[0].mxu0
        %v4567 = vpop.f32.mrb[0].mxu0
        %v4568 = vadd.f32 %v4388, %v4567
        %v4569 = vpop.f32.mrb[0].mxu0
        %4570 = vmatprep.mubr.bf16.mxu0 0
        %4571 = vmatmul.mubr.bf16.gmra.mrb[0].mxu0 %v4436
        %v4572 = vpop.f32.mrb[0].mxu0
        %v4573 = vadd.f32 %v4388, %v4572
        %v4574 = vpop.f32.mrb[0].mxu0
        %v4575 = vpop.f32.mrb[0].mxu0
        %v4576 = vadd.f32 %v4388, %v4575
        %v4577 = vpop.f32.mrb[0].mxu0
        %4578 = vmatprep.mubr.bf16.mxu0 0
        %4579 = vmatmul.mubr.bf16.gmra.mrb[0].mxu0 %v4439
        %v4580 = vpop.f32.mrb[0].mxu0
        %v4581 = vadd.f32 %v4388, %v4580
        %v4582 = vpop.f32.mrb[0].mxu0
        %v4583 = vpop.f32.mrb[0].mxu0
        %v4584 = vadd.f32 %v4388, %v4583
        %v4585 = vpop.f32.mrb[0].mxu0
        %4586 = vmatprep.mubr.bf16.mxu0 0
        %4587 = vmatmul.mubr.bf16.gmra.mrb[0].mxu0 %v4442
        %v4588 = vpop.f32.mrb[0].mxu0
        %v4589 = vadd.f32 %v4388, %v4588
        %v4590 = vpop.f32.mrb[0].mxu0
        %v4591 = vpop.f32.mrb[0].mxu0
        %v4592 = vadd.f32 %v4388, %v4591
        %v4593 = vpop.f32.mrb[0].mxu0
        %4594 = vmatprep.mubr.bf16.mxu0 0
        %4595 = vmatmul.mubr.bf16.gmra.mrb[0].mxu0 %v4445
        %v4596 = vpop.f32.mrb[0].mxu0
        %v4597 = vadd.f32 %v4388, %v4596
        %v4598 = vpop.f32.mrb[0].mxu0
        %v4599 = vpop.f32.mrb[0].mxu0
        %v4600 = vadd.f32 %v4388, %v4599
        %v4601 = vpop.f32.mrb[0].mxu0
        %4602 = vmatprep.mubr.bf16.mxu0 0
        %4603 = vmatmul.mubr.bf16.gmra.mrb[0].mxu0 %v4448
        %v4604 = vpop.f32.mrb[0].mxu0
        %v4605 = vadd.f32 %v4388, %v4604
        %v4606 = vpop.f32.mrb[0].mxu0
        %v4607 = vpop.f32.mrb[0].mxu0
        %v4608 = vadd.f32 %v4388, %v4607
        %v4609 = vpop.f32.mrb[0].mxu0
        %4610 = vdwg.mxu0
        %v4611 = vld [vmem:[%s347] sm:$0xff]
        %v4612 = vld [vmem:[%s347 + $0x8] sm:$0xff]
        %v4613 = vld [vmem:[%s347 + $0x10] sm:$0xff]
        %v4614 = vld [vmem:[%s347 + $0x18] sm:$0xff]
        %v4615 = vld [vmem:[%s347 + $0x20] sm:$0xff]
        %v4616 = vld [vmem:[%s347 + $0x28] sm:$0xff]
        %v4617 = vld [vmem:[%s347 + $0x30] sm:$0xff]
        %v4618 = vld [vmem:[%s347 + $0x38] sm:$0xff]
        %v4619 = vld [vmem:[%s347 + $0x40] sm:$0xff]
        %v4620 = vld [vmem:[%s347 + $0x48] sm:$0xff]
        %v4621 = vld [vmem:[%s347 + $0x50] sm:$0xff]
        %v4622 = vld [vmem:[%s347 + $0x58] sm:$0xff]
        %v4623 = vld [vmem:[%s347 + $0x60] sm:$0xff]
        %v4624 = vld [vmem:[%s347 + $0x68] sm:$0xff]
        %v4625 = vld [vmem:[%s347 + $0x70] sm:$0xff]
        %v4626 = vld [vmem:[%s347 + $0x78] sm:$0xff]
        %v4627 = vld [vmem:[%s347 + $0x80] sm:$0xff]
        %v4628 = vld [vmem:[%s347 + $0x88] sm:$0xff]
        %v4629 = vld [vmem:[%s347 + $0x90] sm:$0xff]
        %v4630 = vld [vmem:[%s347 + $0x98] sm:$0xff]
        %v4631 = vld [vmem:[%s347 + $0xa0] sm:$0xff]
        %v4632 = vld [vmem:[%s347 + $0xa8] sm:$0xff]
        %v4633 = vld [vmem:[%s347 + $0xb0] sm:$0xff]
        %v4634 = vld [vmem:[%s347 + $0xb8] sm:$0xff]
        %v4635 = vld [vmem:[%s347 + $0xc0] sm:$0xff]
        %v4636 = vld [vmem:[%s347 + $0xc8] sm:$0xff]
        %v4637 = vld [vmem:[%s347 + $0xd0] sm:$0xff]
        %v4638 = vld [vmem:[%s347 + $0xd8] sm:$0xff]
        %v4639 = vld [vmem:[%s347 + $0xe0] sm:$0xff]
        %v4640 = vld [vmem:[%s347 + $0xe8] sm:$0xff]
        %v4641 = vld [vmem:[%s347 + $0xf0] sm:$0xff]
        %v4642 = vld [vmem:[%s347 + $0xf8] sm:$0xff]
        %v4643 = vadd.f32 %v4485, %v4611
        %v4644 = vadd.f32 %v4488, %v4612
        %v4645 = vadd.f32 %v4493, %v4613
        %v4646 = vadd.f32 %v4496, %v4614
        %v4647 = vadd.f32 %v4501, %v4615
        %v4648 = vadd.f32 %v4504, %v4616
        %v4649 = vadd.f32 %v4509, %v4617
        %v4650 = vadd.f32 %v4512, %v4618
        %v4651 = vadd.f32 %v4517, %v4619
        %v4652 = vadd.f32 %v4520, %v4620
        %v4653 = vadd.f32 %v4525, %v4621
        %v4654 = vadd.f32 %v4528, %v4622
        %v4655 = vadd.f32 %v4533, %v4623
        %v4656 = vadd.f32 %v4536, %v4624
        %v4657 = vadd.f32 %v4541, %v4625
        %v4658 = vadd.f32 %v4544, %v4626
        %v4659 = vadd.f32 %v4549, %v4627
        %v4660 = vadd.f32 %v4552, %v4628
        %v4661 = vadd.f32 %v4557, %v4629
        %v4662 = vadd.f32 %v4560, %v4630
        %v4663 = vadd.f32 %v4565, %v4631
        %v4664 = vadd.f32 %v4568, %v4632
        %v4665 = vadd.f32 %v4573, %v4633
        %v4666 = vadd.f32 %v4576, %v4634
        %v4667 = vadd.f32 %v4581, %v4635
        %v4668 = vadd.f32 %v4584, %v4636
        %v4669 = vadd.f32 %v4589, %v4637
        %v4670 = vadd.f32 %v4592, %v4638
        %v4671 = vadd.f32 %v4597, %v4639
        %v4672 = vadd.f32 %v4600, %v4640
        %v4673 = vadd.f32 %v4605, %v4641
        %v4674 = vadd.f32 %v4608, %v4642
        %v4675 = vmax.f32 %v4643, 0.0
        %v4676 = vmax.f32 %v4644, 0.0
        %v4677 = vmax.f32 %v4645, 0.0
        %v4678 = vmax.f32 %v4646, 0.0
        %v4679 = vmax.f32 %v4647, 0.0
        %v4680 = vmax.f32 %v4648, 0.0
        %v4681 = vmax.f32 %v4649, 0.0
        %v4682 = vmax.f32 %v4650, 0.0
        %v4683 = vmax.f32 %v4651, 0.0
        %v4684 = vmax.f32 %v4652, 0.0
        %v4685 = vmax.f32 %v4653, 0.0
        %v4686 = vmax.f32 %v4654, 0.0
        %v4687 = vmax.f32 %v4655, 0.0
        %v4688 = vmax.f32 %v4656, 0.0
        %v4689 = vmax.f32 %v4657, 0.0
        %v4690 = vmax.f32 %v4658, 0.0
        %v4691 = vmax.f32 %v4659, 0.0
        %v4692 = vmax.f32 %v4660, 0.0
        %v4693 = vmax.f32 %v4661, 0.0
        %v4694 = vmax.f32 %v4662, 0.0
        %v4695 = vmax.f32 %v4663, 0.0
        %v4696 = vmax.f32 %v4664, 0.0
        %v4697 = vmax.f32 %v4665, 0.0
        %v4698 = vmax.f32 %v4666, 0.0
        %v4699 = vmax.f32 %v4667, 0.0
        %v4700 = vmax.f32 %v4668, 0.0
        %v4701 = vmax.f32 %v4669, 0.0
        %v4702 = vmax.f32 %v4670, 0.0
        %v4703 = vmax.f32 %v4671, 0.0
        %v4704 = vmax.f32 %v4672, 0.0
        %v4705 = vmax.f32 %v4673, 0.0
        %v4706 = vmax.f32 %v4674, 0.0
        %v4707 = vpack.c.bf16 %v4676, %v4675
        %v4708 = vpack.c.bf16 %v4678, %v4677
        %v4709 = vpack.c.bf16 %v4680, %v4679
        %v4710 = vpack.c.bf16 %v4682, %v4681
        %v4711 = vpack.c.bf16 %v4684, %v4683
        %v4712 = vpack.c.bf16 %v4686, %v4685
        %v4713 = vpack.c.bf16 %v4688, %v4687
        %v4714 = vpack.c.bf16 %v4690, %v4689
        %v4715 = vpack.c.bf16 %v4692, %v4691
        %v4716 = vpack.c.bf16 %v4694, %v4693
        %v4717 = vpack.c.bf16 %v4696, %v4695
        %v4718 = vpack.c.bf16 %v4698, %v4697
        %v4719 = vpack.c.bf16 %v4700, %v4699
        %v4720 = vpack.c.bf16 %v4702, %v4701
        %v4721 = vpack.c.bf16 %v4704, %v4703
        %v4722 = vpack.c.bf16 %v4706, %v4705
        %v4739 = vunpack.c.l.b16 %v4707
        %v4740 = vunpack.c.h.b16 %v4707
        %v4741 = vunpack.c.l.b16 %v4708
        %v4742 = vunpack.c.h.b16 %v4708
        %v4743 = vunpack.c.l.b16 %v4709
        %v4744 = vunpack.c.h.b16 %v4709
        %v4745 = vunpack.c.l.b16 %v4710
        %v4746 = vunpack.c.h.b16 %v4710
        %v4747 = vunpack.c.l.b16 %v4711
        %v4748 = vunpack.c.h.b16 %v4711
        %v4749 = vunpack.c.l.b16 %v4712
        %v4750 = vunpack.c.h.b16 %v4712
        %v4751 = vunpack.c.l.b16 %v4713
        %v4752 = vunpack.c.h.b16 %v4713
        %v4753 = vunpack.c.l.b16 %v4714
        %v4754 = vunpack.c.h.b16 %v4714
        %v4755 = vunpack.c.l.b16 %v4715
        %v4756 = vunpack.c.h.b16 %v4715
        %v4757 = vunpack.c.l.b16 %v4716
        %v4758 = vunpack.c.h.b16 %v4716
        %v4759 = vunpack.c.l.b16 %v4717
        %v4760 = vunpack.c.h.b16 %v4717
        %v4761 = vunpack.c.l.b16 %v4718
        %v4762 = vunpack.c.h.b16 %v4718
        %v4763 = vunpack.c.l.b16 %v4719
        %v4764 = vunpack.c.h.b16 %v4719
        %v4765 = vunpack.c.l.b16 %v4720
        %v4766 = vunpack.c.h.b16 %v4720
        %v4767 = vunpack.c.l.b16 %v4721
        %v4768 = vunpack.c.h.b16 %v4721
        %v4769 = vunpack.c.l.b16 %v4722
        %v4770 = vunpack.c.h.b16 %v4722
        %v4771 = vpack.c.b16 %v4739, %v4739
        %v4772 = vpack.c.b16 %v4740, %v4740
        %v4773 = vpack.c.b16 %v4741, %v4741
        %v4774 = vpack.c.b16 %v4742, %v4742
        %v4775 = vpack.c.b16 %v4743, %v4743
        %v4776 = vpack.c.b16 %v4744, %v4744
        %v4777 = vpack.c.b16 %v4745, %v4745
        %v4778 = vpack.c.b16 %v4746, %v4746
        %v4779 = vpack.c.b16 %v4747, %v4747
        %v4780 = vpack.c.b16 %v4748, %v4748
        %v4781 = vpack.c.b16 %v4749, %v4749
        %v4782 = vpack.c.b16 %v4750, %v4750
        %v4783 = vpack.c.b16 %v4751, %v4751
        %v4784 = vpack.c.b16 %v4752, %v4752
        %v4785 = vpack.c.b16 %v4753, %v4753
        %v4786 = vpack.c.b16 %v4754, %v4754
        %v4787 = vpack.c.b16 %v4755, %v4755
        %v4788 = vpack.c.b16 %v4756, %v4756
        %v4789 = vpack.c.b16 %v4757, %v4757
        %v4790 = vpack.c.b16 %v4758, %v4758
        %v4791 = vpack.c.b16 %v4759, %v4759
        %v4792 = vpack.c.b16 %v4760, %v4760
        %v4793 = vpack.c.b16 %v4761, %v4761
        %v4794 = vpack.c.b16 %v4762, %v4762
        %v4795 = vpack.c.b16 %v4763, %v4763
        %v4796 = vpack.c.b16 %v4764, %v4764
        %v4797 = vpack.c.b16 %v4765, %v4765
        %v4798 = vpack.c.b16 %v4766, %v4766
        %v4799 = vpack.c.b16 %v4767, %v4767
        %v4800 = vpack.c.b16 %v4768, %v4768
        %v4801 = vpack.c.b16 %v4769, %v4769
        %v4802 = vpack.c.b16 %v4770, %v4770
        %4835 = vst [vmem:[%s325] sm:$0xf] %v4771
        %4836 = vst [vmem:[%s325 + $0x4] sm:$0xf] %v4772
        %4837 = vst [vmem:[%s325 + $0x8] sm:$0xf] %v4773
        %4838 = vst [vmem:[%s325 + $0xc] sm:$0xf] %v4774
        %4839 = vst [vmem:[%s325 + $0x10] sm:$0xf] %v4775
        %4840 = vst [vmem:[%s325 + $0x14] sm:$0xf] %v4776
        %4841 = vst [vmem:[%s325 + $0x18] sm:$0xf] %v4777
        %4842 = vst [vmem:[%s325 + $0x1c] sm:$0xf] %v4778
        %4843 = vst [vmem:[%s325 + $0x20] sm:$0xf] %v4779
        %4844 = vst [vmem:[%s325 + $0x24] sm:$0xf] %v4780
        %4845 = vst [vmem:[%s325 + $0x28] sm:$0xf] %v4781
        %4846 = vst [vmem:[%s325 + $0x2c] sm:$0xf] %v4782
        %4847 = vst [vmem:[%s325 + $0x30] sm:$0xf] %v4783
        %4848 = vst [vmem:[%s325 + $0x34] sm:$0xf] %v4784
        %4849 = vst [vmem:[%s325 + $0x38] sm:$0xf] %v4785
        %4850 = vst [vmem:[%s325 + $0x3c] sm:$0xf] %v4786
        %4851 = vst [vmem:[%s325 + $0x40] sm:$0xf] %v4787
        %4852 = vst [vmem:[%s325 + $0x44] sm:$0xf] %v4788
        %4853 = vst [vmem:[%s325 + $0x48] sm:$0xf] %v4789
        %4854 = vst [vmem:[%s325 + $0x4c] sm:$0xf] %v4790
        %4855 = vst [vmem:[%s325 + $0x50] sm:$0xf] %v4791
        %4856 = vst [vmem:[%s325 + $0x54] sm:$0xf] %v4792
        %4857 = vst [vmem:[%s325 + $0x58] sm:$0xf] %v4793
        %4858 = vst [vmem:[%s325 + $0x5c] sm:$0xf] %v4794
        %4859 = vst [vmem:[%s325 + $0x60] sm:$0xf] %v4795
        %4860 = vst [vmem:[%s325 + $0x64] sm:$0xf] %v4796
        %4861 = vst [vmem:[%s325 + $0x68] sm:$0xf] %v4797
        %4862 = vst [vmem:[%s325 + $0x6c] sm:$0xf] %v4798
        %4863 = vst [vmem:[%s325 + $0x70] sm:$0xf] %v4799
        %4864 = vst [vmem:[%s325 + $0x74] sm:$0xf] %v4800
        %4865 = vst [vmem:[%s325 + $0x78] sm:$0xf] %v4801
        %4866 = vst [vmem:[%s325 + $0x7c] sm:$0xf] %v4802
        %s4867 = sand.u32 %s199, 1
        %s4868 = scalar_lea.sflag [#allocation5], %s4867
        %s4869 = sand.u32 %s199, 1
        %s4870 = smul.addr %s4869, 128
        %s4871 = scalar_lea.vmem [#allocation8], %s4870
        // Predicated region
        $region73: #{tpu_custom_call.1} parent=47 // pred_check
          %p4872 = pneg %p209
        $region74: #{tpu_custom_call.1} parent=47 // pred_check_branch
          %4874 = sbr.rel (%p4872) target = $region76
        $region75: #{tpu_custom_call.1} parent=47 // pred_region
          %s4875 = smul.u32 16, %s30
          %s4877 = ssub.s32 2048, 2048
          %4878 = vsyncadd %s4868, %s4877
          %s4879 = smul.addr %s4875, 2
          %s4880 = smul.addr %s29, 32
          %s4881 = sadd.s32 %s4879, %s4880
          %s4882 = smul.addr %s4881, 64
          %s4883 = scalar_lea.hbm %s7, %s4882
          %s4884 = sshll.u32 %s4871, 4
          %s4885 = int_to_ptr.vmem [resolvable:$true] %s4884
          %4890 = dma.vmem_to_hbm [thread:$0]  %s4885, 2048, %s4883, %s4868, 64, 64, 4
        $region76: #{tpu_custom_call.1} parent=47 // pred_fallthru
          _
      $region48: #{tpu_custom_call.1} parent=5 // pred_fallthru
        _
      %p4891 = scmp.le.s32.totalorder 2, %s20
      // Predicated region
      $region77: #{tpu_custom_call.1} parent=5 // pred_check
        %p4892 = pneg %p4891
      $region78: #{tpu_custom_call.1} parent=5 // pred_check_branch
        %4894 = sbr.rel (%p4892) target = $region80
      $region79: #{tpu_custom_call.1} parent=5 // pred_region
        %s4895 = ssub.s32 %s20, 2
        // Predicated region
        $region81: #{tpu_custom_call.1} parent=79 // pred_check
          %p4896 = pneg %p215
        $region82: #{tpu_custom_call.1} parent=79 // pred_check_branch
          %4898 = sbr.rel (%p4896) target = $region84
        $region83: #{tpu_custom_call.1} parent=79 // pred_region
          %s4899 = sand.u32 %s200, 1
          %s4900 = scalar_lea.sflag [#allocation5], %s4899
          %s4901 = sand.u32 %s200, 1
          %s4902 = smul.addr %s4901, 128
          %s4903 = scalar_lea.vmem [#allocation8], %s4902
          %4904 = dma.done %s4900, 2048
        $region84: #{tpu_custom_call.1} parent=79 // pred_fallthru
          _
      $region80: #{tpu_custom_call.1} parent=5 // pred_fallthru
        _
    $region6: #{tpu_custom_call.1} parent=1 // loop_footer
      %s24 = sadd.s32 1, %s20
    $region7: #{tpu_custom_call.1} parent=1 // loop_footer_branch
      %19 = sbr.rel target = $region3
    $region8: #{tpu_custom_call.1} parent=1 // loop_exit
      _
    %4905 = vsyncpa [#allocation4], 1
    %s4906 = scalar_lea.sflag [#allocation4], 1
    %4907 = vsyncpa %s4906, 1
    %4908 = vsyncpa [#allocation7], 1
    %4909 = vsyncpa [#allocation5], 1
    %s4910 = scalar_lea.sflag [#allocation5], 1
    %4911 = vsyncpa %s4910, 1

</llo_original>
